<compile_context>
chip_gen: v7x
topology: tpu7x:2x2x1
jax: 0.10.0
libtpu: 0.0.40
codegen_flags: <defaults>
</compile_context>

<pallas_src>
import functools
import math

import jax
import jax.numpy as jnp
from jax.experimental import pallas as pl
from jax.experimental.pallas import tpu as pltpu


# ----------------------------------------------------------------------------
# Mini-BERT configuration
# ----------------------------------------------------------------------------
VOCAB = 100
HIDDEN = 128          # stand-in for 768 of bert-base
LAYERS = 2            # stand-in for 12
HEADS = 4
HEAD_DIM = HIDDEN // HEADS
INTERMEDIATE = 4 * HIDDEN
MAX_POS = 32
TYPE_VOCAB = 2
LN_EPS = 1e-12


# ----------------------------------------------------------------------------
# Shared in-kernel helpers (traced, f32 math)
# ----------------------------------------------------------------------------
def _ln_f32(y, g, b, eps):
    mean = jnp.mean(y, axis=-1, keepdims=True)
    var = jnp.mean(jnp.square(y - mean), axis=-1, keepdims=True)
    return (y - mean) * jax.lax.rsqrt(var + eps) * g + b


def _gelu_tanh(x):
    # TODO(synk): tanh-approximate GELU; the PyTorch reference uses the exact erf form
    # (expect ~1e-3-level divergence from the PyTorch reference).
    c = math.sqrt(2.0 / math.pi)
    return 0.5 * x * (1.0 + jnp.tanh(c * (x + 0.044715 * x * x * x)))


# ----------------------------------------------------------------------------
# Kernel 1: embedding adds + LayerNorm (token gather stays in XLA)
# ----------------------------------------------------------------------------
def _embed_ln_kernel(eps, word_ref, pt_ref, gb_ref, o_ref):
    x = word_ref[...].astype(jnp.float32) + pt_ref[...].astype(jnp.float32)
    o_ref[...] = _ln_f32(x, gb_ref[0:1, :], gb_ref[1:2, :], eps).astype(o_ref.dtype)


def pallas_embed_ln(word, postype, emb_gb, B, S):
    M, H = word.shape
    return pl.pallas_call(
        functools.partial(_embed_ln_kernel, LN_EPS),
        out_shape=jax.ShapeDtypeStruct((M, H), jnp.bfloat16),
        grid=(B,),
        in_specs=[
            pl.BlockSpec((S, H), lambda b: (b, 0)),
            pl.BlockSpec((S, H), lambda b: (0, 0)),
            pl.BlockSpec((2, H), lambda b: (0, 0)),       # packed [gamma; beta]
        ],
        out_specs=pl.BlockSpec((S, H), lambda b: (b, 0)),
        compiler_params=pltpu.CompilerParams(dimension_semantics=("parallel",)),
    )(word, postype, emb_gb)


# ----------------------------------------------------------------------------
# Kernel 2: one fused encoder layer
#   x -> QKV proj -> multi-head attention -> out proj -> +residual -> LN
#     -> FFN(w1 + GELU + w2) -> +residual -> LN
# All layer weights are grid-invariant blocks resident in VMEM; grid iterates batch.
# ----------------------------------------------------------------------------
def _layer_kernel(eps, scale, nheads,
                  x_ref, mask_ref, wqkv_ref, wo_ref, w1_ref, w2_ref,
                  vec_ref, b1_ref, o_ref):
    S, H = x_ref.shape
    dh = H // nheads

    x = x_ref[...]                                         # bf16 [S, H]
    vec = vec_ref[...]                                     # f32  [9, H]
    bq, bk, bv = vec[0:1, :], vec[1:2, :], vec[2:3, :]
    bo, g1, be1 = vec[3:4, :], vec[4:5, :], vec[5:6, :]
    b2, g2, be2 = vec[6:7, :], vec[7:8, :], vec[8:9, :]

    # ---- fused QKV projection (no HBM round-trip, no extra launch) ----
    qkv = jnp.dot(x, wqkv_ref[...], preferred_element_type=jnp.float32)    # f32 [S, 3H]
    q = (qkv[:, 0 * H:1 * H] + bq).astype(jnp.bfloat16)
    k = (qkv[:, 1 * H:2 * H] + bk).astype(jnp.bfloat16)
    v = (qkv[:, 2 * H:3 * H] + bv).astype(jnp.bfloat16)

    # hoist mask broadcast out of the per-head loop (broadcast_in_dim is not CSE'd)
    mask_full = jnp.broadcast_to(mask_ref[...], (S, S))                    # f32 [S, S]
    wo = wo_ref[...]                                                       # bf16 [H, H]

    # ---- multi-head attention; output projection folded per head:
    #      concat_h(ctx_h) @ wo == sum_h ctx_h @ wo[h*dh:(h+1)*dh, :]
    #      (no jnp.concatenate, no long-lived per-head ctx list)
    # TODO(synk): at bert-base scale on v6e/v7x prefer a head-major QKV layout so the
    # dh-lane slices below do not need relayout copies before each per-head matmul.
    dims = (((1,), (1,)), ((), ()))                        # q·kᵀ without materializing k.T
    attn = None
    for h in range(nheads):                                # static head loop (lane slices)
        sl = slice(h * dh, (h + 1) * dh)
        s = jax.lax.dot_general(q[:, sl], k[:, sl], dims,
                                preferred_element_type=jnp.float32)        # [S, S]
        s = s * scale + mask_full
        s = s - jnp.max(s, axis=-1, keepdims=True)
        p = jnp.exp(s)
        p = p * pl.reciprocal(jnp.sum(p, axis=-1, keepdims=True), approx=True)
        ctx_h = jnp.dot(p.astype(v.dtype), v[:, sl],
                        preferred_element_type=jnp.float32)                # [S, dh]
        part = jnp.dot(ctx_h.astype(wo.dtype), wo[sl, :],
                       preferred_element_type=jnp.float32)                 # [S, H]
        attn = part if attn is None else attn + part

    y = x.astype(jnp.float32) + attn + bo
    y = _ln_f32(y, g1, be1, eps)

    # ---- FFN (w1 + GELU + w2) + residual + LayerNorm ----
    h1 = jnp.dot(y.astype(jnp.bfloat16), w1_ref[...],
                 preferred_element_type=jnp.float32) + b1_ref[...]
    h1 = _gelu_tanh(h1)
    y2 = jnp.dot(h1.astype(jnp.bfloat16), w2_ref[...],
                 preferred_element_type=jnp.float32) + b2
    y2 = y2 + y
    o_ref[...] = _ln_f32(y2, g2, be2, eps).astype(o_ref.dtype)


def pallas_encoder_layer(x, mask_bias, lyr, B, S, nheads, scale):
    M, H = x.shape
    I = lyr["w1"].shape[1]
    # TODO(synk): at bert-base scale the grid-invariant weight specs below should be
    # single-buffered (pipeline_mode=pl.Buffered(1)) or K-tiled along an "arbitrary"
    # reduction axis with an f32 VMEM accumulator, and vmem_limit_bytes raised
    # (mandatory on v5e's 16 MiB default scoped VMEM, advised on v7x's 64 MiB).
    # At this mini config the resident layer weights total < 0.5 MiB so defaults are fine.
    return pl.pallas_call(
        functools.partial(_layer_kernel, LN_EPS, scale, nheads),
        out_shape=jax.ShapeDtypeStruct((M, H), jnp.bfloat16),
        grid=(B,),
        in_specs=[
            pl.BlockSpec((S, H), lambda b: (b, 0)),            # x (per-batch block)
            pl.BlockSpec((None, 1, S), lambda b: (b, 0, 0)),   # attention mask bias
            pl.BlockSpec((H, 3 * H), lambda b: (0, 0)),        # wqkv  (grid-invariant)
            pl.BlockSpec((H, H), lambda b: (0, 0)),            # wo
            pl.BlockSpec((H, I), lambda b: (0, 0)),            # w1
            pl.BlockSpec((I, H), lambda b: (0, 0)),            # w2
            pl.BlockSpec((9, H), lambda b: (0, 0)),            # packed f32 vectors
            pl.BlockSpec((1, I), lambda b: (0, 0)),            # b1
        ],
        out_specs=pl.BlockSpec((S, H), lambda b: (b, 0)),
        compiler_params=pltpu.CompilerParams(dimension_semantics=("parallel",)),
    )(x, mask_bias, lyr["wqkv"], lyr["wo"], lyr["w1"], lyr["w2"],
      lyr["vecs"], lyr["b1"])


# ----------------------------------------------------------------------------
# Parameters (deterministic random, f32 master copy -> fused / bf16 runtime copy)
# ----------------------------------------------------------------------------
def init_params(key):
    def nrm(k, shape):
        return (0.02 * jax.random.normal(k, shape)).astype(jnp.float32)

    keys = iter(jax.random.split(key, 256))
    p = {
        "word_emb": nrm(next(keys), (VOCAB, HIDDEN)),
        "pos_emb": nrm(next(keys), (MAX_POS, HIDDEN)),
        "type_emb": nrm(next(keys), (TYPE_VOCAB, HIDDEN)),
        "emb_ln_g": jnp.ones((HIDDEN,), jnp.float32),
        "emb_ln_b": jnp.zeros((HIDDEN,), jnp.float32),
        "layers": [],
        "pooler_w": nrm(next(keys), (HIDDEN, HIDDEN)),
        "pooler_b": jnp.zeros((HIDDEN,), jnp.float32),
        "cls_w": nrm(next(keys), (HIDDEN, 1)),       # nn.Linear(768, 1) analogue
        "cls_b": jnp.zeros((1,), jnp.float32),
    }
    for _ in range(LAYERS):
        p["layers"].append({
            "wq": nrm(next(keys), (HIDDEN, HIDDEN)), "bq": jnp.zeros((HIDDEN,), jnp.float32),
            "wk": nrm(next(keys), (HIDDEN, HIDDEN)), "bk": jnp.zeros((HIDDEN,), jnp.float32),
            "wv": nrm(next(keys), (HIDDEN, HIDDEN)), "bv": jnp.zeros((HIDDEN,), jnp.float32),
            "wo": nrm(next(keys), (HIDDEN, HIDDEN)), "bo": jnp.zeros((HIDDEN,), jnp.float32),
            "ln1_g": jnp.ones((HIDDEN,), jnp.float32), "ln1_b": jnp.zeros((HIDDEN,), jnp.float32),
            "w1": nrm(next(keys), (HIDDEN, INTERMEDIATE)), "b1": jnp.zeros((INTERMEDIATE,), jnp.float32),
            "w2": nrm(next(keys), (INTERMEDIATE, HIDDEN)), "b2": jnp.zeros((HIDDEN,), jnp.float32),
            "ln2_g": jnp.ones((HIDDEN,), jnp.float32), "ln2_b": jnp.zeros((HIDDEN,), jnp.float32),
        })
    return p


def fuse_params(p):
    """Concat QKV into one [H,3H] weight, pack the small f32 vectors, cast MXU operands
    to bf16 (accumulation stays f32). The pooler/classifier head stays f32 (runs in XLA)."""
    bf = lambda a: a.astype(jnp.bfloat16)
    fp = {
        "word_emb": bf(p["word_emb"]),
        "pos_emb": bf(p["pos_emb"]),
        "type_emb": bf(p["type_emb"]),
        "emb_gb": jnp.stack([p["emb_ln_g"], p["emb_ln_b"]], axis=0),   # (2, H) f32
        "pooler_w": p["pooler_w"],
        "pooler_b": p["pooler_b"],
        "cls_w": p["cls_w"],
        "cls_b": p["cls_b"],
        "layers": [],
    }
    for l in p["layers"]:
        vecs = jnp.stack([l["bq"], l["bk"], l["bv"], l["bo"],
                          l["ln1_g"], l["ln1_b"],
                          l["b2"], l["ln2_g"], l["ln2_b"]], axis=0)    # (9, H) f32
        fp["layers"].append({
            "wqkv": bf(jnp.concatenate([l["wq"], l["wk"], l["wv"]], axis=1)),
            "wo": bf(l["wo"]),
            "w1": bf(l["w1"]),
            "w2": bf(l["w2"]),
            "vecs": vecs,
            "b1": l["b1"].reshape(1, INTERMEDIATE),
        })
    return fp


# ----------------------------------------------------------------------------
# Forward pass
# ----------------------------------------------------------------------------
def bert_binary_classifier_forward(params, tokens, masks=None):
    B, S = tokens.shape
    H = HIDDEN
    if masks is None:
        masks = jnp.ones((B, S), jnp.float32)
    # extended attention mask bias: (1 - mask) * -10000, broadcast over queries
    mask_bias = ((1.0 - masks.astype(jnp.float32)) * -10000.0).reshape(B, 1, S)

    # --- embeddings: gather in XLA; adds + LayerNorm fused in one Pallas kernel ---
    word = jnp.take(params["word_emb"], tokens.reshape(-1), axis=0)        # [B*S, H] bf16
    # TODO(synk): token_type ids hard-coded to 0 (reference passes no segment ids).
    postype = params["pos_emb"][:S] + params["type_emb"][0][None, :]       # [S, H]
    x = pallas_embed_ln(word, postype, params["emb_gb"], B, S)

    scale = 1.0 / math.sqrt(HEAD_DIM)
    for lyr in params["layers"]:
        # one fused pallas_call per layer: QKV proj + attention + out proj + residual
        # + LN + FFN + residual + LN; no intermediate HBM round-trips.
        x = pallas_encoder_layer(x, mask_bias, lyr, B, S, HEADS, scale)

    # --- pooler (tanh dense on [CLS]) + dropout(identity) + classifier + sigmoid ---
    # Per perf review: this tiny (B,H) head runs in plain XLA; a dedicated pallas_call's
    # launch/pipeline cost exceeds its compute and its (B,1) output is lane-sparse.
    cls = x.reshape(B, S, H)[:, 0, :].astype(jnp.float32)                  # [B, H]
    pooled = jnp.tanh(cls @ params["pooler_w"] + params["pooler_b"])
    # TODO(synk): nn.Dropout(0.1) on pooled is identity at inference; not applied.
    logit = pooled @ params["cls_w"] + params["cls_b"]
    return jax.nn.sigmoid(logit)                                           # [B, 1] f32


# ----------------------------------------------------------------------------
if __name__ == "__main__":
    key = jax.random.PRNGKey(0)
    pkey, tkey = jax.random.split(key)
    params = fuse_params(init_params(pkey))

    B, S = 2, 8
    tokens = jax.random.randint(tkey, (B, S), 0, VOCAB, dtype=jnp.int32)
    masks = jnp.ones((B, S), jnp.float32).at[1, 6:].set(0.0)  # pad last 2 tokens of sample 1

    fwd = jax.jit(bert_binary_classifier_forward)
    proba = jax.block_until_ready(fwd(params, tokens, masks))

    assert proba.shape == (B, 1)
    assert bool(jnp.all(jnp.isfinite(proba)))
    assert bool(jnp.all((proba > 0.0) & (proba < 1.0)))
    print("KERNEL_OK")
</pallas_src>

<mosaic_0001>
module attributes {stable_mosaic.version = 11 : i64} {
  func.func @_embed_ln_kernel(%arg0: i32, %arg1: memref<8x128xbf16, #tpu.memory_space<vmem>>, %arg2: memref<8x128xbf16, #tpu.memory_space<vmem>>, %arg3: memref<2x128xf32, #tpu.memory_space<vmem>>, %arg4: memref<8x128xbf16, #tpu.memory_space<vmem>>) attributes {dimension_semantics = [#tpu.dimension_semantics<parallel>], iteration_bounds = array<i64: 2>, scalar_prefetch = 0 : i64, scratch_operands = 0 : i64, tpu.core_type = #tpu.core_type<tc>, window_params = [{transform_indices = @transform_0, window_bounds = array<i64: 8, 128>}, {pipeline_mode = #tpu.pipeline_mode<synchronous>, transform_indices = @transform_1, window_bounds = array<i64: 8, 128>}, {pipeline_mode = #tpu.pipeline_mode<synchronous>, transform_indices = @transform_2, window_bounds = array<i64: 2, 128>}, {transform_indices = @transform_3, window_bounds = array<i64: 8, 128>}]} {
    %c0 = arith.constant 0 : index
    %c0_0 = arith.constant 0 : index
    %0 = vector.load %arg1[%c0, %c0_0] : memref<8x128xbf16, #tpu.memory_space<vmem>>, vector<8x128xbf16>
    %1 = arith.extf %0 : vector<8x128xbf16> to vector<8x128xf32>
    %c0_1 = arith.constant 0 : index
    %c0_2 = arith.constant 0 : index
    %2 = vector.load %arg2[%c0_1, %c0_2] : memref<8x128xbf16, #tpu.memory_space<vmem>>, vector<8x128xbf16>
    %3 = arith.extf %2 : vector<8x128xbf16> to vector<8x128xf32>
    %4 = arith.addf %1, %3 : vector<8x128xf32>
    %c0_3 = arith.constant 0 : index
    %c0_4 = arith.constant 0 : index
    %5 = vector.load %arg3[%c0_3, %c0_4] : memref<2x128xf32, #tpu.memory_space<vmem>>, vector<1x128xf32>
    %c1 = arith.constant 1 : index
    %c0_5 = arith.constant 0 : index
    %6 = vector.load %arg3[%c1, %c0_5] : memref<2x128xf32, #tpu.memory_space<vmem>>, vector<1x128xf32>
    %cst = arith.constant dense<0.000000e+00> : vector<8xf32>
    %7 = vector.multi_reduction <add>, %4, %cst [1] : vector<8x128xf32> to vector<8xf32>
    %8 = vector.shape_cast %7 : vector<8xf32> to vector<8x1xf32>
    %cst_6 = arith.constant 1.280000e+02 : f32
    %9 = vector.broadcast %cst_6 : f32 to vector<8x1xf32>
    %10 = arith.divf %8, %9 : vector<8x1xf32>
    %11 = vector.broadcast %10 : vector<8x1xf32> to vector<8x128xf32>
    %12 = arith.subf %4, %11 : vector<8x128xf32>
    %13 = arith.mulf %12, %12 : vector<8x128xf32>
    %cst_7 = arith.constant dense<0.000000e+00> : vector<8xf32>
    %14 = vector.multi_reduction <add>, %13, %cst_7 [1] : vector<8x128xf32> to vector<8xf32>
    %15 = vector.shape_cast %14 : vector<8xf32> to vector<8x1xf32>
    %cst_8 = arith.constant 1.280000e+02 : f32
    %16 = vector.broadcast %cst_8 : f32 to vector<8x1xf32>
    %17 = arith.divf %15, %16 : vector<8x1xf32>
    %18 = vector.broadcast %10 : vector<8x1xf32> to vector<8x128xf32>
    %19 = arith.subf %4, %18 : vector<8x128xf32>
    %cst_9 = arith.constant 9.99999996E-13 : f32
    %20 = vector.broadcast %cst_9 : f32 to vector<8x1xf32>
    %21 = arith.addf %17, %20 : vector<8x1xf32>
    %22 = math.rsqrt %21 : vector<8x1xf32>
    %23 = vector.broadcast %22 : vector<8x1xf32> to vector<8x128xf32>
    %24 = arith.mulf %19, %23 : vector<8x128xf32>
    %25 = vector.broadcast %5 : vector<1x128xf32> to vector<8x128xf32>
    %26 = arith.mulf %24, %25 : vector<8x128xf32>
    %27 = vector.broadcast %6 : vector<1x128xf32> to vector<8x128xf32>
    %28 = arith.addf %26, %27 : vector<8x128xf32>
    %29 = arith.truncf %28 : vector<8x128xf32> to vector<8x128xbf16>
    %c0_10 = arith.constant 0 : index
    %c0_11 = arith.constant 0 : index
    %30 = vector.load %arg4[%c0_10, %c0_11] : memref<8x128xbf16, #tpu.memory_space<vmem>>, vector<8x128xbf16>
    tpu.vector_store %arg4[%c0_10, %c0_11], %29 {strides = array<i32>} : memref<8x128xbf16, #tpu.memory_space<vmem>>, vector<8x128xbf16>,
    return
  }
  func.func @transform_0(%arg0: i32) -> (i32, i32) {
    %c0_i32 = arith.constant 0 : i32
    %c0_i32_0 = arith.constant 0 : i32
    return %arg0, %c0_i32 : i32, i32
  }
  func.func @transform_1(%arg0: i32) -> (i32, i32) {
    %c0_i32 = arith.constant 0 : i32
    %c0_i32_0 = arith.constant 0 : i32
    %c0_i32_1 = arith.constant 0 : i32
    return %c0_i32, %c0_i32_0 : i32, i32
  }
  func.func @transform_2(%arg0: i32) -> (i32, i32) {
    %c0_i32 = arith.constant 0 : i32
    %c0_i32_0 = arith.constant 0 : i32
    %c0_i32_1 = arith.constant 0 : i32
    return %c0_i32, %c0_i32_0 : i32, i32
  }
  func.func @transform_3(%arg0: i32) -> (i32, i32) {
    %c0_i32 = arith.constant 0 : i32
    %c0_i32_0 = arith.constant 0 : i32
    return %arg0, %c0_i32 : i32, i32
  }
}

module attributes {stable_mosaic.version = 11 : i64} {
  func.func @_layer_kernel(%arg0: i32, %arg1: memref<8x128xbf16, #tpu.memory_space<vmem>>, %arg2: memref<1x1x8xf32, #tpu.memory_space<vmem>>, %arg3: memref<128x384xbf16, #tpu.memory_space<vmem>>, %arg4: memref<128x128xbf16, #tpu.memory_space<vmem>>, %arg5: memref<128x512xbf16, #tpu.memory_space<vmem>>, %arg6: memref<512x128xbf16, #tpu.memory_space<vmem>>, %arg7: memref<9x128xf32, #tpu.memory_space<vmem>>, %arg8: memref<1x512xf32, #tpu.memory_space<vmem>>, %arg9: memref<8x128xbf16, #tpu.memory_space<vmem>>) attributes {dimension_semantics = [#tpu.dimension_semantics<parallel>], iteration_bounds = array<i64: 2>, scalar_prefetch = 0 : i64, scratch_operands = 0 : i64, tpu.core_type = #tpu.core_type<tc>, window_params = [{transform_indices = @transform_0, window_bounds = array<i64: 8, 128>}, {transform_indices = @transform_1, window_bounds = array<i64: 1, 1, 8>}, {pipeline_mode = #tpu.pipeline_mode<synchronous>, transform_indices = @transform_2, window_bounds = array<i64: 128, 384>}, {pipeline_mode = #tpu.pipeline_mode<synchronous>, transform_indices = @transform_3, window_bounds = array<i64: 128, 128>}, {pipeline_mode = #tpu.pipeline_mode<synchronous>, transform_indices = @transform_4, window_bounds = array<i64: 128, 512>}, {pipeline_mode = #tpu.pipeline_mode<synchronous>, transform_indices = @transform_5, window_bounds = array<i64: 512, 128>}, {pipeline_mode = #tpu.pipeline_mode<synchronous>, transform_indices = @transform_6, window_bounds = array<i64: 9, 128>}, {pipeline_mode = #tpu.pipeline_mode<synchronous>, transform_indices = @transform_7, window_bounds = array<i64: 1, 512>}, {transform_indices = @transform_8, window_bounds = array<i64: 8, 128>}]} {
    %c0 = arith.constant 0 : index
    %c0_0 = arith.constant 0 : index
    %0 = vector.load %arg1[%c0, %c0_0] : memref<8x128xbf16, #tpu.memory_space<vmem>>, vector<8x128xbf16>
    %c0_1 = arith.constant 0 : index
    %c0_2 = arith.constant 0 : index
    %1 = vector.load %arg7[%c0_1, %c0_2] : memref<9x128xf32, #tpu.memory_space<vmem>>, vector<9x128xf32>
    %2 = vector.extract_strided_slice %1 {offsets = [0, 0], sizes = [1, 128], strides = [1, 1]} : vector<9x128xf32> to vector<1x128xf32>
    %3 = vector.extract_strided_slice %1 {offsets = [1, 0], sizes = [1, 128], strides = [1, 1]} : vector<9x128xf32> to vector<1x128xf32>
    %4 = vector.extract_strided_slice %1 {offsets = [2, 0], sizes = [1, 128], strides = [1, 1]} : vector<9x128xf32> to vector<1x128xf32>
    %5 = vector.extract_strided_slice %1 {offsets = [3, 0], sizes = [1, 128], strides = [1, 1]} : vector<9x128xf32> to vector<1x128xf32>
    %6 = vector.extract_strided_slice %1 {offsets = [4, 0], sizes = [1, 128], strides = [1, 1]} : vector<9x128xf32> to vector<1x128xf32>
    %7 = vector.extract_strided_slice %1 {offsets = [5, 0], sizes = [1, 128], strides = [1, 1]} : vector<9x128xf32> to vector<1x128xf32>
    %8 = vector.extract_strided_slice %1 {offsets = [6, 0], sizes = [1, 128], strides = [1, 1]} : vector<9x128xf32> to vector<1x128xf32>
    %9 = vector.extract_strided_slice %1 {offsets = [7, 0], sizes = [1, 128], strides = [1, 1]} : vector<9x128xf32> to vector<1x128xf32>
    %10 = vector.extract_strided_slice %1 {offsets = [8, 0], sizes = [1, 128], strides = [1, 1]} : vector<9x128xf32> to vector<1x128xf32>
    %c0_3 = arith.constant 0 : index
    %c0_4 = arith.constant 0 : index
    %11 = vector.load %arg3[%c0_3, %c0_4] : memref<128x384xbf16, #tpu.memory_space<vmem>>, vector<128x384xbf16>
    %cst = arith.constant dense<0.000000e+00> : vector<8x384xf32>
    %12 = tpu.matmul %0, %11, %cst {dimension_numbers = #tpu.dot_dimension_numbers<[1], [0], [0], [1], [0, 0, 1, 1], [], []>} : vector<8x128xbf16>, vector<128x384xbf16>, vector<8x384xf32> -> vector<8x384xf32>
    %13 = vector.extract_strided_slice %12 {offsets = [0, 0], sizes = [8, 128], strides = [1, 1]} : vector<8x384xf32> to vector<8x128xf32>
    %14 = vector.broadcast %2 : vector<1x128xf32> to vector<8x128xf32>
    %15 = arith.addf %13, %14 : vector<8x128xf32>
    %16 = arith.truncf %15 : vector<8x128xf32> to vector<8x128xbf16>
    %17 = vector.extract_strided_slice %12 {offsets = [0, 128], sizes = [8, 128], strides = [1, 1]} : vector<8x384xf32> to vector<8x128xf32>
    %18 = vector.broadcast %3 : vector<1x128xf32> to vector<8x128xf32>
    %19 = arith.addf %17, %18 : vector<8x128xf32>
    %20 = arith.truncf %19 : vector<8x128xf32> to vector<8x128xbf16>
    %21 = vector.extract_strided_slice %12 {offsets = [0, 256], sizes = [8, 128], strides = [1, 1]} : vector<8x384xf32> to vector<8x128xf32>
    %22 = vector.broadcast %4 : vector<1x128xf32> to vector<8x128xf32>
    %23 = arith.addf %21, %22 : vector<8x128xf32>
    %24 = arith.truncf %23 : vector<8x128xf32> to vector<8x128xbf16>
    %c0_5 = arith.constant 0 : index
    %c0_6 = arith.constant 0 : index
    %c0_7 = arith.constant 0 : index
    %25 = vector.load %arg2[%c0_5, %c0_6, %c0_7] : memref<1x1x8xf32, #tpu.memory_space<vmem>>, vector<1x1x8xf32>
    %26 = vector.shape_cast %25 : vector<1x1x8xf32> to vector<1x8xf32>
    %27 = vector.shape_cast %26 : vector<1x8xf32> to vector<1x8xf32>
    %28 = vector.broadcast %27 : vector<1x8xf32> to vector<8x8xf32>
    %c0_8 = arith.constant 0 : index
    %c0_9 = arith.constant 0 : index
    %29 = vector.load %arg4[%c0_8, %c0_9] : memref<128x128xbf16, #tpu.memory_space<vmem>>, vector<128x128xbf16>
    %30 = vector.extract_strided_slice %16 {offsets = [0, 0], sizes = [8, 32], strides = [1, 1]} : vector<8x128xbf16> to vector<8x32xbf16>
    %31 = vector.extract_strided_slice %20 {offsets = [0, 0], sizes = [8, 32], strides = [1, 1]} : vector<8x128xbf16> to vector<8x32xbf16>
    %cst_10 = arith.constant dense<0.000000e+00> : vector<8x8xf32>
    %32 = tpu.matmul %30, %31, %cst_10 {dimension_numbers = #tpu.dot_dimension_numbers<[1], [1], [0], [0], [0, 0, 1, 0], [], []>} : vector<8x32xbf16>, vector<8x32xbf16>, vector<8x8xf32> -> vector<8x8xf32>
    %cst_11 = arith.constant 0.176776692 : f32
    %33 = vector.broadcast %cst_11 : f32 to vector<8x8xf32>
    %34 = arith.mulf %32, %33 : vector<8x8xf32>
    %35 = arith.addf %34, %28 : vector<8x8xf32>
    %cst_12 = arith.constant dense<0xFF800000> : vector<8xf32>
    %36 = vector.multi_reduction <maximumf>, %35, %cst_12 [1] : vector<8x8xf32> to vector<8xf32>
    %37 = vector.shape_cast %36 : vector<8xf32> to vector<8x1xf32>
    %38 = vector.broadcast %37 : vector<8x1xf32> to vector<8x8xf32>
    %39 = arith.subf %35, %38 : vector<8x8xf32>
    %40 = math.exp %39 : vector<8x8xf32>
    %cst_13 = arith.constant dense<0.000000e+00> : vector<8xf32>
    %41 = vector.multi_reduction <add>, %40, %cst_13 [1] : vector<8x8xf32> to vector<8xf32>
    %42 = vector.shape_cast %41 : vector<8xf32> to vector<8x1xf32>
    %43 = tpu.reciprocal %42 {approx = true} : vector<8x1xf32> -> vector<8x1xf32>
    %44 = vector.broadcast %43 : vector<8x1xf32> to vector<8x8xf32>
    %45 = arith.mulf %40, %44 : vector<8x8xf32>
    %46 = arith.truncf %45 : vector<8x8xf32> to vector<8x8xbf16>
    %47 = vector.extract_strided_slice %24 {offsets = [0, 0], sizes = [8, 32], strides = [1, 1]} : vector<8x128xbf16> to vector<8x32xbf16>
    %cst_14 = arith.constant dense<0.000000e+00> : vector<8x32xf32>
    %48 = tpu.matmul %46, %47, %cst_14 {dimension_numbers = #tpu.dot_dimension_numbers<[1], [0], [0], [1], [0, 0, 1, 1], [], []>} : vector<8x8xbf16>, vector<8x32xbf16>, vector<8x32xf32> -> vector<8x32xf32>
    %49 = arith.truncf %48 : vector<8x32xf32> to vector<8x32xbf16>
    %50 = vector.extract_strided_slice %29 {offsets = [0, 0], sizes = [32, 128], strides = [1, 1]} : vector<128x128xbf16> to vector<32x128xbf16>
    %cst_15 = arith.constant dense<0.000000e+00> : vector<8x128xf32>
    %51 = tpu.matmul %49, %50, %cst_15 {dimension_numbers = #tpu.dot_dimension_numbers<[1], [0], [0], [1], [0, 0, 1, 1], [], []>} : vector<8x32xbf16>, vector<32x128xbf16>, vector<8x128xf32> -> vector<8x128xf32>
    %52 = vector.extract_strided_slice %16 {offsets = [0, 32], sizes = [8, 32], strides = [1, 1]} : vector<8x128xbf16> to vector<8x32xbf16>
    %53 = vector.extract_strided_slice %20 {offsets = [0, 32], sizes = [8, 32], strides = [1, 1]} : vector<8x128xbf16> to vector<8x32xbf16>
    %cst_16 = arith.constant dense<0.000000e+00> : vector<8x8xf32>
    %54 = tpu.matmul %52, %53, %cst_16 {dimension_numbers = #tpu.dot_dimension_numbers<[1], [1], [0], [0], [0, 0, 1, 0], [], []>} : vector<8x32xbf16>, vector<8x32xbf16>, vector<8x8xf32> -> vector<8x8xf32>
    %cst_17 = arith.constant 0.176776692 : f32
    %55 = vector.broadcast %cst_17 : f32 to vector<8x8xf32>
    %56 = arith.mulf %54, %55 : vector<8x8xf32>
    %57 = arith.addf %56, %28 : vector<8x8xf32>
    %cst_18 = arith.constant dense<0xFF800000> : vector<8xf32>
    %58 = vector.multi_reduction <maximumf>, %57, %cst_18 [1] : vector<8x8xf32> to vector<8xf32>
    %59 = vector.shape_cast %58 : vector<8xf32> to vector<8x1xf32>
    %60 = vector.broadcast %59 : vector<8x1xf32> to vector<8x8xf32>
    %61 = arith.subf %57, %60 : vector<8x8xf32>
    %62 = math.exp %61 : vector<8x8xf32>
    %cst_19 = arith.constant dense<0.000000e+00> : vector<8xf32>
    %63 = vector.multi_reduction <add>, %62, %cst_19 [1] : vector<8x8xf32> to vector<8xf32>
    %64 = vector.shape_cast %63 : vector<8xf32> to vector<8x1xf32>
    %65 = tpu.reciprocal %64 {approx = true} : vector<8x1xf32> -> vector<8x1xf32>
    %66 = vector.broadcast %65 : vector<8x1xf32> to vector<8x8xf32>
    %67 = arith.mulf %62, %66 : vector<8x8xf32>
    %68 = arith.truncf %67 : vector<8x8xf32> to vector<8x8xbf16>
    %69 = vector.extract_strided_slice %24 {offsets = [0, 32], sizes = [8, 32], strides = [1, 1]} : vector<8x128xbf16> to vector<8x32xbf16>
    %cst_20 = arith.constant dense<0.000000e+00> : vector<8x32xf32>
    %70 = tpu.matmul %68, %69, %cst_20 {dimension_numbers = #tpu.dot_dimension_numbers<[1], [0], [0], [1], [0, 0, 1, 1], [], []>} : vector<8x8xbf16>, vector<8x32xbf16>, vector<8x32xf32> -> vector<8x32xf32>
    %71 = arith.truncf %70 : vector<8x32xf32> to vector<8x32xbf16>
    %72 = vector.extract_strided_slice %29 {offsets = [32, 0], sizes = [32, 128], strides = [1, 1]} : vector<128x128xbf16> to vector<32x128xbf16>
    %cst_21 = arith.constant dense<0.000000e+00> : vector<8x128xf32>
    %73 = tpu.matmul %71, %72, %cst_21 {dimension_numbers = #tpu.dot_dimension_numbers<[1], [0], [0], [1], [0, 0, 1, 1], [], []>} : vector<8x32xbf16>, vector<32x128xbf16>, vector<8x128xf32> -> vector<8x128xf32>
    %74 = arith.addf %51, %73 : vector<8x128xf32>
    %75 = vector.extract_strided_slice %16 {offsets = [0, 64], sizes = [8, 32], strides = [1, 1]} : vector<8x128xbf16> to vector<8x32xbf16>
    %76 = vector.extract_strided_slice %20 {offsets = [0, 64], sizes = [8, 32], strides = [1, 1]} : vector<8x128xbf16> to vector<8x32xbf16>
    %cst_22 = arith.constant dense<0.000000e+00> : vector<8x8xf32>
    %77 = tpu.matmul %75, %76, %cst_22 {dimension_numbers = #tpu.dot_dimension_numbers<[1], [1], [0], [0], [0, 0, 1, 0], [], []>} : vector<8x32xbf16>, vector<8x32xbf16>, vector<8x8xf32> -> vector<8x8xf32>
    %cst_23 = arith.constant 0.176776692 : f32
    %78 = vector.broadcast %cst_23 : f32 to vector<8x8xf32>
    %79 = arith.mulf %77, %78 : vector<8x8xf32>
    %80 = arith.addf %79, %28 : vector<8x8xf32>
    %cst_24 = arith.constant dense<0xFF800000> : vector<8xf32>
    %81 = vector.multi_reduction <maximumf>, %80, %cst_24 [1] : vector<8x8xf32> to vector<8xf32>
    %82 = vector.shape_cast %81 : vector<8xf32> to vector<8x1xf32>
    %83 = vector.broadcast %82 : vector<8x1xf32> to vector<8x8xf32>
    %84 = arith.subf %80, %83 : vector<8x8xf32>
    %85 = math.exp %84 : vector<8x8xf32>
    %cst_25 = arith.constant dense<0.000000e+00> : vector<8xf32>
    %86 = vector.multi_reduction <add>, %85, %cst_25 [1] : vector<8x8xf32> to vector<8xf32>
    %87 = vector.shape_cast %86 : vector<8xf32> to vector<8x1xf32>
    %88 = tpu.reciprocal %87 {approx = true} : vector<8x1xf32> -> vector<8x1xf32>
    %89 = vector.broadcast %88 : vector<8x1xf32> to vector<8x8xf32>
    %90 = arith.mulf %85, %89 : vector<8x8xf32>
    %91 = arith.truncf %90 : vector<8x8xf32> to vector<8x8xbf16>
    %92 = vector.extract_strided_slice %24 {offsets = [0, 64], sizes = [8, 32], strides = [1, 1]} : vector<8x128xbf16> to vector<8x32xbf16>
    %cst_26 = arith.constant dense<0.000000e+00> : vector<8x32xf32>
    %93 = tpu.matmul %91, %92, %cst_26 {dimension_numbers = #tpu.dot_dimension_numbers<[1], [0], [0], [1], [0, 0, 1, 1], [], []>} : vector<8x8xbf16>, vector<8x32xbf16>, vector<8x32xf32> -> vector<8x32xf32>
    %94 = arith.truncf %93 : vector<8x32xf32> to vector<8x32xbf16>
    %95 = vector.extract_strided_slice %29 {offsets = [64, 0], sizes = [32, 128], strides = [1, 1]} : vector<128x128xbf16> to vector<32x128xbf16>
    %cst_27 = arith.constant dense<0.000000e+00> : vector<8x128xf32>
    %96 = tpu.matmul %94, %95, %cst_27 {dimension_numbers = #tpu.dot_dimension_numbers<[1], [0], [0], [1], [0, 0, 1, 1], [], []>} : vector<8x32xbf16>, vector<32x128xbf16>, vector<8x128xf32> -> vector<8x128xf32>
    %97 = arith.addf %74, %96 : vector<8x128xf32>
    %98 = vector.extract_strided_slice %16 {offsets = [0, 96], sizes = [8, 32], strides = [1, 1]} : vector<8x128xbf16> to vector<8x32xbf16>
    %99 = vector.extract_strided_slice %20 {offsets = [0, 96], sizes = [8, 32], strides = [1, 1]} : vector<8x128xbf16> to vector<8x32xbf16>
    %cst_28 = arith.constant dense<0.000000e+00> : vector<8x8xf32>
    %100 = tpu.matmul %98, %99, %cst_28 {dimension_numbers = #tpu.dot_dimension_numbers<[1], [1], [0], [0], [0, 0, 1, 0], [], []>} : vector<8x32xbf16>, vector<8x32xbf16>, vector<8x8xf32> -> vector<8x8xf32>
    %cst_29 = arith.constant 0.176776692 : f32
    %101 = vector.broadcast %cst_29 : f32 to vector<8x8xf32>
    %102 = arith.mulf %100, %101 : vector<8x8xf32>
    %103 = arith.addf %102, %28 : vector<8x8xf32>
    %cst_30 = arith.constant dense<0xFF800000> : vector<8xf32>
    %104 = vector.multi_reduction <maximumf>, %103, %cst_30 [1] : vector<8x8xf32> to vector<8xf32>
    %105 = vector.shape_cast %104 : vector<8xf32> to vector<8x1xf32>
    %106 = vector.broadcast %105 : vector<8x1xf32> to vector<8x8xf32>
    %107 = arith.subf %103, %106 : vector<8x8xf32>
    %108 = math.exp %107 : vector<8x8xf32>
    %cst_31 = arith.constant dense<0.000000e+00> : vector<8xf32>
    %109 = vector.multi_reduction <add>, %108, %cst_31 [1] : vector<8x8xf32> to vector<8xf32>
    %110 = vector.shape_cast %109 : vector<8xf32> to vector<8x1xf32>
    %111 = tpu.reciprocal %110 {approx = true} : vector<8x1xf32> -> vector<8x1xf32>
    %112 = vector.broadcast %111 : vector<8x1xf32> to vector<8x8xf32>
    %113 = arith.mulf %108, %112 : vector<8x8xf32>
    %114 = arith.truncf %113 : vector<8x8xf32> to vector<8x8xbf16>
    %115 = vector.extract_strided_slice %24 {offsets = [0, 96], sizes = [8, 32], strides = [1, 1]} : vector<8x128xbf16> to vector<8x32xbf16>
    %cst_32 = arith.constant dense<0.000000e+00> : vector<8x32xf32>
    %116 = tpu.matmul %114, %115, %cst_32 {dimension_numbers = #tpu.dot_dimension_numbers<[1], [0], [0], [1], [0, 0, 1, 1], [], []>} : vector<8x8xbf16>, vector<8x32xbf16>, vector<8x32xf32> -> vector<8x32xf32>
    %117 = arith.truncf %116 : vector<8x32xf32> to vector<8x32xbf16>
    %118 = vector.extract_strided_slice %29 {offsets = [96, 0], sizes = [32, 128], strides = [1, 1]} : vector<128x128xbf16> to vector<32x128xbf16>
    %cst_33 = arith.constant dense<0.000000e+00> : vector<8x128xf32>
    %119 = tpu.matmul %117, %118, %cst_33 {dimension_numbers = #tpu.dot_dimension_numbers<[1], [0], [0], [1], [0, 0, 1, 1], [], []>} : vector<8x32xbf16>, vector<32x128xbf16>, vector<8x128xf32> -> vector<8x128xf32>
    %120 = arith.addf %97, %119 : vector<8x128xf32>
    %121 = arith.extf %0 : vector<8x128xbf16> to vector<8x128xf32>
    %122 = arith.addf %121, %120 : vector<8x128xf32>
    %123 = vector.broadcast %5 : vector<1x128xf32> to vector<8x128xf32>
    %124 = arith.addf %122, %123 : vector<8x128xf32>
    %cst_34 = arith.constant dense<0.000000e+00> : vector<8xf32>
    %125 = vector.multi_reduction <add>, %124, %cst_34 [1] : vector<8x128xf32> to vector<8xf32>
    %126 = vector.shape_cast %125 : vector<8xf32> to vector<8x1xf32>
    %cst_35 = arith.constant 1.280000e+02 : f32
    %127 = vector.broadcast %cst_35 : f32 to vector<8x1xf32>
    %128 = arith.divf %126, %127 : vector<8x1xf32>
    %129 = vector.broadcast %128 : vector<8x1xf32> to vector<8x128xf32>
    %130 = arith.subf %124, %129 : vector<8x128xf32>
    %131 = arith.mulf %130, %130 : vector<8x128xf32>
    %cst_36 = arith.constant dense<0.000000e+00> : vector<8xf32>
    %132 = vector.multi_reduction <add>, %131, %cst_36 [1] : vector<8x128xf32> to vector<8xf32>
    %133 = vector.shape_cast %132 : vector<8xf32> to vector<8x1xf32>
    %cst_37 = arith.constant 1.280000e+02 : f32
    %134 = vector.broadcast %cst_37 : f32 to vector<8x1xf32>
    %135 = arith.divf %133, %134 : vector<8x1xf32>
    %136 = vector.broadcast %128 : vector<8x1xf32> to vector<8x128xf32>
    %137 = arith.subf %124, %136 : vector<8x128xf32>
    %cst_38 = arith.constant 9.99999996E-13 : f32
    %138 = vector.broadcast %cst_38 : f32 to vector<8x1xf32>
    %139 = arith.addf %135, %138 : vector<8x1xf32>
    %140 = math.rsqrt %139 : vector<8x1xf32>
    %141 = vector.broadcast %140 : vector<8x1xf32> to vector<8x128xf32>
    %142 = arith.mulf %137, %141 : vector<8x128xf32>
    %143 = vector.broadcast %6 : vector<1x128xf32> to vector<8x128xf32>
    %144 = arith.mulf %142, %143 : vector<8x128xf32>
    %145 = vector.broadcast %7 : vector<1x128xf32> to vector<8x128xf32>
    %146 = arith.addf %144, %145 : vector<8x128xf32>
    %147 = arith.truncf %146 : vector<8x128xf32> to vector<8x128xbf16>
    %c0_39 = arith.constant 0 : index
    %c0_40 = arith.constant 0 : index
    %148 = vector.load %arg5[%c0_39, %c0_40] : memref<128x512xbf16, #tpu.memory_space<vmem>>, vector<128x512xbf16>
    %cst_41 = arith.constant dense<0.000000e+00> : vector<8x512xf32>
    %149 = tpu.matmul %147, %148, %cst_41 {dimension_numbers = #tpu.dot_dimension_numbers<[1], [0], [0], [1], [0, 0, 1, 1], [], []>} : vector<8x128xbf16>, vector<128x512xbf16>, vector<8x512xf32> -> vector<8x512xf32>
    %c0_42 = arith.constant 0 : index
    %c0_43 = arith.constant 0 : index
    %150 = vector.load %arg8[%c0_42, %c0_43] : memref<1x512xf32, #tpu.memory_space<vmem>>, vector<1x512xf32>
    %151 = vector.broadcast %150 : vector<1x512xf32> to vector<8x512xf32>
    %152 = arith.addf %149, %151 : vector<8x512xf32>
    %cst_44 = arith.constant 5.000000e-01 : f32
    %153 = vector.broadcast %cst_44 : f32 to vector<8x512xf32>
    %154 = arith.mulf %153, %152 : vector<8x512xf32>
    %cst_45 = arith.constant 4.471500e-02 : f32
    %155 = vector.broadcast %cst_45 : f32 to vector<8x512xf32>
    %156 = arith.mulf %155, %152 : vector<8x512xf32>
    %157 = arith.mulf %156, %152 : vector<8x512xf32>
    %158 = arith.mulf %157, %152 : vector<8x512xf32>
    %159 = arith.addf %152, %158 : vector<8x512xf32>
    %cst_46 = arith.constant 0.797884583 : f32
    %160 = vector.broadcast %cst_46 : f32 to vector<8x512xf32>
    %161 = arith.mulf %160, %159 : vector<8x512xf32>
    %162 = math.tanh %161 : vector<8x512xf32>
    %cst_47 = arith.constant 1.000000e+00 : f32
    %163 = vector.broadcast %cst_47 : f32 to vector<8x512xf32>
    %164 = arith.addf %163, %162 : vector<8x512xf32>
    %165 = arith.mulf %154, %164 : vector<8x512xf32>
    %166 = arith.truncf %165 : vector<8x512xf32> to vector<8x512xbf16>
    %c0_48 = arith.constant 0 : index
    %c0_49 = arith.constant 0 : index
    %167 = vector.load %arg6[%c0_48, %c0_49] : memref<512x128xbf16, #tpu.memory_space<vmem>>, vector<512x128xbf16>
    %cst_50 = arith.constant dense<0.000000e+00> : vector<8x128xf32>
    %168 = tpu.matmul %166, %167, %cst_50 {dimension_numbers = #tpu.dot_dimension_numbers<[1], [0], [0], [1], [0, 0, 1, 1], [], []>} : vector<8x512xbf16>, vector<512x128xbf16>, vector<8x128xf32> -> vector<8x128xf32>
    %169 = vector.broadcast %8 : vector<1x128xf32> to vector<8x128xf32>
    %170 = arith.addf %168, %169 : vector<8x128xf32>
    %171 = arith.addf %170, %146 : vector<8x128xf32>
    %cst_51 = arith.constant dense<0.000000e+00> : vector<8xf32>
    %172 = vector.multi_reduction <add>, %171, %cst_51 [1] : vector<8x128xf32> to vector<8xf32>
    %173 = vector.shape_cast %172 : vector<8xf32> to vector<8x1xf32>
    %cst_52 = arith.constant 1.280000e+02 : f32
    %174 = vector.broadcast %cst_52 : f32 to vector<8x1xf32>
    %175 = arith.divf %173, %174 : vector<8x1xf32>
    %176 = vector.broadcast %175 : vector<8x1xf32> to vector<8x128xf32>
    %177 = arith.subf %171, %176 : vector<8x128xf32>
    %178 = arith.mulf %177, %177 : vector<8x128xf32>
    %cst_53 = arith.constant dense<0.000000e+00> : vector<8xf32>
    %179 = vector.multi_reduction <add>, %178, %cst_53 [1] : vector<8x128xf32> to vector<8xf32>
    %180 = vector.shape_cast %179 : vector<8xf32> to vector<8x1xf32>
    %cst_54 = arith.constant 1.280000e+02 : f32
    %181 = vector.broadcast %cst_54 : f32 to vector<8x1xf32>
    %182 = arith.divf %180, %181 : vector<8x1xf32>
    %183 = vector.broadcast %175 : vector<8x1xf32> to vector<8x128xf32>
    %184 = arith.subf %171, %183 : vector<8x128xf32>
    %cst_55 = arith.constant 9.99999996E-13 : f32
    %185 = vector.broadcast %cst_55 : f32 to vector<8x1xf32>
    %186 = arith.addf %182, %185 : vector<8x1xf32>
    %187 = math.rsqrt %186 : vector<8x1xf32>
    %188 = vector.broadcast %187 : vector<8x1xf32> to vector<8x128xf32>
    %189 = arith.mulf %184, %188 : vector<8x128xf32>
    %190 = vector.broadcast %9 : vector<1x128xf32> to vector<8x128xf32>
    %191 = arith.mulf %189, %190 : vector<8x128xf32>
    %192 = vector.broadcast %10 : vector<1x128xf32> to vector<8x128xf32>
    %193 = arith.addf %191, %192 : vector<8x128xf32>
    %194 = arith.truncf %193 : vector<8x128xf32> to vector<8x128xbf16>
    %c0_56 = arith.constant 0 : index
    %c0_57 = arith.constant 0 : index
    %195 = vector.load %arg9[%c0_56, %c0_57] : memref<8x128xbf16, #tpu.memory_space<vmem>>, vector<8x128xbf16>
    tpu.vector_store %arg9[%c0_56, %c0_57], %194 {strides = array<i32>} : memref<8x128xbf16, #tpu.memory_space<vmem>>, vector<8x128xbf16>,
    return
  }
  func.func @transform_0(%arg0: i32) -> (i32, i32) {
    %c0_i32 = arith.constant 0 : i32
    %c0_i32_0 = arith.constant 0 : i32
    return %arg0, %c0_i32 : i32, i32
  }
  func.func @transform_1(%arg0: i32) -> (i32, i32, i32) {
    %c0_i32 = arith.constant 0 : i32
    %c0_i32_0 = arith.constant 0 : i32
    %c0_i32_1 = arith.constant 0 : i32
    return %arg0, %c0_i32, %c0_i32_0 : i32, i32, i32
  }
  func.func @transform_2(%arg0: i32) -> (i32, i32) {
    %c0_i32 = arith.constant 0 : i32
    %c0_i32_0 = arith.constant 0 : i32
    %c0_i32_1 = arith.constant 0 : i32
    return %c0_i32, %c0_i32_0 : i32, i32
  }
  func.func @transform_3(%arg0: i32) -> (i32, i32) {
    %c0_i32 = arith.constant 0 : i32
    %c0_i32_0 = arith.constant 0 : i32
    %c0_i32_1 = arith.constant 0 : i32
    return %c0_i32, %c0_i32_0 : i32, i32
  }
  func.func @transform_4(%arg0: i32) -> (i32, i32) {
    %c0_i32 = arith.constant 0 : i32
    %c0_i32_0 = arith.constant 0 : i32
    %c0_i32_1 = arith.constant 0 : i32
    return %c0_i32, %c0_i32_0 : i32, i32
  }
  func.func @transform_5(%arg0: i32) -> (i32, i32) {
    %c0_i32 = arith.constant 0 : i32
    %c0_i32_0 = arith.constant 0 : i32
    %c0_i32_1 = arith.constant 0 : i32
    return %c0_i32, %c0_i32_0 : i32, i32
  }
  func.func @transform_6(%arg0: i32) -> (i32, i32) {
    %c0_i32 = arith.constant 0 : i32
    %c0_i32_0 = arith.constant 0 : i32
    %c0_i32_1 = arith.constant 0 : i32
    return %c0_i32, %c0_i32_0 : i32, i32
  }
  func.func @transform_7(%arg0: i32) -> (i32, i32) {
    %c0_i32 = arith.constant 0 : i32
    %c0_i32_0 = arith.constant 0 : i32
    %c0_i32_1 = arith.constant 0 : i32
    return %c0_i32, %c0_i32_0 : i32, i32
  }
  func.func @transform_8(%arg0: i32) -> (i32, i32) {
    %c0_i32 = arith.constant 0 : i32
    %c0_i32_0 = arith.constant 0 : i32
    return %arg0, %c0_i32 : i32, i32
  }
}

module attributes {stable_mosaic.version = 11 : i64} {
  func.func @_layer_kernel(%arg0: i32, %arg1: memref<8x128xbf16, #tpu.memory_space<vmem>>, %arg2: memref<1x1x8xf32, #tpu.memory_space<vmem>>, %arg3: memref<128x384xbf16, #tpu.memory_space<vmem>>, %arg4: memref<128x128xbf16, #tpu.memory_space<vmem>>, %arg5: memref<128x512xbf16, #tpu.memory_space<vmem>>, %arg6: memref<512x128xbf16, #tpu.memory_space<vmem>>, %arg7: memref<9x128xf32, #tpu.memory_space<vmem>>, %arg8: memref<1x512xf32, #tpu.memory_space<vmem>>, %arg9: memref<8x128xbf16, #tpu.memory_space<vmem>>) attributes {dimension_semantics = [#tpu.dimension_semantics<parallel>], iteration_bounds = array<i64: 2>, scalar_prefetch = 0 : i64, scratch_operands = 0 : i64, tpu.core_type = #tpu.core_type<tc>, window_params = [{transform_indices = @transform_0, window_bounds = array<i64: 8, 128>}, {transform_indices = @transform_1, window_bounds = array<i64: 1, 1, 8>}, {pipeline_mode = #tpu.pipeline_mode<synchronous>, transform_indices = @transform_2, window_bounds = array<i64: 128, 384>}, {pipeline_mode = #tpu.pipeline_mode<synchronous>, transform_indices = @transform_3, window_bounds = array<i64: 128, 128>}, {pipeline_mode = #tpu.pipeline_mode<synchronous>, transform_indices = @transform_4, window_bounds = array<i64: 128, 512>}, {pipeline_mode = #tpu.pipeline_mode<synchronous>, transform_indices = @transform_5, window_bounds = array<i64: 512, 128>}, {pipeline_mode = #tpu.pipeline_mode<synchronous>, transform_indices = @transform_6, window_bounds = array<i64: 9, 128>}, {pipeline_mode = #tpu.pipeline_mode<synchronous>, transform_indices = @transform_7, window_bounds = array<i64: 1, 512>}, {transform_indices = @transform_8, window_bounds = array<i64: 8, 128>}]} {
    %c0 = arith.constant 0 : index
    %c0_0 = arith.constant 0 : index
    %0 = vector.load %arg1[%c0, %c0_0] : memref<8x128xbf16, #tpu.memory_space<vmem>>, vector<8x128xbf16>
    %c0_1 = arith.constant 0 : index
    %c0_2 = arith.constant 0 : index
    %1 = vector.load %arg7[%c0_1, %c0_2] : memref<9x128xf32, #tpu.memory_space<vmem>>, vector<9x128xf32>
    %2 = vector.extract_strided_slice %1 {offsets = [0, 0], sizes = [1, 128], strides = [1, 1]} : vector<9x128xf32> to vector<1x128xf32>
    %3 = vector.extract_strided_slice %1 {offsets = [1, 0], sizes = [1, 128], strides = [1, 1]} : vector<9x128xf32> to vector<1x128xf32>
    %4 = vector.extract_strided_slice %1 {offsets = [2, 0], sizes = [1, 128], strides = [1, 1]} : vector<9x128xf32> to vector<1x128xf32>
    %5 = vector.extract_strided_slice %1 {offsets = [3, 0], sizes = [1, 128], strides = [1, 1]} : vector<9x128xf32> to vector<1x128xf32>
    %6 = vector.extract_strided_slice %1 {offsets = [4, 0], sizes = [1, 128], strides = [1, 1]} : vector<9x128xf32> to vector<1x128xf32>
    %7 = vector.extract_strided_slice %1 {offsets = [5, 0], sizes = [1, 128], strides = [1, 1]} : vector<9x128xf32> to vector<1x128xf32>
    %8 = vector.extract_strided_slice %1 {offsets = [6, 0], sizes = [1, 128], strides = [1, 1]} : vector<9x128xf32> to vector<1x128xf32>
    %9 = vector.extract_strided_slice %1 {offsets = [7, 0], sizes = [1, 128], strides = [1, 1]} : vector<9x128xf32> to vector<1x128xf32>
    %10 = vector.extract_strided_slice %1 {offsets = [8, 0], sizes = [1, 128], strides = [1, 1]} : vector<9x128xf32> to vector<1x128xf32>
    %c0_3 = arith.constant 0 : index
    %c0_4 = arith.constant 0 : index
    %11 = vector.load %arg3[%c0_3, %c0_4] : memref<128x384xbf16, #tpu.memory_space<vmem>>, vector<128x384xbf16>
    %cst = arith.constant dense<0.000000e+00> : vector<8x384xf32>
    %12 = tpu.matmul %0, %11, %cst {dimension_numbers = #tpu.dot_dimension_numbers<[1], [0], [0], [1], [0, 0, 1, 1], [], []>} : vector<8x128xbf16>, vector<128x384xbf16>, vector<8x384xf32> -> vector<8x384xf32>
    %13 = vector.extract_strided_slice %12 {offsets = [0, 0], sizes = [8, 128], strides = [1, 1]} : vector<8x384xf32> to vector<8x128xf32>
    %14 = vector.broadcast %2 : vector<1x128xf32> to vector<8x128xf32>
    %15 = arith.addf %13, %14 : vector<8x128xf32>
    %16 = arith.truncf %15 : vector<8x128xf32> to vector<8x128xbf16>
    %17 = vector.extract_strided_slice %12 {offsets = [0, 128], sizes = [8, 128], strides = [1, 1]} : vector<8x384xf32> to vector<8x128xf32>
    %18 = vector.broadcast %3 : vector<1x128xf32> to vector<8x128xf32>
    %19 = arith.addf %17, %18 : vector<8x128xf32>
    %20 = arith.truncf %19 : vector<8x128xf32> to vector<8x128xbf16>
    %21 = vector.extract_strided_slice %12 {offsets = [0, 256], sizes = [8, 128], strides = [1, 1]} : vector<8x384xf32> to vector<8x128xf32>
    %22 = vector.broadcast %4 : vector<1x128xf32> to vector<8x128xf32>
    %23 = arith.addf %21, %22 : vector<8x128xf32>
    %24 = arith.truncf %23 : vector<8x128xf32> to vector<8x128xbf16>
    %c0_5 = arith.constant 0 : index
    %c0_6 = arith.constant 0 : index
    %c0_7 = arith.constant 0 : index
    %25 = vector.load %arg2[%c0_5, %c0_6, %c0_7] : memref<1x1x8xf32, #tpu.memory_space<vmem>>, vector<1x1x8xf32>
    %26 = vector.shape_cast %25 : vector<1x1x8xf32> to vector<1x8xf32>
    %27 = vector.shape_cast %26 : vector<1x8xf32> to vector<1x8xf32>
    %28 = vector.broadcast %27 : vector<1x8xf32> to vector<8x8xf32>
    %c0_8 = arith.constant 0 : index
    %c0_9 = arith.constant 0 : index
    %29 = vector.load %arg4[%c0_8, %c0_9] : memref<128x128xbf16, #tpu.memory_space<vmem>>, vector<128x128xbf16>
    %30 = vector.extract_strided_slice %16 {offsets = [0, 0], sizes = [8, 32], strides = [1, 1]} : vector<8x128xbf16> to vector<8x32xbf16>
    %31 = vector.extract_strided_slice %20 {offsets = [0, 0], sizes = [8, 32], strides = [1, 1]} : vector<8x128xbf16> to vector<8x32xbf16>
    %cst_10 = arith.constant dense<0.000000e+00> : vector<8x8xf32>
    %32 = tpu.matmul %30, %31, %cst_10 {dimension_numbers = #tpu.dot_dimension_numbers<[1], [1], [0], [0], [0, 0, 1, 0], [], []>} : vector<8x32xbf16>, vector<8x32xbf16>, vector<8x8xf32> -> vector<8x8xf32>
    %cst_11 = arith.constant 0.176776692 : f32
    %33 = vector.broadcast %cst_11 : f32 to vector<8x8xf32>
    %34 = arith.mulf %32, %33 : vector<8x8xf32>
    %35 = arith.addf %34, %28 : vector<8x8xf32>
    %cst_12 = arith.constant dense<0xFF800000> : vector<8xf32>
    %36 = vector.multi_reduction <maximumf>, %35, %cst_12 [1] : vector<8x8xf32> to vector<8xf32>
    %37 = vector.shape_cast %36 : vector<8xf32> to vector<8x1xf32>
    %38 = vector.broadcast %37 : vector<8x1xf32> to vector<8x8xf32>
    %39 = arith.subf %35, %38 : vector<8x8xf32>
    %40 = math.exp %39 : vector<8x8xf32>
    %cst_13 = arith.constant dense<0.000000e+00> : vector<8xf32>
    %41 = vector.multi_reduction <add>, %40, %cst_13 [1] : vector<8x8xf32> to vector<8xf32>
    %42 = vector.shape_cast %41 : vector<8xf32> to vector<8x1xf32>
    %43 = tpu.reciprocal %42 {approx = true} : vector<8x1xf32> -> vector<8x1xf32>
    %44 = vector.broadcast %43 : vector<8x1xf32> to vector<8x8xf32>
    %45 = arith.mulf %40, %44 : vector<8x8xf32>
    %46 = arith.truncf %45 : vector<8x8xf32> to vector<8x8xbf16>
    %47 = vector.extract_strided_slice %24 {offsets = [0, 0], sizes = [8, 32], strides = [1, 1]} : vector<8x128xbf16> to vector<8x32xbf16>
    %cst_14 = arith.constant dense<0.000000e+00> : vector<8x32xf32>
    %48 = tpu.matmul %46, %47, %cst_14 {dimension_numbers = #tpu.dot_dimension_numbers<[1], [0], [0], [1], [0, 0, 1, 1], [], []>} : vector<8x8xbf16>, vector<8x32xbf16>, vector<8x32xf32> -> vector<8x32xf32>
    %49 = arith.truncf %48 : vector<8x32xf32> to vector<8x32xbf16>
    %50 = vector.extract_strided_slice %29 {offsets = [0, 0], sizes = [32, 128], strides = [1, 1]} : vector<128x128xbf16> to vector<32x128xbf16>
    %cst_15 = arith.constant dense<0.000000e+00> : vector<8x128xf32>
    %51 = tpu.matmul %49, %50, %cst_15 {dimension_numbers = #tpu.dot_dimension_numbers<[1], [0], [0], [1], [0, 0, 1, 1], [], []>} : vector<8x32xbf16>, vector<32x128xbf16>, vector<8x128xf32> -> vector<8x128xf32>
    %52 = vector.extract_strided_slice %16 {offsets = [0, 32], sizes = [8, 32], strides = [1, 1]} : vector<8x128xbf16> to vector<8x32xbf16>
    %53 = vector.extract_strided_slice %20 {offsets = [0, 32], sizes = [8, 32], strides = [1, 1]} : vector<8x128xbf16> to vector<8x32xbf16>
    %cst_16 = arith.constant dense<0.000000e+00> : vector<8x8xf32>
    %54 = tpu.matmul %52, %53, %cst_16 {dimension_numbers = #tpu.dot_dimension_numbers<[1], [1], [0], [0], [0, 0, 1, 0], [], []>} : vector<8x32xbf16>, vector<8x32xbf16>, vector<8x8xf32> -> vector<8x8xf32>
    %cst_17 = arith.constant 0.176776692 : f32
    %55 = vector.broadcast %cst_17 : f32 to vector<8x8xf32>
    %56 = arith.mulf %54, %55 : vector<8x8xf32>
    %57 = arith.addf %56, %28 : vector<8x8xf32>
    %cst_18 = arith.constant dense<0xFF800000> : vector<8xf32>
    %58 = vector.multi_reduction <maximumf>, %57, %cst_18 [1] : vector<8x8xf32> to vector<8xf32>
    %59 = vector.shape_cast %58 : vector<8xf32> to vector<8x1xf32>
    %60 = vector.broadcast %59 : vector<8x1xf32> to vector<8x8xf32>
    %61 = arith.subf %57, %60 : vector<8x8xf32>
    %62 = math.exp %61 : vector<8x8xf32>
    %cst_19 = arith.constant dense<0.000000e+00> : vector<8xf32>
    %63 = vector.multi_reduction <add>, %62, %cst_19 [1] : vector<8x8xf32> to vector<8xf32>
    %64 = vector.shape_cast %63 : vector<8xf32> to vector<8x1xf32>
    %65 = tpu.reciprocal %64 {approx = true} : vector<8x1xf32> -> vector<8x1xf32>
    %66 = vector.broadcast %65 : vector<8x1xf32> to vector<8x8xf32>
    %67 = arith.mulf %62, %66 : vector<8x8xf32>
    %68 = arith.truncf %67 : vector<8x8xf32> to vector<8x8xbf16>
    %69 = vector.extract_strided_slice %24 {offsets = [0, 32], sizes = [8, 32], strides = [1, 1]} : vector<8x128xbf16> to vector<8x32xbf16>
    %cst_20 = arith.constant dense<0.000000e+00> : vector<8x32xf32>
    %70 = tpu.matmul %68, %69, %cst_20 {dimension_numbers = #tpu.dot_dimension_numbers<[1], [0], [0], [1], [0, 0, 1, 1], [], []>} : vector<8x8xbf16>, vector<8x32xbf16>, vector<8x32xf32> -> vector<8x32xf32>
    %71 = arith.truncf %70 : vector<8x32xf32> to vector<8x32xbf16>
    %72 = vector.extract_strided_slice %29 {offsets = [32, 0], sizes = [32, 128], strides = [1, 1]} : vector<128x128xbf16> to vector<32x128xbf16>
    %cst_21 = arith.constant dense<0.000000e+00> : vector<8x128xf32>
    %73 = tpu.matmul %71, %72, %cst_21 {dimension_numbers = #tpu.dot_dimension_numbers<[1], [0], [0], [1], [0, 0, 1, 1], [], []>} : vector<8x32xbf16>, vector<32x128xbf16>, vector<8x128xf32> -> vector<8x128xf32>
    %74 = arith.addf %51, %73 : vector<8x128xf32>
    %75 = vector.extract_strided_slice %16 {offsets = [0, 64], sizes = [8, 32], strides = [1, 1]} : vector<8x128xbf16> to vector<8x32xbf16>
    %76 = vector.extract_strided_slice %20 {offsets = [0, 64], sizes = [8, 32], strides = [1, 1]} : vector<8x128xbf16> to vector<8x32xbf16>
    %cst_22 = arith.constant dense<0.000000e+00> : vector<8x8xf32>
    %77 = tpu.matmul %75, %76, %cst_22 {dimension_numbers = #tpu.dot_dimension_numbers<[1], [1], [0], [0], [0, 0, 1, 0], [], []>} : vector<8x32xbf16>, vector<8x32xbf16>, vector<8x8xf32> -> vector<8x8xf32>
    %cst_23 = arith.constant 0.176776692 : f32
    %78 = vector.broadcast %cst_23 : f32 to vector<8x8xf32>
    %79 = arith.mulf %77, %78 : vector<8x8xf32>
    %80 = arith.addf %79, %28 : vector<8x8xf32>
    %cst_24 = arith.constant dense<0xFF800000> : vector<8xf32>
    %81 = vector.multi_reduction <maximumf>, %80, %cst_24 [1] : vector<8x8xf32> to vector<8xf32>
    %82 = vector.shape_cast %81 : vector<8xf32> to vector<8x1xf32>
    %83 = vector.broadcast %82 : vector<8x1xf32> to vector<8x8xf32>
    %84 = arith.subf %80, %83 : vector<8x8xf32>
    %85 = math.exp %84 : vector<8x8xf32>
    %cst_25 = arith.constant dense<0.000000e+00> : vector<8xf32>
    %86 = vector.multi_reduction <add>, %85, %cst_25 [1] : vector<8x8xf32> to vector<8xf32>
    %87 = vector.shape_cast %86 : vector<8xf32> to vector<8x1xf32>
    %88 = tpu.reciprocal %87 {approx = true} : vector<8x1xf32> -> vector<8x1xf32>
    %89 = vector.broadcast %88 : vector<8x1xf32> to vector<8x8xf32>
    %90 = arith.mulf %85, %89 : vector<8x8xf32>
    %91 = arith.truncf %90 : vector<8x8xf32> to vector<8x8xbf16>
    %92 = vector.extract_strided_slice %24 {offsets = [0, 64], sizes = [8, 32], strides = [1, 1]} : vector<8x128xbf16> to vector<8x32xbf16>
    %cst_26 = arith.constant dense<0.000000e+00> : vector<8x32xf32>
    %93 = tpu.matmul %91, %92, %cst_26 {dimension_numbers = #tpu.dot_dimension_numbers<[1], [0], [0], [1], [0, 0, 1, 1], [], []>} : vector<8x8xbf16>, vector<8x32xbf16>, vector<8x32xf32> -> vector<8x32xf32>
    %94 = arith.truncf %93 : vector<8x32xf32> to vector<8x32xbf16>
    %95 = vector.extract_strided_slice %29 {offsets = [64, 0], sizes = [32, 128], strides = [1, 1]} : vector<128x128xbf16> to vector<32x128xbf16>
    %cst_27 = arith.constant dense<0.000000e+00> : vector<8x128xf32>
    %96 = tpu.matmul %94, %95, %cst_27 {dimension_numbers = #tpu.dot_dimension_numbers<[1], [0], [0], [1], [0, 0, 1, 1], [], []>} : vector<8x32xbf16>, vector<32x128xbf16>, vector<8x128xf32> -> vector<8x128xf32>
    %97 = arith.addf %74, %96 : vector<8x128xf32>
    %98 = vector.extract_strided_slice %16 {offsets = [0, 96], sizes = [8, 32], strides = [1, 1]} : vector<8x128xbf16> to vector<8x32xbf16>
    %99 = vector.extract_strided_slice %20 {offsets = [0, 96], sizes = [8, 32], strides = [1, 1]} : vector<8x128xbf16> to vector<8x32xbf16>
    %cst_28 = arith.constant dense<0.000000e+00> : vector<8x8xf32>
    %100 = tpu.matmul %98, %99, %cst_28 {dimension_numbers = #tpu.dot_dimension_numbers<[1], [1], [0], [0], [0, 0, 1, 0], [], []>} : vector<8x32xbf16>, vector<8x32xbf16>, vector<8x8xf32> -> vector<8x8xf32>
    %cst_29 = arith.constant 0.176776692 : f32
    %101 = vector.broadcast %cst_29 : f32 to vector<8x8xf32>
    %102 = arith.mulf %100, %101 : vector<8x8xf32>
    %103 = arith.addf %102, %28 : vector<8x8xf32>
    %cst_30 = arith.constant dense<0xFF800000> : vector<8xf32>
    %104 = vector.multi_reduction <maximumf>, %103, %cst_30 [1] : vector<8x8xf32> to vector<8xf32>
    %105 = vector.shape_cast %104 : vector<8xf32> to vector<8x1xf32>
    %106 = vector.broadcast %105 : vector<8x1xf32> to vector<8x8xf32>
    %107 = arith.subf %103, %106 : vector<8x8xf32>
    %108 = math.exp %107 : vector<8x8xf32>
    %cst_31 = arith.constant dense<0.000000e+00> : vector<8xf32>
    %109 = vector.multi_reduction <add>, %108, %cst_31 [1] : vector<8x8xf32> to vector<8xf32>
    %110 = vector.shape_cast %109 : vector<8xf32> to vector<8x1xf32>
    %111 = tpu.reciprocal %110 {approx = true} : vector<8x1xf32> -> vector<8x1xf32>
    %112 = vector.broadcast %111 : vector<8x1xf32> to vector<8x8xf32>
    %113 = arith.mulf %108, %112 : vector<8x8xf32>
    %114 = arith.truncf %113 : vector<8x8xf32> to vector<8x8xbf16>
    %115 = vector.extract_strided_slice %24 {offsets = [0, 96], sizes = [8, 32], strides = [1, 1]} : vector<8x128xbf16> to vector<8x32xbf16>
    %cst_32 = arith.constant dense<0.000000e+00> : vector<8x32xf32>
    %116 = tpu.matmul %114, %115, %cst_32 {dimension_numbers = #tpu.dot_dimension_numbers<[1], [0], [0], [1], [0, 0, 1, 1], [], []>} : vector<8x8xbf16>, vector<8x32xbf16>, vector<8x32xf32> -> vector<8x32xf32>
    %117 = arith.truncf %116 : vector<8x32xf32> to vector<8x32xbf16>
    %118 = vector.extract_strided_slice %29 {offsets = [96, 0], sizes = [32, 128], strides = [1, 1]} : vector<128x128xbf16> to vector<32x128xbf16>
    %cst_33 = arith.constant dense<0.000000e+00> : vector<8x128xf32>
    %119 = tpu.matmul %117, %118, %cst_33 {dimension_numbers = #tpu.dot_dimension_numbers<[1], [0], [0], [1], [0, 0, 1, 1], [], []>} : vector<8x32xbf16>, vector<32x128xbf16>, vector<8x128xf32> -> vector<8x128xf32>
    %120 = arith.addf %97, %119 : vector<8x128xf32>
    %121 = arith.extf %0 : vector<8x128xbf16> to vector<8x128xf32>
    %122 = arith.addf %121, %120 : vector<8x128xf32>
    %123 = vector.broadcast %5 : vector<1x128xf32> to vector<8x128xf32>
    %124 = arith.addf %122, %123 : vector<8x128xf32>
    %cst_34 = arith.constant dense<0.000000e+00> : vector<8xf32>
    %125 = vector.multi_reduction <add>, %124, %cst_34 [1] : vector<8x128xf32> to vector<8xf32>
    %126 = vector.shape_cast %125 : vector<8xf32> to vector<8x1xf32>
    %cst_35 = arith.constant 1.280000e+02 : f32
    %127 = vector.broadcast %cst_35 : f32 to vector<8x1xf32>
    %128 = arith.divf %126, %127 : vector<8x1xf32>
    %129 = vector.broadcast %128 : vector<8x1xf32> to vector<8x128xf32>
    %130 = arith.subf %124, %129 : vector<8x128xf32>
    %131 = arith.mulf %130, %130 : vector<8x128xf32>
    %cst_36 = arith.constant dense<0.000000e+00> : vector<8xf32>
    %132 = vector.multi_reduction <add>, %131, %cst_36 [1] : vector<8x128xf32> to vector<8xf32>
    %133 = vector.shape_cast %132 : vector<8xf32> to vector<8x1xf32>
    %cst_37 = arith.constant 1.280000e+02 : f32
    %134 = vector.broadcast %cst_37 : f32 to vector<8x1xf32>
    %135 = arith.divf %133, %134 : vector<8x1xf32>
    %136 = vector.broadcast %128 : vector<8x1xf32> to vector<8x128xf32>
    %137 = arith.subf %124, %136 : vector<8x128xf32>
    %cst_38 = arith.constant 9.99999996E-13 : f32
    %138 = vector.broadcast %cst_38 : f32 to vector<8x1xf32>
    %139 = arith.addf %135, %138 : vector<8x1xf32>
    %140 = math.rsqrt %139 : vector<8x1xf32>
    %141 = vector.broadcast %140 : vector<8x1xf32> to vector<8x128xf32>
    %142 = arith.mulf %137, %141 : vector<8x128xf32>
    %143 = vector.broadcast %6 : vector<1x128xf32> to vector<8x128xf32>
    %144 = arith.mulf %142, %143 : vector<8x128xf32>
    %145 = vector.broadcast %7 : vector<1x128xf32> to vector<8x128xf32>
    %146 = arith.addf %144, %145 : vector<8x128xf32>
    %147 = arith.truncf %146 : vector<8x128xf32> to vector<8x128xbf16>
    %c0_39 = arith.constant 0 : index
    %c0_40 = arith.constant 0 : index
    %148 = vector.load %arg5[%c0_39, %c0_40] : memref<128x512xbf16, #tpu.memory_space<vmem>>, vector<128x512xbf16>
    %cst_41 = arith.constant dense<0.000000e+00> : vector<8x512xf32>
    %149 = tpu.matmul %147, %148, %cst_41 {dimension_numbers = #tpu.dot_dimension_numbers<[1], [0], [0], [1], [0, 0, 1, 1], [], []>} : vector<8x128xbf16>, vector<128x512xbf16>, vector<8x512xf32> -> vector<8x512xf32>
    %c0_42 = arith.constant 0 : index
    %c0_43 = arith.constant 0 : index
    %150 = vector.load %arg8[%c0_42, %c0_43] : memref<1x512xf32, #tpu.memory_space<vmem>>, vector<1x512xf32>
    %151 = vector.broadcast %150 : vector<1x512xf32> to vector<8x512xf32>
    %152 = arith.addf %149, %151 : vector<8x512xf32>
    %cst_44 = arith.constant 5.000000e-01 : f32
    %153 = vector.broadcast %cst_44 : f32 to vector<8x512xf32>
    %154 = arith.mulf %153, %152 : vector<8x512xf32>
    %cst_45 = arith.constant 4.471500e-02 : f32
    %155 = vector.broadcast %cst_45 : f32 to vector<8x512xf32>
    %156 = arith.mulf %155, %152 : vector<8x512xf32>
    %157 = arith.mulf %156, %152 : vector<8x512xf32>
    %158 = arith.mulf %157, %152 : vector<8x512xf32>
    %159 = arith.addf %152, %158 : vector<8x512xf32>
    %cst_46 = arith.constant 0.797884583 : f32
    %160 = vector.broadcast %cst_46 : f32 to vector<8x512xf32>
    %161 = arith.mulf %160, %159 : vector<8x512xf32>
    %162 = math.tanh %161 : vector<8x512xf32>
    %cst_47 = arith.constant 1.000000e+00 : f32
    %163 = vector.broadcast %cst_47 : f32 to vector<8x512xf32>
    %164 = arith.addf %163, %162 : vector<8x512xf32>
    %165 = arith.mulf %154, %164 : vector<8x512xf32>
    %166 = arith.truncf %165 : vector<8x512xf32> to vector<8x512xbf16>
    %c0_48 = arith.constant 0 : index
    %c0_49 = arith.constant 0 : index
    %167 = vector.load %arg6[%c0_48, %c0_49] : memref<512x128xbf16, #tpu.memory_space<vmem>>, vector<512x128xbf16>
    %cst_50 = arith.constant dense<0.000000e+00> : vector<8x128xf32>
    %168 = tpu.matmul %166, %167, %cst_50 {dimension_numbers = #tpu.dot_dimension_numbers<[1], [0], [0], [1], [0, 0, 1, 1], [], []>} : vector<8x512xbf16>, vector<512x128xbf16>, vector<8x128xf32> -> vector<8x128xf32>
    %169 = vector.broadcast %8 : vector<1x128xf32> to vector<8x128xf32>
    %170 = arith.addf %168, %169 : vector<8x128xf32>
    %171 = arith.addf %170, %146 : vector<8x128xf32>
    %cst_51 = arith.constant dense<0.000000e+00> : vector<8xf32>
    %172 = vector.multi_reduction <add>, %171, %cst_51 [1] : vector<8x128xf32> to vector<8xf32>
    %173 = vector.shape_cast %172 : vector<8xf32> to vector<8x1xf32>
    %cst_52 = arith.constant 1.280000e+02 : f32
    %174 = vector.broadcast %cst_52 : f32 to vector<8x1xf32>
    %175 = arith.divf %173, %174 : vector<8x1xf32>
    %176 = vector.broadcast %175 : vector<8x1xf32> to vector<8x128xf32>
    %177 = arith.subf %171, %176 : vector<8x128xf32>
    %178 = arith.mulf %177, %177 : vector<8x128xf32>
    %cst_53 = arith.constant dense<0.000000e+00> : vector<8xf32>
    %179 = vector.multi_reduction <add>, %178, %cst_53 [1] : vector<8x128xf32> to vector<8xf32>
    %180 = vector.shape_cast %179 : vector<8xf32> to vector<8x1xf32>
    %cst_54 = arith.constant 1.280000e+02 : f32
    %181 = vector.broadcast %cst_54 : f32 to vector<8x1xf32>
    %182 = arith.divf %180, %181 : vector<8x1xf32>
    %183 = vector.broadcast %175 : vector<8x1xf32> to vector<8x128xf32>
    %184 = arith.subf %171, %183 : vector<8x128xf32>
    %cst_55 = arith.constant 9.99999996E-13 : f32
    %185 = vector.broadcast %cst_55 : f32 to vector<8x1xf32>
    %186 = arith.addf %182, %185 : vector<8x1xf32>
    %187 = math.rsqrt %186 : vector<8x1xf32>
    %188 = vector.broadcast %187 : vector<8x1xf32> to vector<8x128xf32>
    %189 = arith.mulf %184, %188 : vector<8x128xf32>
    %190 = vector.broadcast %9 : vector<1x128xf32> to vector<8x128xf32>
    %191 = arith.mulf %189, %190 : vector<8x128xf32>
    %192 = vector.broadcast %10 : vector<1x128xf32> to vector<8x128xf32>
    %193 = arith.addf %191, %192 : vector<8x128xf32>
    %194 = arith.truncf %193 : vector<8x128xf32> to vector<8x128xbf16>
    %c0_56 = arith.constant 0 : index
    %c0_57 = arith.constant 0 : index
    %195 = vector.load %arg9[%c0_56, %c0_57] : memref<8x128xbf16, #tpu.memory_space<vmem>>, vector<8x128xbf16>
    tpu.vector_store %arg9[%c0_56, %c0_57], %194 {strides = array<i32>} : memref<8x128xbf16, #tpu.memory_space<vmem>>, vector<8x128xbf16>,
    return
  }
  func.func @transform_0(%arg0: i32) -> (i32, i32) {
    %c0_i32 = arith.constant 0 : i32
    %c0_i32_0 = arith.constant 0 : i32
    return %arg0, %c0_i32 : i32, i32
  }
  func.func @transform_1(%arg0: i32) -> (i32, i32, i32) {
    %c0_i32 = arith.constant 0 : i32
    %c0_i32_0 = arith.constant 0 : i32
    %c0_i32_1 = arith.constant 0 : i32
    return %arg0, %c0_i32, %c0_i32_0 : i32, i32, i32
  }
  func.func @transform_2(%arg0: i32) -> (i32, i32) {
    %c0_i32 = arith.constant 0 : i32
    %c0_i32_0 = arith.constant 0 : i32
    %c0_i32_1 = arith.constant 0 : i32
    return %c0_i32, %c0_i32_0 : i32, i32
  }
  func.func @transform_3(%arg0: i32) -> (i32, i32) {
    %c0_i32 = arith.constant 0 : i32
    %c0_i32_0 = arith.constant 0 : i32
    %c0_i32_1 = arith.constant 0 : i32
    return %c0_i32, %c0_i32_0 : i32, i32
  }
  func.func @transform_4(%arg0: i32) -> (i32, i32) {
    %c0_i32 = arith.constant 0 : i32
    %c0_i32_0 = arith.constant 0 : i32
    %c0_i32_1 = arith.constant 0 : i32
    return %c0_i32, %c0_i32_0 : i32, i32
  }
  func.func @transform_5(%arg0: i32) -> (i32, i32) {
    %c0_i32 = arith.constant 0 : i32
    %c0_i32_0 = arith.constant 0 : i32
    %c0_i32_1 = arith.constant 0 : i32
    return %c0_i32, %c0_i32_0 : i32, i32
  }
  func.func @transform_6(%arg0: i32) -> (i32, i32) {
    %c0_i32 = arith.constant 0 : i32
    %c0_i32_0 = arith.constant 0 : i32
    %c0_i32_1 = arith.constant 0 : i32
    return %c0_i32, %c0_i32_0 : i32, i32
  }
  func.func @transform_7(%arg0: i32) -> (i32, i32) {
    %c0_i32 = arith.constant 0 : i32
    %c0_i32_0 = arith.constant 0 : i32
    %c0_i32_1 = arith.constant 0 : i32
    return %c0_i32, %c0_i32_0 : i32, i32
  }
  func.func @transform_8(%arg0: i32) -> (i32, i32) {
    %c0_i32 = arith.constant 0 : i32
    %c0_i32_0 = arith.constant 0 : i32
    return %arg0, %c0_i32 : i32, i32
  }
}

</mosaic_0001>

<llo_original>
// kernel: bert_binary_classifier_forward.3
$region0: #{bert_binary_classifier_forward.3}
  #allocation0 [shape = 'u32[]', space=smem, size = 0x4, offset = 0x4, fixed_abs, tag = 'smem constant byte address 0x4 - core index']
  #allocation1 [shape = 'u32[144,128]{1,0:T(1,128)}', space=vmem, size = 0x12000, scoped, tag = 'internal scratch']
  %s0 = inlined_call_operand.vmem [shape: bf16[16,128], index: 0, kind: input, shape index: {}]
  %s1 = inlined_call_operand.vmem [shape: bf16[8,128], index: 1, kind: input, shape index: {}]
  %s2 = inlined_call_operand.vmem [shape: f32[2,128], index: 2, kind: input, shape index: {}]
  %s3 = inlined_call_operand.vmem [shape: bf16[16,128], index: 3, kind: output, shape index: {}]
  %s4 = sld [smem:[#allocation0]]
  $region45: #{bert_binary_classifier_forward.3} parent=0
    _
  %s6 = ssub.s32 1, %s4
  %s7 = scalar_select 0, %s6, %s4
  loop: start=0, step=1, limit=4
  $region2: #{bert_binary_classifier_forward.3} parent=0 // loop_pre_header
    _
  $region3: #{bert_binary_classifier_forward.3} parent=0 // loop_header
    %s9 = sphi 0, %s13
    %p10 = scmp.ge.s32.totalorder %s9, 4
    %s19 = sphi 0, %s21
    %s22 = sphi 0, %s19
    %s23 = sphi 0, %s22
    %s39 = sphi 0, %s23
    %s43 = sphi 0, %s43
    %s45 = sphi 0, %s43
    %s46 = sphi 0, %s45
    %s60 = sphi 0, %s46
    %s64 = sphi 0, %s64
    %s66 = sphi 0, %s64
    %s67 = sphi 0, %s66
    %s81 = sphi 0, %s67
    %s87 = sphi 0, %s89
    %s90 = sphi 0, %s87
    %s91 = sphi 0, %s90
    %s107 = sphi 0, %s91
  $region4: #{bert_binary_classifier_forward.3} parent=0 // loop_header_branch
    %12 = sbr.rel (%p10) target = $region8
  $region5: #{bert_binary_classifier_forward.3} parent=0 // loop_body
    %s14 = ssub.s32 %s9, 1
    %s15 = ssub.s32 %s9, 2
    %s16 = sadd.s32 %s9, 1
    %s17 = ssub.s32 %s9, %s16
    %p18 = scmp.eq.s32.totalorder %s17, 0
    %s20 = sadd.s32 %s19, 1
    %s21 = scalar_select %p18, %s19, %s20
    %p24 = pneg %p18
    %p25 = scmp.eq.s32.totalorder %s9, 1
    %p26 = por %p24, %p25
    %p27 = scmp.ne.s32.totalorder %s19, %s22
    %p28 = scmp.eq.s32.totalorder %s9, 0
    %p29 = por %p27, %p28
    %p30 = scmp.ne.s32.totalorder %s19, %s22
    %p31 = scmp.eq.s32.totalorder %s14, 1
    %p32 = por %p30, %p31
    %p33 = scmp.ne.s32.totalorder %s22, %s23
    %p34 = scmp.eq.s32.totalorder %s14, 0
    %p35 = por %p33, %p34
    %p36 = scmp.ne.s32.totalorder %s22, %s23
    %p37 = scmp.eq.s32.totalorder %s15, 1
    %p38 = por %p36, %p37
    %p40 = scmp.ne.s32.totalorder %s23, %s39
    %p41 = scmp.eq.s32.totalorder %s15, 0
    %p42 = por %p40, %p41
    %s44 = sadd.s32 %s43, 1
    %p47 = scmp.eq.s32.totalorder %s9, 1
    %p48 = scmp.ne.s32.totalorder %s43, %s45
    %p49 = scmp.eq.s32.totalorder %s9, 0
    %p50 = por %p48, %p49
    %p51 = scmp.ne.s32.totalorder %s43, %s45
    %p52 = scmp.eq.s32.totalorder %s14, 1
    %p53 = por %p51, %p52
    %p54 = scmp.ne.s32.totalorder %s45, %s46
    %p55 = scmp.eq.s32.totalorder %s14, 0
    %p56 = por %p54, %p55
    %p57 = scmp.ne.s32.totalorder %s45, %s46
    %p58 = scmp.eq.s32.totalorder %s15, 1
    %p59 = por %p57, %p58
    %p61 = scmp.ne.s32.totalorder %s46, %s60
    %p62 = scmp.eq.s32.totalorder %s15, 0
    %p63 = por %p61, %p62
    %s65 = sadd.s32 %s64, 1
    %p68 = scmp.eq.s32.totalorder %s9, 1
    %p69 = scmp.ne.s32.totalorder %s64, %s66
    %p70 = scmp.eq.s32.totalorder %s9, 0
    %p71 = por %p69, %p70
    %p72 = scmp.ne.s32.totalorder %s64, %s66
    %p73 = scmp.eq.s32.totalorder %s14, 1
    %p74 = por %p72, %p73
    %p75 = scmp.ne.s32.totalorder %s66, %s67
    %p76 = scmp.eq.s32.totalorder %s14, 0
    %p77 = por %p75, %p76
    %p78 = scmp.ne.s32.totalorder %s66, %s67
    %p79 = scmp.eq.s32.totalorder %s15, 1
    %p80 = por %p78, %p79
    %p82 = scmp.ne.s32.totalorder %s67, %s81
    %p83 = scmp.eq.s32.totalorder %s15, 0
    %p84 = por %p82, %p83
    %s85 = ssub.s32 %s9, %s16
    %p86 = scmp.eq.s32.totalorder %s85, 0
    %s88 = sadd.s32 %s87, 1
    %s89 = scalar_select %p86, %s87, %s88
    %p92 = pneg %p86
    %p93 = scmp.eq.s32.totalorder %s9, 1
    %p94 = por %p92, %p93
    %p95 = scmp.ne.s32.totalorder %s87, %s90
    %p96 = scmp.eq.s32.totalorder %s9, 0
    %p97 = por %p95, %p96
    %p98 = scmp.ne.s32.totalorder %s87, %s90
    %p99 = scmp.eq.s32.totalorder %s14, 1
    %p100 = por %p98, %p99
    %p101 = scmp.ne.s32.totalorder %s90, %s91
    %p102 = scmp.eq.s32.totalorder %s14, 0
    %p103 = por %p101, %p102
    %p104 = scmp.ne.s32.totalorder %s90, %s91
    %p105 = scmp.eq.s32.totalorder %s15, 1
    %p106 = por %p104, %p105
    %p108 = scmp.ne.s32.totalorder %s91, %s107
    %p109 = scmp.eq.s32.totalorder %s15, 0
    %p110 = por %p108, %p109
    %p111 = scmp.le.s32.totalorder 1, %s9
    %p112 = scmp.lt.s32.totalorder %s9, 3
    %p113 = pnand %p111, %p112
    %p114 = pneg %p113
    // Predicated region
    $region9: #{bert_binary_classifier_forward.3} parent=5 // pred_check
      _
    $region10: #{bert_binary_classifier_forward.3} parent=5 // pred_check_branch
      %116 = sbr.rel (%p113) target = $region12
    $region11: #{bert_binary_classifier_forward.3} parent=5 // pred_region
      %s117 = ssub.s32 %s9, 1
      // Predicated region
      $region13: #{bert_binary_classifier_forward.3} parent=11 // pred_check
        %p118 = pneg %p56
      $region14: #{bert_binary_classifier_forward.3} parent=11 // pred_check_branch
        %120 = sbr.rel (%p118) target = $region16
      $region15: #{bert_binary_classifier_forward.3} parent=11 // pred_region
        _
      $region16: #{bert_binary_classifier_forward.3} parent=11 // pred_fallthru
        _
      // Predicated region
      $region17: #{bert_binary_classifier_forward.3} parent=11 // pred_check
        %p121 = pneg %p77
      $region18: #{bert_binary_classifier_forward.3} parent=11 // pred_check_branch
        %123 = sbr.rel (%p121) target = $region20
      $region19: #{bert_binary_classifier_forward.3} parent=11 // pred_region
        _
      $region20: #{bert_binary_classifier_forward.3} parent=11 // pred_fallthru
        _
    $region12: #{bert_binary_classifier_forward.3} parent=5 // pred_fallthru
      _
    %p124 = scmp.lt.s32.totalorder %s9, 2
    // Predicated region
    $region21: #{bert_binary_classifier_forward.3} parent=5 // pred_check
      %p125 = pneg %p124
    $region22: #{bert_binary_classifier_forward.3} parent=5 // pred_check_branch
      %127 = sbr.rel (%p125) target = $region24
    $region23: #{bert_binary_classifier_forward.3} parent=5 // pred_region
      // Predicated region
      $region25: #{bert_binary_classifier_forward.3} parent=23 // pred_check
        %p128 = pneg %p29
      $region26: #{bert_binary_classifier_forward.3} parent=23 // pred_check_branch
        %130 = sbr.rel (%p128) target = $region28
      $region27: #{bert_binary_classifier_forward.3} parent=23 // pred_region
        %p131 = scmp.lt.s32.totalorder %s9, 1
        %s132 = scalar_select %p131, %s9, 1
        %s133 = smul.addr %s132, 4
        %s134 = scalar_lea.vmem %s0, %s133
      $region28: #{bert_binary_classifier_forward.3} parent=23 // pred_fallthru
        _
    $region24: #{bert_binary_classifier_forward.3} parent=5 // pred_fallthru
      _
    %p135 = scmp.le.s32.totalorder 1, %s9
    %p136 = scmp.lt.s32.totalorder %s9, 3
    %p137 = pnand %p135, %p136
    %p138 = pneg %p137
    // Predicated region
    $region29: #{bert_binary_classifier_forward.3} parent=5 // pred_check
      _
    $region30: #{bert_binary_classifier_forward.3} parent=5 // pred_check_branch
      %140 = sbr.rel (%p137) target = $region32
    $region31: #{bert_binary_classifier_forward.3} parent=5 // pred_region
      %s141 = ssub.s32 %s9, 1
      %p142 = scmp.lt.s32.totalorder %s14, 1
      %s143 = scalar_select %p142, %s14, 1
      %s144 = smul.addr %s143, 4
      %s145 = scalar_lea.vmem %s0, %s144
      %p146 = pneg %p35
      %p147 = pneg %p32
      %p148 = pneg %p56
      %p149 = pneg %p53
      %p150 = pneg %p77
      %p151 = pneg %p74
      %p152 = pneg %p103
      %p153 = pneg %p100
      %p154 = scmp.lt.s32.totalorder %s14, 1
      %s155 = scalar_select %p154, %s14, 1
      %s156 = smul.addr %s155, 4
      %s157 = scalar_lea.vmem %s3, %s156
      %p158 = scmp.lt.s32.totalorder %s14, 1
      %s159 = scalar_select %p158, %s14, 1
      %s160 = smul.addr %s159, 4
      %s161 = scalar_lea.vmem %s0, %s160
      %p162 = scmp.lt.s32.totalorder %s14, 1
      %s163 = scalar_select %p162, %s14, 1
      %s164 = smul.addr %s163, 4
      %s165 = scalar_lea.vmem %s3, %s164
      %v166 = vld [vmem:[%s161] sm:$0xf]
      %v167 = vunpack.c.l.bf16 %v166
      %v168 = vld [vmem:[%s1] sm:$0xf]
      %v169 = vunpack.c.l.bf16 %v168
      %v170 = vadd.f32 %v167, %v169
      %v171 = vld [vmem:[%s2] sm:$0x1]
      %v172 = vld [vmem:[%s2 + $0x1] sm:$0x1]
      %173 = vadd.xlane.f32.xlu0 %v170
      %v174 = vpop.xlane.xlu0 %173
      %v175 = vrcp.pop 128.0
      %v176 = vmul.f32 %v174, %v175
      %v177 = vsub.f32 %v170, %v176
      %v178 = vmul.f32 %v177, %v177
      %179 = vadd.xlane.f32.xlu0 %v178
      %v180 = vpop.xlane.xlu0 %179
      %v181 = vmul.f32 %v180, %v175
      %v182 = vadd.f32 %v181, 1e-12
      %v183 = vrsqrt.pop %v182
      %v184 = vmul.f32 %v177, %v183
      %v185 = vlaneseq
      %v186 = vshrl.u32 %v185, 7
      %v187 = vsub.s32 0, %v186
      %v188 = vrot.slane %v171, %v187
      %v189 = vmul.f32 %v184, %v188
      %v190 = vlaneseq
      %v191 = vshrl.u32 %v190, 7
      %v192 = vsub.s32 0, %v191
      %v193 = vrot.slane %v172, %v192
      %v194 = vadd.f32 %v189, %v193
      %v195 = vpack.c.bf16 %v194, %v194
      %196 = vst [vmem:[%s165] sm:$0xf] %v195
      %p197 = scmp.lt.s32.totalorder %s14, 1
      %s198 = scalar_select %p197, %s14, 1
      %s199 = smul.addr %s198, 4
      %s200 = scalar_lea.vmem %s3, %s199
      // Predicated region
      $region33: #{bert_binary_classifier_forward.3} parent=31 // pred_check
        %p201 = pneg %p100
      $region34: #{bert_binary_classifier_forward.3} parent=31 // pred_check_branch
        %203 = sbr.rel (%p201) target = $region36
      $region35: #{bert_binary_classifier_forward.3} parent=31 // pred_region
        _
      $region36: #{bert_binary_classifier_forward.3} parent=31 // pred_fallthru
        _
    $region32: #{bert_binary_classifier_forward.3} parent=5 // pred_fallthru
      _
    %p204 = scmp.le.s32.totalorder 2, %s9
    // Predicated region
    $region37: #{bert_binary_classifier_forward.3} parent=5 // pred_check
      %p205 = pneg %p204
    $region38: #{bert_binary_classifier_forward.3} parent=5 // pred_check_branch
      %207 = sbr.rel (%p205) target = $region40
    $region39: #{bert_binary_classifier_forward.3} parent=5 // pred_region
      %s208 = ssub.s32 %s9, 2
      // Predicated region
      $region41: #{bert_binary_classifier_forward.3} parent=39 // pred_check
        %p209 = pneg %p106
      $region42: #{bert_binary_classifier_forward.3} parent=39 // pred_check_branch
        %211 = sbr.rel (%p209) target = $region44
      $region43: #{bert_binary_classifier_forward.3} parent=39 // pred_region
        %p212 = scmp.lt.s32.totalorder %s15, 1
        %s213 = scalar_select %p212, %s15, 1
        %s214 = smul.addr %s213, 4
        %s215 = scalar_lea.vmem %s3, %s214
      $region44: #{bert_binary_classifier_forward.3} parent=39 // pred_fallthru
        _
    $region40: #{bert_binary_classifier_forward.3} parent=5 // pred_fallthru
      _
  $region6: #{bert_binary_classifier_forward.3} parent=0 // loop_footer
    %s13 = sadd.s32 1, %s9
  $region7: #{bert_binary_classifier_forward.3} parent=0 // loop_footer_branch
    %8 = sbr.rel target = $region3
  $region8: #{bert_binary_classifier_forward.3} parent=0 // loop_exit
    _

// kernel: bert_binary_classifier_forward.4
$region0: #{bert_binary_classifier_forward.4}
  #allocation0 [shape = 'u32[]', space=smem, size = 0x4, offset = 0x4, fixed_abs, tag = 'smem constant byte address 0x4 - core index']
  #allocation1 [shape = 'u32[144,128]{1,0:T(1,128)}', space=vmem, size = 0x12000, scoped, tag = 'internal scratch']
  %s0 = inlined_call_operand.vmem [shape: bf16[16,128], index: 0, kind: input, shape index: {}]
  %s1 = inlined_call_operand.vmem [shape: f32[2,1,8], index: 1, kind: input, shape index: {}]
  %s2 = inlined_call_operand.vmem [shape: bf16[128,384], index: 2, kind: input, shape index: {}]
  %s3 = inlined_call_operand.hbm [shape: bf16[128,128], index: 3, kind: input, shape index: {}]
  %s4 = inlined_call_operand.hbm [shape: bf16[128,512], index: 4, kind: input, shape index: {}]
  %s5 = inlined_call_operand.hbm [shape: bf16[512,128], index: 5, kind: input, shape index: {}]
  %s6 = inlined_call_operand.hbm [shape: f32[9,128], index: 6, kind: input, shape index: {}]
  %s7 = inlined_call_operand.vmem [shape: f32[1,512], index: 7, kind: input, shape index: {}]
  %s8 = inlined_call_operand.vmem [shape: bf16[16,128], index: 8, kind: output, shape index: {}]
  %s9 = sld [smem:[#allocation0]]
  $region81: #{bert_binary_classifier_forward.4} parent=0
    _
  %s11 = ssub.s32 1, %s9
  %s12 = scalar_select 0, %s11, %s9
  $region1: #{bert_binary_classifier_forward.4} parent=0
    #allocation2 [shape = 'u8[32768]{0}', space=vmem, size = 0x8000, scoped, tag = 'input window, operand 3, single buffered']
    #allocation3 [shape = 's32[2]{0}', space=sflag, size = 0x8, scoped, tag = 'scoped memory for bert_binary_classifier_forward.4']
    #allocation4 [shape = 'u8[131072]{0}', space=vmem, size = 0x20000, scoped, tag = 'input window, operand 4, single buffered']
    #allocation5 [shape = 's32[1]{0}', space=sflag, size = 0x4, scoped, tag = 'scoped memory for bert_binary_classifier_forward.4']
    #allocation6 [shape = 'u8[131072]{0}', space=vmem, size = 0x20000, scoped, tag = 'input window, operand 5, single buffered']
    #allocation7 [shape = 'u8[8192]{0}', space=vmem, size = 0x2000, scoped, tag = 'input window, operand 6, single buffered']
    #allocation8 [shape = 's32[1]{0}', space=sflag, size = 0x4, scoped, tag = 'scoped memory for bert_binary_classifier_forward.4']
    %13 = vsyncpa [#allocation3], 0
    %14 = vsyncpa [#allocation5], 0
    %15 = vsyncpa [#allocation8], 0
    loop: start=0, step=1, limit=4
    $region2: #{bert_binary_classifier_forward.4} parent=1 // loop_pre_header
      _
    $region3: #{bert_binary_classifier_forward.4} parent=1 // loop_header
      %s17 = sphi 0, %s21
      %p18 = scmp.ge.s32.totalorder %s17, 4
      %s27 = sphi 0, %s29
      %s30 = sphi 0, %s27
      %s31 = sphi 0, %s30
      %s47 = sphi 0, %s31
      %s53 = sphi 0, %s55
      %s56 = sphi 0, %s53
      %s57 = sphi 0, %s56
      %s73 = sphi 0, %s57
      %s77 = sphi 0, %s77
      %s79 = sphi 0, %s77
      %s80 = sphi 0, %s79
      %s94 = sphi 0, %s80
      %s98 = sphi 0, %s98
      %s100 = sphi 0, %s98
      %s101 = sphi 0, %s100
      %s115 = sphi 0, %s101
      %s119 = sphi 0, %s119
      %s121 = sphi 0, %s119
      %s122 = sphi 0, %s121
      %s136 = sphi 0, %s122
      %s140 = sphi 0, %s140
      %s142 = sphi 0, %s140
      %s143 = sphi 0, %s142
      %s157 = sphi 0, %s143
      %s161 = sphi 0, %s161
      %s163 = sphi 0, %s161
      %s164 = sphi 0, %s163
      %s178 = sphi 0, %s164
      %s182 = sphi 0, %s182
      %s184 = sphi 0, %s182
      %s185 = sphi 0, %s184
      %s199 = sphi 0, %s185
      %s205 = sphi 0, %s207
      %s208 = sphi 0, %s205
      %s209 = sphi 0, %s208
      %s225 = sphi 0, %s209
    $region4: #{bert_binary_classifier_forward.4} parent=1 // loop_header_branch
      %20 = sbr.rel (%p18) target = $region8
    $region5: #{bert_binary_classifier_forward.4} parent=1 // loop_body
      %s22 = ssub.s32 %s17, 1
      %s23 = ssub.s32 %s17, 2
      %s24 = sadd.s32 %s17, 1
      %s25 = ssub.s32 %s17, %s24
      %p26 = scmp.eq.s32.totalorder %s25, 0
      %s28 = sadd.s32 %s27, 1
      %s29 = scalar_select %p26, %s27, %s28
      %p32 = pneg %p26
      %p33 = scmp.eq.s32.totalorder %s17, 1
      %p34 = por %p32, %p33
      %p35 = scmp.ne.s32.totalorder %s27, %s30
      %p36 = scmp.eq.s32.totalorder %s17, 0
      %p37 = por %p35, %p36
      %p38 = scmp.ne.s32.totalorder %s27, %s30
      %p39 = scmp.eq.s32.totalorder %s22, 1
      %p40 = por %p38, %p39
      %p41 = scmp.ne.s32.totalorder %s30, %s31
      %p42 = scmp.eq.s32.totalorder %s22, 0
      %p43 = por %p41, %p42
      %p44 = scmp.ne.s32.totalorder %s30, %s31
      %p45 = scmp.eq.s32.totalorder %s23, 1
      %p46 = por %p44, %p45
      %p48 = scmp.ne.s32.totalorder %s31, %s47
      %p49 = scmp.eq.s32.totalorder %s23, 0
      %p50 = por %p48, %p49
      %s51 = ssub.s32 %s17, %s24
      %p52 = scmp.eq.s32.totalorder %s51, 0
      %s54 = sadd.s32 %s53, 1
      %s55 = scalar_select %p52, %s53, %s54
      %p58 = pneg %p52
      %p59 = scmp.eq.s32.totalorder %s17, 1
      %p60 = por %p58, %p59
      %p61 = scmp.ne.s32.totalorder %s53, %s56
      %p62 = scmp.eq.s32.totalorder %s17, 0
      %p63 = por %p61, %p62
      %p64 = scmp.ne.s32.totalorder %s53, %s56
      %p65 = scmp.eq.s32.totalorder %s22, 1
      %p66 = por %p64, %p65
      %p67 = scmp.ne.s32.totalorder %s56, %s57
      %p68 = scmp.eq.s32.totalorder %s22, 0
      %p69 = por %p67, %p68
      %p70 = scmp.ne.s32.totalorder %s56, %s57
      %p71 = scmp.eq.s32.totalorder %s23, 1
      %p72 = por %p70, %p71
      %p74 = scmp.ne.s32.totalorder %s57, %s73
      %p75 = scmp.eq.s32.totalorder %s23, 0
      %p76 = por %p74, %p75
      %s78 = sadd.s32 %s77, 1
      %p81 = scmp.eq.s32.totalorder %s17, 1
      %p82 = scmp.ne.s32.totalorder %s77, %s79
      %p83 = scmp.eq.s32.totalorder %s17, 0
      %p84 = por %p82, %p83
      %p85 = scmp.ne.s32.totalorder %s77, %s79
      %p86 = scmp.eq.s32.totalorder %s22, 1
      %p87 = por %p85, %p86
      %p88 = scmp.ne.s32.totalorder %s79, %s80
      %p89 = scmp.eq.s32.totalorder %s22, 0
      %p90 = por %p88, %p89
      %p91 = scmp.ne.s32.totalorder %s79, %s80
      %p92 = scmp.eq.s32.totalorder %s23, 1
      %p93 = por %p91, %p92
      %p95 = scmp.ne.s32.totalorder %s80, %s94
      %p96 = scmp.eq.s32.totalorder %s23, 0
      %p97 = por %p95, %p96
      %s99 = sadd.s32 %s98, 1
      %p102 = scmp.eq.s32.totalorder %s17, 1
      %p103 = scmp.ne.s32.totalorder %s98, %s100
      %p104 = scmp.eq.s32.totalorder %s17, 0
      %p105 = por %p103, %p104
      %p106 = scmp.ne.s32.totalorder %s98, %s100
      %p107 = scmp.eq.s32.totalorder %s22, 1
      %p108 = por %p106, %p107
      %p109 = scmp.ne.s32.totalorder %s100, %s101
      %p110 = scmp.eq.s32.totalorder %s22, 0
      %p111 = por %p109, %p110
      %p112 = scmp.ne.s32.totalorder %s100, %s101
      %p113 = scmp.eq.s32.totalorder %s23, 1
      %p114 = por %p112, %p113
      %p116 = scmp.ne.s32.totalorder %s101, %s115
      %p117 = scmp.eq.s32.totalorder %s23, 0
      %p118 = por %p116, %p117
      %s120 = sadd.s32 %s119, 1
      %p123 = scmp.eq.s32.totalorder %s17, 1
      %p124 = scmp.ne.s32.totalorder %s119, %s121
      %p125 = scmp.eq.s32.totalorder %s17, 0
      %p126 = por %p124, %p125
      %p127 = scmp.ne.s32.totalorder %s119, %s121
      %p128 = scmp.eq.s32.totalorder %s22, 1
      %p129 = por %p127, %p128
      %p130 = scmp.ne.s32.totalorder %s121, %s122
      %p131 = scmp.eq.s32.totalorder %s22, 0
      %p132 = por %p130, %p131
      %p133 = scmp.ne.s32.totalorder %s121, %s122
      %p134 = scmp.eq.s32.totalorder %s23, 1
      %p135 = por %p133, %p134
      %p137 = scmp.ne.s32.totalorder %s122, %s136
      %p138 = scmp.eq.s32.totalorder %s23, 0
      %p139 = por %p137, %p138
      %s141 = sadd.s32 %s140, 1
      %p144 = scmp.eq.s32.totalorder %s17, 1
      %p145 = scmp.ne.s32.totalorder %s140, %s142
      %p146 = scmp.eq.s32.totalorder %s17, 0
      %p147 = por %p145, %p146
      %p148 = scmp.ne.s32.totalorder %s140, %s142
      %p149 = scmp.eq.s32.totalorder %s22, 1
      %p150 = por %p148, %p149
      %p151 = scmp.ne.s32.totalorder %s142, %s143
      %p152 = scmp.eq.s32.totalorder %s22, 0
      %p153 = por %p151, %p152
      %p154 = scmp.ne.s32.totalorder %s142, %s143
      %p155 = scmp.eq.s32.totalorder %s23, 1
      %p156 = por %p154, %p155
      %p158 = scmp.ne.s32.totalorder %s143, %s157
      %p159 = scmp.eq.s32.totalorder %s23, 0
      %p160 = por %p158, %p159
      %s162 = sadd.s32 %s161, 1
      %p165 = scmp.eq.s32.totalorder %s17, 1
      %p166 = scmp.ne.s32.totalorder %s161, %s163
      %p167 = scmp.eq.s32.totalorder %s17, 0
      %p168 = por %p166, %p167
      %p169 = scmp.ne.s32.totalorder %s161, %s163
      %p170 = scmp.eq.s32.totalorder %s22, 1
      %p171 = por %p169, %p170
      %p172 = scmp.ne.s32.totalorder %s163, %s164
      %p173 = scmp.eq.s32.totalorder %s22, 0
      %p174 = por %p172, %p173
      %p175 = scmp.ne.s32.totalorder %s163, %s164
      %p176 = scmp.eq.s32.totalorder %s23, 1
      %p177 = por %p175, %p176
      %p179 = scmp.ne.s32.totalorder %s164, %s178
      %p180 = scmp.eq.s32.totalorder %s23, 0
      %p181 = por %p179, %p180
      %s183 = sadd.s32 %s182, 1
      %p186 = scmp.eq.s32.totalorder %s17, 1
      %p187 = scmp.ne.s32.totalorder %s182, %s184
      %p188 = scmp.eq.s32.totalorder %s17, 0
      %p189 = por %p187, %p188
      %p190 = scmp.ne.s32.totalorder %s182, %s184
      %p191 = scmp.eq.s32.totalorder %s22, 1
      %p192 = por %p190, %p191
      %p193 = scmp.ne.s32.totalorder %s184, %s185
      %p194 = scmp.eq.s32.totalorder %s22, 0
      %p195 = por %p193, %p194
      %p196 = scmp.ne.s32.totalorder %s184, %s185
      %p197 = scmp.eq.s32.totalorder %s23, 1
      %p198 = por %p196, %p197
      %p200 = scmp.ne.s32.totalorder %s185, %s199
      %p201 = scmp.eq.s32.totalorder %s23, 0
      %p202 = por %p200, %p201
      %s203 = ssub.s32 %s17, %s24
      %p204 = scmp.eq.s32.totalorder %s203, 0
      %s206 = sadd.s32 %s205, 1
      %s207 = scalar_select %p204, %s205, %s206
      %p210 = pneg %p204
      %p211 = scmp.eq.s32.totalorder %s17, 1
      %p212 = por %p210, %p211
      %p213 = scmp.ne.s32.totalorder %s205, %s208
      %p214 = scmp.eq.s32.totalorder %s17, 0
      %p215 = por %p213, %p214
      %p216 = scmp.ne.s32.totalorder %s205, %s208
      %p217 = scmp.eq.s32.totalorder %s22, 1
      %p218 = por %p216, %p217
      %p219 = scmp.ne.s32.totalorder %s208, %s209
      %p220 = scmp.eq.s32.totalorder %s22, 0
      %p221 = por %p219, %p220
      %p222 = scmp.ne.s32.totalorder %s208, %s209
      %p223 = scmp.eq.s32.totalorder %s23, 1
      %p224 = por %p222, %p223
      %p226 = scmp.ne.s32.totalorder %s209, %s225
      %p227 = scmp.eq.s32.totalorder %s23, 0
      %p228 = por %p226, %p227
      %p229 = scmp.le.s32.totalorder 1, %s17
      %p230 = scmp.lt.s32.totalorder %s17, 3
      %p231 = pnand %p229, %p230
      %p232 = pneg %p231
      // Predicated region
      $region9: #{bert_binary_classifier_forward.4} parent=5 // pred_check
        _
      $region10: #{bert_binary_classifier_forward.4} parent=5 // pred_check_branch
        %234 = sbr.rel (%p231) target = $region12
      $region11: #{bert_binary_classifier_forward.4} parent=5 // pred_region
        %s235 = ssub.s32 %s17, 1
        // Predicated region
        $region13: #{bert_binary_classifier_forward.4} parent=11 // pred_check
          %p236 = pneg %p90
        $region14: #{bert_binary_classifier_forward.4} parent=11 // pred_check_branch
          %238 = sbr.rel (%p236) target = $region16
        $region15: #{bert_binary_classifier_forward.4} parent=11 // pred_region
          _
        $region16: #{bert_binary_classifier_forward.4} parent=11 // pred_fallthru
          _
        // Predicated region
        $region17: #{bert_binary_classifier_forward.4} parent=11 // pred_check
          %p239 = pneg %p111
        $region18: #{bert_binary_classifier_forward.4} parent=11 // pred_check_branch
          %241 = sbr.rel (%p239) target = $region20
        $region19: #{bert_binary_classifier_forward.4} parent=11 // pred_region
          %s243 = ssub.s32 1024, 1024
          %244 = vsyncadd [#allocation3], %s243
          %s245 = sshll.u32 [#allocation2], 4
          %s246 = int_to_ptr.vmem [resolvable:$true] %s245
          %251 = dma.hbm_to_vmem [thread:$0]  %s3, 1024, %s246, [#allocation3], 64, 64, 4
        $region20: #{bert_binary_classifier_forward.4} parent=11 // pred_fallthru
          _
        // Predicated region
        $region21: #{bert_binary_classifier_forward.4} parent=11 // pred_check
          %p252 = pneg %p132
        $region22: #{bert_binary_classifier_forward.4} parent=11 // pred_check_branch
          %254 = sbr.rel (%p252) target = $region24
        $region23: #{bert_binary_classifier_forward.4} parent=11 // pred_region
          %s256 = ssub.s32 4096, 4096
          %257 = vsyncadd [#allocation5], %s256
          %s258 = sshll.u32 [#allocation4], 4
          %s259 = int_to_ptr.vmem [resolvable:$true] %s258
          %264 = dma.hbm_to_vmem [thread:$0]  %s4, 4096, %s259, [#allocation5], 256, 256, 16
        $region24: #{bert_binary_classifier_forward.4} parent=11 // pred_fallthru
          _
        // Predicated region
        $region25: #{bert_binary_classifier_forward.4} parent=11 // pred_check
          %p265 = pneg %p153
        $region26: #{bert_binary_classifier_forward.4} parent=11 // pred_check_branch
          %267 = sbr.rel (%p265) target = $region28
        $region27: #{bert_binary_classifier_forward.4} parent=11 // pred_region
          %s269 = ssub.s32 4096, 4096
          %270 = vsyncadd [#allocation5], %s269
          %s271 = sshll.u32 [#allocation6], 4
          %s272 = int_to_ptr.vmem [resolvable:$true] %s271
          %277 = dma.hbm_to_vmem [thread:$0]  %s5, 4096, %s272, [#allocation5], 64, 64, 4
        $region28: #{bert_binary_classifier_forward.4} parent=11 // pred_fallthru
          _
        // Predicated region
        $region29: #{bert_binary_classifier_forward.4} parent=11 // pred_check
          %p278 = pneg %p174
        $region30: #{bert_binary_classifier_forward.4} parent=11 // pred_check_branch
          %280 = sbr.rel (%p278) target = $region32
        $region31: #{bert_binary_classifier_forward.4} parent=11 // pred_region
          %s282 = ssub.s32 256, 256
          %283 = vsyncadd [#allocation8], %s282
          %s284 = sshll.u32 [#allocation7], 4
          %s285 = int_to_ptr.vmem [resolvable:$true] %s284
          %290 = dma.hbm_to_vmem [thread:$0]  %s6, 256, %s285, [#allocation8], 128, 128, 8
        $region32: #{bert_binary_classifier_forward.4} parent=11 // pred_fallthru
          _
        // Predicated region
        $region33: #{bert_binary_classifier_forward.4} parent=11 // pred_check
          %p291 = pneg %p195
        $region34: #{bert_binary_classifier_forward.4} parent=11 // pred_check_branch
          %293 = sbr.rel (%p291) target = $region36
        $region35: #{bert_binary_classifier_forward.4} parent=11 // pred_region
          _
        $region36: #{bert_binary_classifier_forward.4} parent=11 // pred_fallthru
          _
      $region12: #{bert_binary_classifier_forward.4} parent=5 // pred_fallthru
        _
      %p294 = scmp.lt.s32.totalorder %s17, 2
      // Predicated region
      $region37: #{bert_binary_classifier_forward.4} parent=5 // pred_check
        %p295 = pneg %p294
      $region38: #{bert_binary_classifier_forward.4} parent=5 // pred_check_branch
        %297 = sbr.rel (%p295) target = $region40
      $region39: #{bert_binary_classifier_forward.4} parent=5 // pred_region
        // Predicated region
        $region41: #{bert_binary_classifier_forward.4} parent=39 // pred_check
          %p298 = pneg %p37
        $region42: #{bert_binary_classifier_forward.4} parent=39 // pred_check_branch
          %300 = sbr.rel (%p298) target = $region44
        $region43: #{bert_binary_classifier_forward.4} parent=39 // pred_region
          %p301 = scmp.lt.s32.totalorder %s17, 1
          %s302 = scalar_select %p301, %s17, 1
          %s303 = smul.addr %s302, 4
          %s304 = scalar_lea.vmem %s0, %s303
        $region44: #{bert_binary_classifier_forward.4} parent=39 // pred_fallthru
          _
        // Predicated region
        $region45: #{bert_binary_classifier_forward.4} parent=39 // pred_check
          %p305 = pneg %p63
        $region46: #{bert_binary_classifier_forward.4} parent=39 // pred_check_branch
          %307 = sbr.rel (%p305) target = $region48
        $region47: #{bert_binary_classifier_forward.4} parent=39 // pred_region
          %p308 = scmp.lt.s32.totalorder %s17, 1
          %s309 = scalar_select %p308, %s17, 1
          %s310 = scalar_lea.vmem %s1, %s309
        $region48: #{bert_binary_classifier_forward.4} parent=39 // pred_fallthru
          _
      $region40: #{bert_binary_classifier_forward.4} parent=5 // pred_fallthru
        _
      %p311 = scmp.le.s32.totalorder 1, %s17
      %p312 = scmp.lt.s32.totalorder %s17, 3
      %p313 = pnand %p311, %p312
      %p314 = pneg %p313
      // Predicated region
      $region49: #{bert_binary_classifier_forward.4} parent=5 // pred_check
        _
      $region50: #{bert_binary_classifier_forward.4} parent=5 // pred_check_branch
        %316 = sbr.rel (%p313) target = $region52
      $region51: #{bert_binary_classifier_forward.4} parent=5 // pred_region
        %s317 = ssub.s32 %s17, 1
        // Predicated region
        $region53: #{bert_binary_classifier_forward.4} parent=51 // pred_check
          %p318 = pneg %p111
        $region54: #{bert_binary_classifier_forward.4} parent=51 // pred_check_branch
          %320 = sbr.rel (%p318) target = $region56
        $region55: #{bert_binary_classifier_forward.4} parent=51 // pred_region
          %321 = dma.done [#allocation3], 1024
        $region56: #{bert_binary_classifier_forward.4} parent=51 // pred_fallthru
          _
        // Predicated region
        $region57: #{bert_binary_classifier_forward.4} parent=51 // pred_check
          %p322 = pneg %p132
        $region58: #{bert_binary_classifier_forward.4} parent=51 // pred_check_branch
          %324 = sbr.rel (%p322) target = $region60
        $region59: #{bert_binary_classifier_forward.4} parent=51 // pred_region
          %325 = dma.done [#allocation5], 4096
        $region60: #{bert_binary_classifier_forward.4} parent=51 // pred_fallthru
          _
        // Predicated region
        $region61: #{bert_binary_classifier_forward.4} parent=51 // pred_check
          %p326 = pneg %p153
        $region62: #{bert_binary_classifier_forward.4} parent=51 // pred_check_branch
          %328 = sbr.rel (%p326) target = $region64
        $region63: #{bert_binary_classifier_forward.4} parent=51 // pred_region
          %329 = dma.done [#allocation5], 4096
        $region64: #{bert_binary_classifier_forward.4} parent=51 // pred_fallthru
          _
        // Predicated region
        $region65: #{bert_binary_classifier_forward.4} parent=51 // pred_check
          %p330 = pneg %p174
        $region66: #{bert_binary_classifier_forward.4} parent=51 // pred_check_branch
          %332 = sbr.rel (%p330) target = $region68
        $region67: #{bert_binary_classifier_forward.4} parent=51 // pred_region
          %333 = dma.done [#allocation8], 256
        $region68: #{bert_binary_classifier_forward.4} parent=51 // pred_fallthru
          _
        %p334 = scmp.lt.s32.totalorder %s22, 1
        %s335 = scalar_select %p334, %s22, 1
        %s336 = smul.addr %s335, 4
        %s337 = scalar_lea.vmem %s0, %s336
        %p338 = pneg %p43
        %p339 = pneg %p40
        %p340 = scmp.lt.s32.totalorder %s22, 1
        %s341 = scalar_select %p340, %s22, 1
        %s342 = scalar_lea.vmem %s1, %s341
        %p343 = pneg %p69
        %p344 = pneg %p66
        %p345 = pneg %p90
        %p346 = pneg %p87
        %p347 = pneg %p111
        %p348 = pneg %p108
        %p349 = pneg %p132
        %p350 = pneg %p129
        %p351 = pneg %p153
        %p352 = pneg %p150
        %p353 = pneg %p174
        %p354 = pneg %p171
        %p355 = pneg %p195
        %p356 = pneg %p192
        %p357 = pneg %p221
        %p358 = pneg %p218
        %p359 = scmp.lt.s32.totalorder %s22, 1
        %s360 = scalar_select %p359, %s22, 1
        %s361 = smul.addr %s360, 4
        %s362 = scalar_lea.vmem %s8, %s361
        %p363 = scmp.lt.s32.totalorder %s22, 1
        %s364 = scalar_select %p363, %s22, 1
        %s365 = smul.addr %s364, 4
        %s366 = scalar_lea.vmem %s0, %s365
        %p367 = scmp.lt.s32.totalorder %s22, 1
        %s368 = scalar_select %p367, %s22, 1
        %s369 = scalar_lea.vmem %s1, %s368
        %p370 = scmp.lt.s32.totalorder %s22, 1
        %s371 = scalar_select %p370, %s22, 1
        %s372 = smul.addr %s371, 4
        %s373 = scalar_lea.vmem %s8, %s372
        %v375 = vld [vmem:[%s366] sm:$0xf]
        %v376 = vld [vmem:[#allocation7] sm:$0xff]
        %v377 = vld [vmem:[#allocation7 + $0x8] sm:$0x1]
        %v378 = vld [vmem:[%s2] sm:$0xff]
        %v379 = vld [vmem:[%s2 + $0x8] sm:$0xf]
        %v380 = vld [vmem:[%s2 + $0xc] sm:$0xff]
        %v381 = vld [vmem:[%s2 + $0x14] sm:$0xf]
        %v382 = vld [vmem:[%s2 + $0x18] sm:$0xff]
        %v383 = vld [vmem:[%s2 + $0x20] sm:$0xf]
        %v384 = vld [vmem:[%s2 + $0x24] sm:$0xff]
        %v385 = vld [vmem:[%s2 + $0x2c] sm:$0xf]
        %v386 = vld [vmem:[%s2 + $0x30] sm:$0xff]
        %v387 = vld [vmem:[%s2 + $0x38] sm:$0xf]
        %v388 = vld [vmem:[%s2 + $0x3c] sm:$0xff]
        %v389 = vld [vmem:[%s2 + $0x44] sm:$0xf]
        %v390 = vld [vmem:[%s2 + $0x48] sm:$0xff]
        %v391 = vld [vmem:[%s2 + $0x50] sm:$0xf]
        %v392 = vld [vmem:[%s2 + $0x54] sm:$0xff]
        %v393 = vld [vmem:[%s2 + $0x5c] sm:$0xf]
        %v394 = vld [vmem:[%s2 + $0x60] sm:$0xff]
        %v395 = vld [vmem:[%s2 + $0x68] sm:$0xf]
        %v396 = vld [vmem:[%s2 + $0x6c] sm:$0xff]
        %v397 = vld [vmem:[%s2 + $0x74] sm:$0xf]
        %v398 = vld [vmem:[%s2 + $0x78] sm:$0xff]
        %v399 = vld [vmem:[%s2 + $0x80] sm:$0xf]
        %v400 = vld [vmem:[%s2 + $0x84] sm:$0xff]
        %v401 = vld [vmem:[%s2 + $0x8c] sm:$0xf]
        %v402 = vld [vmem:[%s2 + $0x90] sm:$0xff]
        %v403 = vld [vmem:[%s2 + $0x98] sm:$0xf]
        %v404 = vld [vmem:[%s2 + $0x9c] sm:$0xff]
        %v405 = vld [vmem:[%s2 + $0xa4] sm:$0xf]
        %v406 = vld [vmem:[%s2 + $0xa8] sm:$0xff]
        %v407 = vld [vmem:[%s2 + $0xb0] sm:$0xf]
        %v408 = vld [vmem:[%s2 + $0xb4] sm:$0xff]
        %v409 = vld [vmem:[%s2 + $0xbc] sm:$0xf]
        %v442 = vunpack.c.l.b16 %v378
        %v443 = vunpack.c.h.b16 %v378
        %v444 = vunpack.c.l.b16 %v379
        %v445 = vunpack.c.l.b16 %v380
        %v446 = vunpack.c.h.b16 %v380
        %v447 = vunpack.c.l.b16 %v381
        %v448 = vunpack.c.l.b16 %v382
        %v449 = vunpack.c.h.b16 %v382
        %v450 = vunpack.c.l.b16 %v383
        %v451 = vunpack.c.l.b16 %v384
        %v452 = vunpack.c.h.b16 %v384
        %v453 = vunpack.c.l.b16 %v385
        %v454 = vunpack.c.l.b16 %v386
        %v455 = vunpack.c.h.b16 %v386
        %v456 = vunpack.c.l.b16 %v387
        %v457 = vunpack.c.l.b16 %v388
        %v458 = vunpack.c.h.b16 %v388
        %v459 = vunpack.c.l.b16 %v389
        %v460 = vunpack.c.l.b16 %v390
        %v461 = vunpack.c.h.b16 %v390
        %v462 = vunpack.c.l.b16 %v391
        %v463 = vunpack.c.l.b16 %v392
        %v464 = vunpack.c.h.b16 %v392
        %v465 = vunpack.c.l.b16 %v393
        %v466 = vunpack.c.l.b16 %v394
        %v467 = vunpack.c.h.b16 %v394
        %v468 = vunpack.c.l.b16 %v395
        %v469 = vunpack.c.l.b16 %v396
        %v470 = vunpack.c.h.b16 %v396
        %v471 = vunpack.c.l.b16 %v397
        %v472 = vunpack.c.l.b16 %v398
        %v473 = vunpack.c.h.b16 %v398
        %v474 = vunpack.c.l.b16 %v399
        %v475 = vunpack.c.l.b16 %v400
        %v476 = vunpack.c.h.b16 %v400
        %v477 = vunpack.c.l.b16 %v401
        %v478 = vunpack.c.l.b16 %v402
        %v479 = vunpack.c.h.b16 %v402
        %v480 = vunpack.c.l.b16 %v403
        %v481 = vunpack.c.l.b16 %v404
        %v482 = vunpack.c.h.b16 %v404
        %v483 = vunpack.c.l.b16 %v405
        %v484 = vunpack.c.l.b16 %v406
        %v485 = vunpack.c.h.b16 %v406
        %v486 = vunpack.c.l.b16 %v407
        %v487 = vunpack.c.l.b16 %v408
        %v488 = vunpack.c.h.b16 %v408
        %v489 = vunpack.c.l.b16 %v409
        %v490 = vpack.c.b16 %v445, %v442
        %v491 = vpack.c.b16 %v446, %v443
        %v492 = vpack.c.b16 %v447, %v444
        %v493 = vpack.c.b16 %v451, %v448
        %v494 = vpack.c.b16 %v452, %v449
        %v495 = vpack.c.b16 %v453, %v450
        %v496 = vpack.c.b16 %v457, %v454
        %v497 = vpack.c.b16 %v458, %v455
        %v498 = vpack.c.b16 %v459, %v456
        %v499 = vpack.c.b16 %v463, %v460
        %v500 = vpack.c.b16 %v464, %v461
        %v501 = vpack.c.b16 %v465, %v462
        %v502 = vpack.c.b16 %v469, %v466
        %v503 = vpack.c.b16 %v470, %v467
        %v504 = vpack.c.b16 %v471, %v468
        %v505 = vpack.c.b16 %v475, %v472
        %v506 = vpack.c.b16 %v476, %v473
        %v507 = vpack.c.b16 %v477, %v474
        %v508 = vpack.c.b16 %v481, %v478
        %v509 = vpack.c.b16 %v482, %v479
        %v510 = vpack.c.b16 %v483, %v480
        %v511 = vpack.c.b16 %v487, %v484
        %v512 = vpack.c.b16 %v488, %v485
        %v513 = vpack.c.b16 %v489, %v486
        %538 = vmatprep.subr.bf16.mxu0 %v491
        %539 = vmatpush1.bf16.msra.mxu0 %v490
        %540 = vmatprep.subr.bf16.mxu0 %v494
        %541 = vmatpush1.bf16.msra.mxu0 %v493
        %542 = vmatprep.subr.bf16.mxu0 %v497
        %543 = vmatpush1.bf16.msra.mxu0 %v496
        %544 = vmatprep.subr.bf16.mxu0 %v500
        %545 = vmatpush1.bf16.msra.mxu0 %v499
        %546 = vmatprep.subr.bf16.mxu0 %v503
        %547 = vmatpush1.bf16.msra.mxu0 %v502
        %548 = vmatprep.subr.bf16.mxu0 %v506
        %549 = vmatpush1.bf16.msra.mxu0 %v505
        %550 = vmatprep.subr.bf16.mxu0 %v509
        %551 = vmatpush1.bf16.msra.mxu0 %v508
        %552 = vmatprep.subr.bf16.mxu0 %v512
        %553 = vmatpush1.bf16.msra.mxu0 %v511
        %554 = vmatprep.subr.bf16.mxu0 0
        %555 = vmatpush1.bf16.msra.mxu0 0
        %556 = vmatprep.subr.bf16.mxu0 0
        %557 = vmatpush1.bf16.msra.mxu0 0
        %558 = vmatprep.subr.bf16.mxu0 0
        %559 = vmatpush1.bf16.msra.mxu0 0
        %560 = vmatprep.subr.bf16.mxu0 0
        %561 = vmatpush1.bf16.msra.mxu0 0
        %562 = vmatprep.subr.bf16.mxu0 0
        %563 = vmatpush1.bf16.msra.mxu0 0
        %564 = vmatprep.subr.bf16.mxu0 0
        %565 = vmatpush1.bf16.msra.mxu0 0
        %566 = vmatprep.subr.bf16.mxu0 0
        %567 = vmatpush1.bf16.msra.mxu0 0
        %568 = vmatprep.subr.bf16.mxu0 0
        %569 = vmatpush1.bf16.msra.mxu0 0
        %570 = vmatprep.mubr.bf16.mxu0 0
        %571 = vmatmul.mubr.bf16.gmra.mrb[0].mxu0 %v375
        %v572 = vpop.f32.mrb[0].mxu0
        %v573 = vadd.f32 0.0, %v572
        %v574 = vpop.f32.mrb[0].mxu0
        %v575 = vadd.f32 0.0, %v574
        %v576 = vpop.f32.mrb[0].mxu0
        %v577 = vpop.f32.mrb[0].mxu0
        %578 = vdwg.mxu0
        %579 = vmatprep.subr.bf16.mxu0 0
        %580 = vmatpush1.bf16.msra.mxu0 %v492
        %581 = vmatprep.subr.bf16.mxu0 0
        %582 = vmatpush1.bf16.msra.mxu0 %v495
        %583 = vmatprep.subr.bf16.mxu0 0
        %584 = vmatpush1.bf16.msra.mxu0 %v498
        %585 = vmatprep.subr.bf16.mxu0 0
        %586 = vmatpush1.bf16.msra.mxu0 %v501
        %587 = vmatprep.subr.bf16.mxu0 0
        %588 = vmatpush1.bf16.msra.mxu0 %v504
        %589 = vmatprep.subr.bf16.mxu0 0
        %590 = vmatpush1.bf16.msra.mxu0 %v507
        %591 = vmatprep.subr.bf16.mxu0 0
        %592 = vmatpush1.bf16.msra.mxu0 %v510
        %593 = vmatprep.subr.bf16.mxu0 0
        %594 = vmatpush1.bf16.msra.mxu0 %v513
        %595 = vmatprep.subr.bf16.mxu0 0
        %596 = vmatpush1.bf16.msra.mxu0 0
        %597 = vmatprep.subr.bf16.mxu0 0
        %598 = vmatpush1.bf16.msra.mxu0 0
        %599 = vmatprep.subr.bf16.mxu0 0
        %600 = vmatpush1.bf16.msra.mxu0 0
        %601 = vmatprep.subr.bf16.mxu0 0
        %602 = vmatpush1.bf16.msra.mxu0 0
        %603 = vmatprep.subr.bf16.mxu0 0
        %604 = vmatpush1.bf16.msra.mxu0 0
        %605 = vmatprep.subr.bf16.mxu0 0
        %606 = vmatpush1.bf16.msra.mxu0 0
        %607 = vmatprep.subr.bf16.mxu0 0
        %608 = vmatpush1.bf16.msra.mxu0 0
        %609 = vmatprep.subr.bf16.mxu0 0
        %610 = vmatpush1.bf16.msra.mxu0 0
        %611 = vmatprep.mubr.bf16.mxu0 0
        %612 = vmatmul.mubr.bf16.gmra.mrb[0].mxu0 %v375
        %v613 = vpop.f32.mrb[0].mxu0
        %v614 = vadd.f32 0.0, %v613
        %v615 = vpop.f32.mrb[0].mxu0
        %v616 = vpop.f32.mrb[0].mxu0
        %v617 = vpop.f32.mrb[0].mxu0
        %618 = vdwg.mxu0
        %v619 = vlaneseq
        %v620 = vshrl.u32 %v619, 7
        %v621 = vsub.s32 0, %v620
        %v622 = vrot.slane %v376, %v621
        %v623 = vadd.f32 %v573, %v622
        %v624 = vpack.c.bf16 %v623, %v623
        %v625 = vlaneseq
        %v626 = vshrl.u32 %v625, 7
        %v627 = vsub.s32 1, %v626
        %v628 = vrot.slane %v376, %v627
        %v629 = vadd.f32 %v575, %v628
        %v630 = vpack.c.bf16 %v629, %v629
        %v631 = vlaneseq
        %v632 = vshrl.u32 %v631, 7
        %v633 = vsub.s32 2, %v632
        %v634 = vrot.slane %v376, %v633
        %v635 = vadd.f32 %v614, %v634
        %v636 = vpack.c.bf16 %v635, %v635
        %v637 = vld [vmem:[%s369] sm:$0x1]
        %v639 = vlaneseq
        %v640 = vshrl.u32 %v639, 7
        %v641 = vsub.s32 0, %v640
        %v642 = vrot.slane %v637, %v641
        %v644 = vld [vmem:[#allocation2] sm:$0xf]
        %v645 = vld [vmem:[#allocation2 + $0x4] sm:$0xf]
        %v646 = vld [vmem:[#allocation2 + $0x8] sm:$0xf]
        %v647 = vld [vmem:[#allocation2 + $0xc] sm:$0xf]
        %v648 = vld [vmem:[#allocation2 + $0x10] sm:$0xf]
        %v649 = vld [vmem:[#allocation2 + $0x14] sm:$0xf]
        %v650 = vld [vmem:[#allocation2 + $0x18] sm:$0xf]
        %v651 = vld [vmem:[#allocation2 + $0x1c] sm:$0xf]
        %v652 = vld [vmem:[#allocation2 + $0x20] sm:$0xf]
        %v653 = vld [vmem:[#allocation2 + $0x24] sm:$0xf]
        %v654 = vld [vmem:[#allocation2 + $0x28] sm:$0xf]
        %v655 = vld [vmem:[#allocation2 + $0x2c] sm:$0xf]
        %v656 = vld [vmem:[#allocation2 + $0x30] sm:$0xf]
        %v657 = vld [vmem:[#allocation2 + $0x34] sm:$0xf]
        %v658 = vld [vmem:[#allocation2 + $0x38] sm:$0xf]
        %v659 = vld [vmem:[#allocation2 + $0x3c] sm:$0xf]
        %vm660 = vcmask 261120
        %v662 = vsel %vm660, %v624, 0
        %v665 = vsel %vm660, %v630, 0
        %667 = vmatprep.subr.bf16.mxu0 0
        %668 = vmatpush1.bf16.xpose.msra.mxu0 %v665
        %669 = vmatprep.subr.bf16.mxu0 0
        %670 = vmatpush1.bf16.xpose.msra.mxu0 0
        %671 = vmatprep.subr.bf16.mxu0 0
        %672 = vmatpush1.bf16.xpose.msra.mxu0 0
        %673 = vmatprep.subr.bf16.mxu0 0
        %674 = vmatpush1.bf16.xpose.msra.mxu0 0
        %675 = vmatprep.subr.bf16.mxu0 0
        %676 = vmatpush1.bf16.xpose.msra.mxu0 0
        %677 = vmatprep.subr.bf16.mxu0 0
        %678 = vmatpush1.bf16.xpose.msra.mxu0 0
        %679 = vmatprep.subr.bf16.mxu0 0
        %680 = vmatpush1.bf16.xpose.msra.mxu0 0
        %681 = vmatprep.subr.bf16.mxu0 0
        %682 = vmatpush1.bf16.xpose.msra.mxu0 0
        %683 = vmatprep.subr.bf16.mxu0 0
        %684 = vmatpush1.bf16.xpose.msra.mxu0 0
        %685 = vmatprep.subr.bf16.mxu0 0
        %686 = vmatpush1.bf16.xpose.msra.mxu0 0
        %687 = vmatprep.subr.bf16.mxu0 0
        %688 = vmatpush1.bf16.xpose.msra.mxu0 0
        %689 = vmatprep.subr.bf16.mxu0 0
        %690 = vmatpush1.bf16.xpose.msra.mxu0 0
        %691 = vmatprep.subr.bf16.mxu0 0
        %692 = vmatpush1.bf16.xpose.msra.mxu0 0
        %693 = vmatprep.subr.bf16.mxu0 0
        %694 = vmatpush1.bf16.xpose.msra.mxu0 0
        %695 = vmatprep.subr.bf16.mxu0 0
        %696 = vmatpush1.bf16.xpose.msra.mxu0 0
        %697 = vmatprep.subr.bf16.mxu0 0
        %698 = vmatpush1.bf16.xpose.msra.mxu0 0
        %699 = vmatprep.mubr.bf16.mxu0 0
        %700 = vmatmul.mubr.bf16.gmra.mrb[0].mxu0 %v662
        %v701 = vpop.f32.mrb[0].mxu0
        %v702 = vadd.f32 0.0, %v701
        %v703 = vpop.f32.mrb[0].mxu0
        %v704 = vpop.f32.mrb[0].mxu0
        %v705 = vpop.f32.mrb[0].mxu0
        %706 = vdwg.mxu0
        %v707 = vmul.f32 %v702, 0.17677669
        %v708 = vadd.f32 %v707, %v642
        %vm709 = vcmask 64512
        %v710 = vsel %vm709, %v708, -inf
        %711 = vmax.xlane.f32.xlu0 %v710
        %v712 = vpop.xlane.xlu0 %711
        %v713 = vsub.f32 %v708, %v712
        %v714 = vmul.f32 %v713, 1.442695
        %v715 = vpow.pop %v714
        %v716 = vsel %vm709, %v715, 0.0
        %717 = vadd.xlane.f32.xlu0 %v716
        %v718 = vpop.xlane.xlu0 %717
        %v719 = vrcp.pop %v718
        %v720 = vmul.f32 %v715, %v719
        %v721 = vpack.c.bf16 %v720, %v720
        %v723 = vsel %vm709, %v721, 0
        %vm725 = vcmask 1043456
        %v727 = vsel %vm725, %v636, 0
        %729 = vmatprep.subr.bf16.mxu0 0
        %730 = vmatpush1.bf16.msra.mxu0 %v727
        %731 = vmatprep.subr.bf16.mxu0 0
        %732 = vmatpush1.bf16.msra.mxu0 0
        %733 = vmatprep.subr.bf16.mxu0 0
        %734 = vmatpush1.bf16.msra.mxu0 0
        %735 = vmatprep.subr.bf16.mxu0 0
        %736 = vmatpush1.bf16.msra.mxu0 0
        %737 = vmatprep.subr.bf16.mxu0 0
        %738 = vmatpush1.bf16.msra.mxu0 0
        %739 = vmatprep.subr.bf16.mxu0 0
        %740 = vmatpush1.bf16.msra.mxu0 0
        %741 = vmatprep.subr.bf16.mxu0 0
        %742 = vmatpush1.bf16.msra.mxu0 0
        %743 = vmatprep.subr.bf16.mxu0 0
        %744 = vmatpush1.bf16.msra.mxu0 0
        %745 = vmatprep.subr.bf16.mxu0 0
        %746 = vmatpush1.bf16.msra.mxu0 0
        %747 = vmatprep.subr.bf16.mxu0 0
        %748 = vmatpush1.bf16.msra.mxu0 0
        %749 = vmatprep.subr.bf16.mxu0 0
        %750 = vmatpush1.bf16.msra.mxu0 0
        %751 = vmatprep.subr.bf16.mxu0 0
        %752 = vmatpush1.bf16.msra.mxu0 0
        %753 = vmatprep.subr.bf16.mxu0 0
        %754 = vmatpush1.bf16.msra.mxu0 0
        %755 = vmatprep.subr.bf16.mxu0 0
        %756 = vmatpush1.bf16.msra.mxu0 0
        %757 = vmatprep.subr.bf16.mxu0 0
        %758 = vmatpush1.bf16.msra.mxu0 0
        %759 = vmatprep.subr.bf16.mxu0 0
        %760 = vmatpush1.bf16.msra.mxu0 0
        %761 = vmatprep.mubr.bf16.mxu0 0
        %762 = vmatmul.mubr.bf16.gmra.mrb[0].mxu0 %v723
        %v763 = vpop.f32.mrb[0].mxu0
        %v764 = vadd.f32 0.0, %v763
        %v765 = vpop.f32.mrb[0].mxu0
        %v766 = vpop.f32.mrb[0].mxu0
        %v767 = vpop.f32.mrb[0].mxu0
        %768 = vdwg.mxu0
        %v769 = vpack.c.bf16 %v764, %v764
        %771 = vrot.lane.b32.xlu0 %v624, 96
        %v772 = vpop.permute.xlu0 %771
        %774 = vrot.lane.b32.xlu0 %v630, 96
        %v775 = vpop.permute.xlu0 %774
        %v777 = vsel %vm660, %v772, 0
        %v780 = vsel %vm660, %v775, 0
        %782 = vmatprep.subr.bf16.mxu0 0
        %783 = vmatpush1.bf16.xpose.msra.mxu0 %v780
        %784 = vmatprep.subr.bf16.mxu0 0
        %785 = vmatpush1.bf16.xpose.msra.mxu0 0
        %786 = vmatprep.subr.bf16.mxu0 0
        %787 = vmatpush1.bf16.xpose.msra.mxu0 0
        %788 = vmatprep.subr.bf16.mxu0 0
        %789 = vmatpush1.bf16.xpose.msra.mxu0 0
        %790 = vmatprep.subr.bf16.mxu0 0
        %791 = vmatpush1.bf16.xpose.msra.mxu0 0
        %792 = vmatprep.subr.bf16.mxu0 0
        %793 = vmatpush1.bf16.xpose.msra.mxu0 0
        %794 = vmatprep.subr.bf16.mxu0 0
        %795 = vmatpush1.bf16.xpose.msra.mxu0 0
        %796 = vmatprep.subr.bf16.mxu0 0
        %797 = vmatpush1.bf16.xpose.msra.mxu0 0
        %798 = vmatprep.subr.bf16.mxu0 0
        %799 = vmatpush1.bf16.xpose.msra.mxu0 0
        %800 = vmatprep.subr.bf16.mxu0 0
        %801 = vmatpush1.bf16.xpose.msra.mxu0 0
        %802 = vmatprep.subr.bf16.mxu0 0
        %803 = vmatpush1.bf16.xpose.msra.mxu0 0
        %804 = vmatprep.subr.bf16.mxu0 0
        %805 = vmatpush1.bf16.xpose.msra.mxu0 0
        %806 = vmatprep.subr.bf16.mxu0 0
        %807 = vmatpush1.bf16.xpose.msra.mxu0 0
        %808 = vmatprep.subr.bf16.mxu0 0
        %809 = vmatpush1.bf16.xpose.msra.mxu0 0
        %810 = vmatprep.subr.bf16.mxu0 0
        %811 = vmatpush1.bf16.xpose.msra.mxu0 0
        %812 = vmatprep.subr.bf16.mxu0 0
        %813 = vmatpush1.bf16.xpose.msra.mxu0 0
        %814 = vmatprep.mubr.bf16.mxu0 0
        %815 = vmatmul.mubr.bf16.gmra.mrb[0].mxu0 %v777
        %v816 = vpop.f32.mrb[0].mxu0
        %v817 = vadd.f32 0.0, %v816
        %v818 = vpop.f32.mrb[0].mxu0
        %v819 = vpop.f32.mrb[0].mxu0
        %v820 = vpop.f32.mrb[0].mxu0
        %821 = vdwg.mxu0
        %v822 = vmul.f32 %v817, 0.17677669
        %v823 = vadd.f32 %v822, %v642
        %v824 = vsel %vm709, %v823, -inf
        %825 = vmax.xlane.f32.xlu0 %v824
        %v826 = vpop.xlane.xlu0 %825
        %v827 = vsub.f32 %v823, %v826
        %v828 = vmul.f32 %v827, 1.442695
        %v829 = vpow.pop %v828
        %v830 = vsel %vm709, %v829, 0.0
        %831 = vadd.xlane.f32.xlu0 %v830
        %v832 = vpop.xlane.xlu0 %831
        %v833 = vrcp.pop %v832
        %v834 = vmul.f32 %v829, %v833
        %v835 = vpack.c.bf16 %v834, %v834
        %837 = vrot.lane.b32.xlu0 %v636, 96
        %v838 = vpop.permute.xlu0 %837
        %v840 = vsel %vm709, %v835, 0
        %v843 = vsel %vm725, %v838, 0
        %845 = vmatprep.subr.bf16.mxu0 0
        %846 = vmatpush1.bf16.msra.mxu0 %v843
        %847 = vmatprep.subr.bf16.mxu0 0
        %848 = vmatpush1.bf16.msra.mxu0 0
        %849 = vmatprep.subr.bf16.mxu0 0
        %850 = vmatpush1.bf16.msra.mxu0 0
        %851 = vmatprep.subr.bf16.mxu0 0
        %852 = vmatpush1.bf16.msra.mxu0 0
        %853 = vmatprep.subr.bf16.mxu0 0
        %854 = vmatpush1.bf16.msra.mxu0 0
        %855 = vmatprep.subr.bf16.mxu0 0
        %856 = vmatpush1.bf16.msra.mxu0 0
        %857 = vmatprep.subr.bf16.mxu0 0
        %858 = vmatpush1.bf16.msra.mxu0 0
        %859 = vmatprep.subr.bf16.mxu0 0
        %860 = vmatpush1.bf16.msra.mxu0 0
        %861 = vmatprep.subr.bf16.mxu0 0
        %862 = vmatpush1.bf16.msra.mxu0 0
        %863 = vmatprep.subr.bf16.mxu0 0
        %864 = vmatpush1.bf16.msra.mxu0 0
        %865 = vmatprep.subr.bf16.mxu0 0
        %866 = vmatpush1.bf16.msra.mxu0 0
        %867 = vmatprep.subr.bf16.mxu0 0
        %868 = vmatpush1.bf16.msra.mxu0 0
        %869 = vmatprep.subr.bf16.mxu0 0
        %870 = vmatpush1.bf16.msra.mxu0 0
        %871 = vmatprep.subr.bf16.mxu0 0
        %872 = vmatpush1.bf16.msra.mxu0 0
        %873 = vmatprep.subr.bf16.mxu0 0
        %874 = vmatpush1.bf16.msra.mxu0 0
        %875 = vmatprep.subr.bf16.mxu0 0
        %876 = vmatpush1.bf16.msra.mxu0 0
        %877 = vmatprep.mubr.bf16.mxu0 0
        %878 = vmatmul.mubr.bf16.gmra.mrb[0].mxu0 %v840
        %v879 = vpop.f32.mrb[0].mxu0
        %v880 = vadd.f32 0.0, %v879
        %v881 = vpop.f32.mrb[0].mxu0
        %v882 = vpop.f32.mrb[0].mxu0
        %v883 = vpop.f32.mrb[0].mxu0
        %884 = vdwg.mxu0
        %v885 = vpack.c.bf16 %v880, %v880
        %v890 = vunpack.c.l.b16 %v648
        %v891 = vunpack.c.l.b16 %v649
        %v892 = vunpack.c.l.b16 %v650
        %v893 = vunpack.c.l.b16 %v651
        %v894 = vpack.c.b16 %v891, %v890
        %v895 = vpack.c.b16 %v893, %v892
        %v899 = vsel %vm660, %v885, 0
        %901 = vmatprep.subr.bf16.mxu0 0
        %902 = vmatpush1.bf16.msra.mxu0 %v894
        %903 = vmatprep.subr.bf16.mxu0 0
        %904 = vmatpush1.bf16.msra.mxu0 %v895
        %905 = vmatprep.subr.bf16.mxu0 0
        %906 = vmatpush1.bf16.msra.mxu0 0
        %907 = vmatprep.subr.bf16.mxu0 0
        %908 = vmatpush1.bf16.msra.mxu0 0
        %909 = vmatprep.subr.bf16.mxu0 0
        %910 = vmatpush1.bf16.msra.mxu0 0
        %911 = vmatprep.subr.bf16.mxu0 0
        %912 = vmatpush1.bf16.msra.mxu0 0
        %913 = vmatprep.subr.bf16.mxu0 0
        %914 = vmatpush1.bf16.msra.mxu0 0
        %915 = vmatprep.subr.bf16.mxu0 0
        %916 = vmatpush1.bf16.msra.mxu0 0
        %917 = vmatprep.subr.bf16.mxu0 0
        %918 = vmatpush1.bf16.msra.mxu0 0
        %919 = vmatprep.subr.bf16.mxu0 0
        %920 = vmatpush1.bf16.msra.mxu0 0
        %921 = vmatprep.subr.bf16.mxu0 0
        %922 = vmatpush1.bf16.msra.mxu0 0
        %923 = vmatprep.subr.bf16.mxu0 0
        %924 = vmatpush1.bf16.msra.mxu0 0
        %925 = vmatprep.subr.bf16.mxu0 0
        %926 = vmatpush1.bf16.msra.mxu0 0
        %927 = vmatprep.subr.bf16.mxu0 0
        %928 = vmatpush1.bf16.msra.mxu0 0
        %929 = vmatprep.subr.bf16.mxu0 0
        %930 = vmatpush1.bf16.msra.mxu0 0
        %931 = vmatprep.subr.bf16.mxu0 0
        %932 = vmatpush1.bf16.msra.mxu0 0
        %933 = vmatprep.mubr.bf16.mxu0 0
        %934 = vmatmul.mubr.bf16.gmra.mrb[0].mxu0 %v899
        %v935 = vpop.f32.mrb[0].mxu0
        %v936 = vadd.f32 0.0, %v935
        %v937 = vpop.f32.mrb[0].mxu0
        %v938 = vpop.f32.mrb[0].mxu0
        %v939 = vpop.f32.mrb[0].mxu0
        %940 = vdwg.mxu0
        %v945 = vunpack.c.l.b16 %v644
        %v946 = vunpack.c.l.b16 %v645
        %v947 = vunpack.c.l.b16 %v646
        %v948 = vunpack.c.l.b16 %v647
        %v949 = vpack.c.b16 %v946, %v945
        %v950 = vpack.c.b16 %v948, %v947
        %v954 = vsel %vm660, %v769, 0
        %956 = vmatprep.subr.bf16.mxu0 0
        %957 = vmatpush1.bf16.msra.mxu0 %v949
        %958 = vmatprep.subr.bf16.mxu0 0
        %959 = vmatpush1.bf16.msra.mxu0 %v950
        %960 = vmatprep.subr.bf16.mxu0 0
        %961 = vmatpush1.bf16.msra.mxu0 0
        %962 = vmatprep.subr.bf16.mxu0 0
        %963 = vmatpush1.bf16.msra.mxu0 0
        %964 = vmatprep.subr.bf16.mxu0 0
        %965 = vmatpush1.bf16.msra.mxu0 0
        %966 = vmatprep.subr.bf16.mxu0 0
        %967 = vmatpush1.bf16.msra.mxu0 0
        %968 = vmatprep.subr.bf16.mxu0 0
        %969 = vmatpush1.bf16.msra.mxu0 0
        %970 = vmatprep.subr.bf16.mxu0 0
        %971 = vmatpush1.bf16.msra.mxu0 0
        %972 = vmatprep.subr.bf16.mxu0 0
        %973 = vmatpush1.bf16.msra.mxu0 0
        %974 = vmatprep.subr.bf16.mxu0 0
        %975 = vmatpush1.bf16.msra.mxu0 0
        %976 = vmatprep.subr.bf16.mxu0 0
        %977 = vmatpush1.bf16.msra.mxu0 0
        %978 = vmatprep.subr.bf16.mxu0 0
        %979 = vmatpush1.bf16.msra.mxu0 0
        %980 = vmatprep.subr.bf16.mxu0 0
        %981 = vmatpush1.bf16.msra.mxu0 0
        %982 = vmatprep.subr.bf16.mxu0 0
        %983 = vmatpush1.bf16.msra.mxu0 0
        %984 = vmatprep.subr.bf16.mxu0 0
        %985 = vmatpush1.bf16.msra.mxu0 0
        %986 = vmatprep.subr.bf16.mxu0 0
        %987 = vmatpush1.bf16.msra.mxu0 0
        %988 = vmatprep.mubr.bf16.mxu0 0
        %989 = vmatmul.mubr.bf16.gmra.mrb[0].mxu0 %v954
        %v990 = vpop.f32.mrb[0].mxu0
        %v991 = vadd.f32 %v936, %v990
        %v992 = vpop.f32.mrb[0].mxu0
        %v993 = vpop.f32.mrb[0].mxu0
        %v994 = vpop.f32.mrb[0].mxu0
        %995 = vdwg.mxu0
        %996 = vrot.lane.b32.xlu0 %v624, 64
        %v997 = vpop.permute.xlu0 %996
        %998 = vrot.lane.b32.xlu0 %v630, 64
        %v999 = vpop.permute.xlu0 %998
        %v1001 = vsel %vm660, %v997, 0
        %v1004 = vsel %vm660, %v999, 0
        %1006 = vmatprep.subr.bf16.mxu0 0
        %1007 = vmatpush1.bf16.xpose.msra.mxu0 %v1004
        %1008 = vmatprep.subr.bf16.mxu0 0
        %1009 = vmatpush1.bf16.xpose.msra.mxu0 0
        %1010 = vmatprep.subr.bf16.mxu0 0
        %1011 = vmatpush1.bf16.xpose.msra.mxu0 0
        %1012 = vmatprep.subr.bf16.mxu0 0
        %1013 = vmatpush1.bf16.xpose.msra.mxu0 0
        %1014 = vmatprep.subr.bf16.mxu0 0
        %1015 = vmatpush1.bf16.xpose.msra.mxu0 0
        %1016 = vmatprep.subr.bf16.mxu0 0
        %1017 = vmatpush1.bf16.xpose.msra.mxu0 0
        %1018 = vmatprep.subr.bf16.mxu0 0
        %1019 = vmatpush1.bf16.xpose.msra.mxu0 0
        %1020 = vmatprep.subr.bf16.mxu0 0
        %1021 = vmatpush1.bf16.xpose.msra.mxu0 0
        %1022 = vmatprep.subr.bf16.mxu0 0
        %1023 = vmatpush1.bf16.xpose.msra.mxu0 0
        %1024 = vmatprep.subr.bf16.mxu0 0
        %1025 = vmatpush1.bf16.xpose.msra.mxu0 0
        %1026 = vmatprep.subr.bf16.mxu0 0
        %1027 = vmatpush1.bf16.xpose.msra.mxu0 0
        %1028 = vmatprep.subr.bf16.mxu0 0
        %1029 = vmatpush1.bf16.xpose.msra.mxu0 0
        %1030 = vmatprep.subr.bf16.mxu0 0
        %1031 = vmatpush1.bf16.xpose.msra.mxu0 0
        %1032 = vmatprep.subr.bf16.mxu0 0
        %1033 = vmatpush1.bf16.xpose.msra.mxu0 0
        %1034 = vmatprep.subr.bf16.mxu0 0
        %1035 = vmatpush1.bf16.xpose.msra.mxu0 0
        %1036 = vmatprep.subr.bf16.mxu0 0
        %1037 = vmatpush1.bf16.xpose.msra.mxu0 0
        %1038 = vmatprep.mubr.bf16.mxu0 0
        %1039 = vmatmul.mubr.bf16.gmra.mrb[0].mxu0 %v1001
        %v1040 = vpop.f32.mrb[0].mxu0
        %v1041 = vadd.f32 0.0, %v1040
        %v1042 = vpop.f32.mrb[0].mxu0
        %v1043 = vpop.f32.mrb[0].mxu0
        %v1044 = vpop.f32.mrb[0].mxu0
        %1045 = vdwg.mxu0
        %v1046 = vmul.f32 %v1041, 0.17677669
        %v1047 = vadd.f32 %v1046, %v642
        %v1048 = vsel %vm709, %v1047, -inf
        %1049 = vmax.xlane.f32.xlu0 %v1048
        %v1050 = vpop.xlane.xlu0 %1049
        %v1051 = vsub.f32 %v1047, %v1050
        %v1052 = vmul.f32 %v1051, 1.442695
        %v1053 = vpow.pop %v1052
        %v1054 = vsel %vm709, %v1053, 0.0
        %1055 = vadd.xlane.f32.xlu0 %v1054
        %v1056 = vpop.xlane.xlu0 %1055
        %v1057 = vrcp.pop %v1056
        %v1058 = vmul.f32 %v1053, %v1057
        %v1059 = vpack.c.bf16 %v1058, %v1058
        %1060 = vrot.lane.b32.xlu0 %v636, 64
        %v1061 = vpop.permute.xlu0 %1060
        %v1063 = vsel %vm709, %v1059, 0
        %v1066 = vsel %vm725, %v1061, 0
        %1068 = vmatprep.subr.bf16.mxu0 0
        %1069 = vmatpush1.bf16.msra.mxu0 %v1066
        %1070 = vmatprep.subr.bf16.mxu0 0
        %1071 = vmatpush1.bf16.msra.mxu0 0
        %1072 = vmatprep.subr.bf16.mxu0 0
        %1073 = vmatpush1.bf16.msra.mxu0 0
        %1074 = vmatprep.subr.bf16.mxu0 0
        %1075 = vmatpush1.bf16.msra.mxu0 0
        %1076 = vmatprep.subr.bf16.mxu0 0
        %1077 = vmatpush1.bf16.msra.mxu0 0
        %1078 = vmatprep.subr.bf16.mxu0 0
        %1079 = vmatpush1.bf16.msra.mxu0 0
        %1080 = vmatprep.subr.bf16.mxu0 0
        %1081 = vmatpush1.bf16.msra.mxu0 0
        %1082 = vmatprep.subr.bf16.mxu0 0
        %1083 = vmatpush1.bf16.msra.mxu0 0
        %1084 = vmatprep.subr.bf16.mxu0 0
        %1085 = vmatpush1.bf16.msra.mxu0 0
        %1086 = vmatprep.subr.bf16.mxu0 0
        %1087 = vmatpush1.bf16.msra.mxu0 0
        %1088 = vmatprep.subr.bf16.mxu0 0
        %1089 = vmatpush1.bf16.msra.mxu0 0
        %1090 = vmatprep.subr.bf16.mxu0 0
        %1091 = vmatpush1.bf16.msra.mxu0 0
        %1092 = vmatprep.subr.bf16.mxu0 0
        %1093 = vmatpush1.bf16.msra.mxu0 0
        %1094 = vmatprep.subr.bf16.mxu0 0
        %1095 = vmatpush1.bf16.msra.mxu0 0
        %1096 = vmatprep.subr.bf16.mxu0 0
        %1097 = vmatpush1.bf16.msra.mxu0 0
        %1098 = vmatprep.subr.bf16.mxu0 0
        %1099 = vmatpush1.bf16.msra.mxu0 0
        %1100 = vmatprep.mubr.bf16.mxu0 0
        %1101 = vmatmul.mubr.bf16.gmra.mrb[0].mxu0 %v1063
        %v1102 = vpop.f32.mrb[0].mxu0
        %v1103 = vadd.f32 0.0, %v1102
        %v1104 = vpop.f32.mrb[0].mxu0
        %v1105 = vpop.f32.mrb[0].mxu0
        %v1106 = vpop.f32.mrb[0].mxu0
        %1107 = vdwg.mxu0
        %v1108 = vpack.c.bf16 %v1103, %v1103
        %v1113 = vunpack.c.l.b16 %v652
        %v1114 = vunpack.c.l.b16 %v653
        %v1115 = vunpack.c.l.b16 %v654
        %v1116 = vunpack.c.l.b16 %v655
        %v1117 = vpack.c.b16 %v1114, %v1113
        %v1118 = vpack.c.b16 %v1116, %v1115
        %v1122 = vsel %vm660, %v1108, 0
        %1124 = vmatprep.subr.bf16.mxu0 0
        %1125 = vmatpush1.bf16.msra.mxu0 %v1117
        %1126 = vmatprep.subr.bf16.mxu0 0
        %1127 = vmatpush1.bf16.msra.mxu0 %v1118
        %1128 = vmatprep.subr.bf16.mxu0 0
        %1129 = vmatpush1.bf16.msra.mxu0 0
        %1130 = vmatprep.subr.bf16.mxu0 0
        %1131 = vmatpush1.bf16.msra.mxu0 0
        %1132 = vmatprep.subr.bf16.mxu0 0
        %1133 = vmatpush1.bf16.msra.mxu0 0
        %1134 = vmatprep.subr.bf16.mxu0 0
        %1135 = vmatpush1.bf16.msra.mxu0 0
        %1136 = vmatprep.subr.bf16.mxu0 0
        %1137 = vmatpush1.bf16.msra.mxu0 0
        %1138 = vmatprep.subr.bf16.mxu0 0
        %1139 = vmatpush1.bf16.msra.mxu0 0
        %1140 = vmatprep.subr.bf16.mxu0 0
        %1141 = vmatpush1.bf16.msra.mxu0 0
        %1142 = vmatprep.subr.bf16.mxu0 0
        %1143 = vmatpush1.bf16.msra.mxu0 0
        %1144 = vmatprep.subr.bf16.mxu0 0
        %1145 = vmatpush1.bf16.msra.mxu0 0
        %1146 = vmatprep.subr.bf16.mxu0 0
        %1147 = vmatpush1.bf16.msra.mxu0 0
        %1148 = vmatprep.subr.bf16.mxu0 0
        %1149 = vmatpush1.bf16.msra.mxu0 0
        %1150 = vmatprep.subr.bf16.mxu0 0
        %1151 = vmatpush1.bf16.msra.mxu0 0
        %1152 = vmatprep.subr.bf16.mxu0 0
        %1153 = vmatpush1.bf16.msra.mxu0 0
        %1154 = vmatprep.subr.bf16.mxu0 0
        %1155 = vmatpush1.bf16.msra.mxu0 0
        %1156 = vmatprep.mubr.bf16.mxu0 0
        %1157 = vmatmul.mubr.bf16.gmra.mrb[0].mxu0 %v1122
        %v1158 = vpop.f32.mrb[0].mxu0
        %v1159 = vadd.f32 0.0, %v1158
        %v1160 = vpop.f32.mrb[0].mxu0
        %v1161 = vpop.f32.mrb[0].mxu0
        %v1162 = vpop.f32.mrb[0].mxu0
        %1163 = vdwg.mxu0
        %v1164 = vadd.f32 %v991, %v1159
        %1165 = vrot.lane.b32.xlu0 %v624, 32
        %v1166 = vpop.permute.xlu0 %1165
        %1167 = vrot.lane.b32.xlu0 %v630, 32
        %v1168 = vpop.permute.xlu0 %1167
        %v1170 = vsel %vm660, %v1166, 0
        %v1173 = vsel %vm660, %v1168, 0
        %1175 = vmatprep.subr.bf16.mxu0 0
        %1176 = vmatpush1.bf16.xpose.msra.mxu0 %v1173
        %1177 = vmatprep.subr.bf16.mxu0 0
        %1178 = vmatpush1.bf16.xpose.msra.mxu0 0
        %1179 = vmatprep.subr.bf16.mxu0 0
        %1180 = vmatpush1.bf16.xpose.msra.mxu0 0
        %1181 = vmatprep.subr.bf16.mxu0 0
        %1182 = vmatpush1.bf16.xpose.msra.mxu0 0
        %1183 = vmatprep.subr.bf16.mxu0 0
        %1184 = vmatpush1.bf16.xpose.msra.mxu0 0
        %1185 = vmatprep.subr.bf16.mxu0 0
        %1186 = vmatpush1.bf16.xpose.msra.mxu0 0
        %1187 = vmatprep.subr.bf16.mxu0 0
        %1188 = vmatpush1.bf16.xpose.msra.mxu0 0
        %1189 = vmatprep.subr.bf16.mxu0 0
        %1190 = vmatpush1.bf16.xpose.msra.mxu0 0
        %1191 = vmatprep.subr.bf16.mxu0 0
        %1192 = vmatpush1.bf16.xpose.msra.mxu0 0
        %1193 = vmatprep.subr.bf16.mxu0 0
        %1194 = vmatpush1.bf16.xpose.msra.mxu0 0
        %1195 = vmatprep.subr.bf16.mxu0 0
        %1196 = vmatpush1.bf16.xpose.msra.mxu0 0
        %1197 = vmatprep.subr.bf16.mxu0 0
        %1198 = vmatpush1.bf16.xpose.msra.mxu0 0
        %1199 = vmatprep.subr.bf16.mxu0 0
        %1200 = vmatpush1.bf16.xpose.msra.mxu0 0
        %1201 = vmatprep.subr.bf16.mxu0 0
        %1202 = vmatpush1.bf16.xpose.msra.mxu0 0
        %1203 = vmatprep.subr.bf16.mxu0 0
        %1204 = vmatpush1.bf16.xpose.msra.mxu0 0
        %1205 = vmatprep.subr.bf16.mxu0 0
        %1206 = vmatpush1.bf16.xpose.msra.mxu0 0
        %1207 = vmatprep.mubr.bf16.mxu0 0
        %1208 = vmatmul.mubr.bf16.gmra.mrb[0].mxu0 %v1170
        %v1209 = vpop.f32.mrb[0].mxu0
        %v1210 = vadd.f32 0.0, %v1209
        %v1211 = vpop.f32.mrb[0].mxu0
        %v1212 = vpop.f32.mrb[0].mxu0
        %v1213 = vpop.f32.mrb[0].mxu0
        %1214 = vdwg.mxu0
        %v1215 = vmul.f32 %v1210, 0.17677669
        %v1216 = vadd.f32 %v1215, %v642
        %v1217 = vsel %vm709, %v1216, -inf
        %1218 = vmax.xlane.f32.xlu0 %v1217
        %v1219 = vpop.xlane.xlu0 %1218
        %v1220 = vsub.f32 %v1216, %v1219
        %v1221 = vmul.f32 %v1220, 1.442695
        %v1222 = vpow.pop %v1221
        %v1223 = vsel %vm709, %v1222, 0.0
        %1224 = vadd.xlane.f32.xlu0 %v1223
        %v1225 = vpop.xlane.xlu0 %1224
        %v1226 = vrcp.pop %v1225
        %v1227 = vmul.f32 %v1222, %v1226
        %v1228 = vpack.c.bf16 %v1227, %v1227
        %1229 = vrot.lane.b32.xlu0 %v636, 32
        %v1230 = vpop.permute.xlu0 %1229
        %v1232 = vsel %vm709, %v1228, 0
        %v1235 = vsel %vm725, %v1230, 0
        %1237 = vmatprep.subr.bf16.mxu0 0
        %1238 = vmatpush1.bf16.msra.mxu0 %v1235
        %1239 = vmatprep.subr.bf16.mxu0 0
        %1240 = vmatpush1.bf16.msra.mxu0 0
        %1241 = vmatprep.subr.bf16.mxu0 0
        %1242 = vmatpush1.bf16.msra.mxu0 0
        %1243 = vmatprep.subr.bf16.mxu0 0
        %1244 = vmatpush1.bf16.msra.mxu0 0
        %1245 = vmatprep.subr.bf16.mxu0 0
        %1246 = vmatpush1.bf16.msra.mxu0 0
        %1247 = vmatprep.subr.bf16.mxu0 0
        %1248 = vmatpush1.bf16.msra.mxu0 0
        %1249 = vmatprep.subr.bf16.mxu0 0
        %1250 = vmatpush1.bf16.msra.mxu0 0
        %1251 = vmatprep.subr.bf16.mxu0 0
        %1252 = vmatpush1.bf16.msra.mxu0 0
        %1253 = vmatprep.subr.bf16.mxu0 0
        %1254 = vmatpush1.bf16.msra.mxu0 0
        %1255 = vmatprep.subr.bf16.mxu0 0
        %1256 = vmatpush1.bf16.msra.mxu0 0
        %1257 = vmatprep.subr.bf16.mxu0 0
        %1258 = vmatpush1.bf16.msra.mxu0 0
        %1259 = vmatprep.subr.bf16.mxu0 0
        %1260 = vmatpush1.bf16.msra.mxu0 0
        %1261 = vmatprep.subr.bf16.mxu0 0
        %1262 = vmatpush1.bf16.msra.mxu0 0
        %1263 = vmatprep.subr.bf16.mxu0 0
        %1264 = vmatpush1.bf16.msra.mxu0 0
        %1265 = vmatprep.subr.bf16.mxu0 0
        %1266 = vmatpush1.bf16.msra.mxu0 0
        %1267 = vmatprep.subr.bf16.mxu0 0
        %1268 = vmatpush1.bf16.msra.mxu0 0
        %1269 = vmatprep.mubr.bf16.mxu0 0
        %1270 = vmatmul.mubr.bf16.gmra.mrb[0].mxu0 %v1232
        %v1271 = vpop.f32.mrb[0].mxu0
        %v1272 = vadd.f32 0.0, %v1271
        %v1273 = vpop.f32.mrb[0].mxu0
        %v1274 = vpop.f32.mrb[0].mxu0
        %v1275 = vpop.f32.mrb[0].mxu0
        %1276 = vdwg.mxu0
        %v1277 = vpack.c.bf16 %v1272, %v1272
        %v1282 = vunpack.c.l.b16 %v656
        %v1283 = vunpack.c.l.b16 %v657
        %v1284 = vunpack.c.l.b16 %v658
        %v1285 = vunpack.c.l.b16 %v659
        %v1286 = vpack.c.b16 %v1283, %v1282
        %v1287 = vpack.c.b16 %v1285, %v1284
        %v1291 = vsel %vm660, %v1277, 0
        %1293 = vmatprep.subr.bf16.mxu0 0
        %1294 = vmatpush1.bf16.msra.mxu0 %v1286
        %1295 = vmatprep.subr.bf16.mxu0 0
        %1296 = vmatpush1.bf16.msra.mxu0 %v1287
        %1297 = vmatprep.subr.bf16.mxu0 0
        %1298 = vmatpush1.bf16.msra.mxu0 0
        %1299 = vmatprep.subr.bf16.mxu0 0
        %1300 = vmatpush1.bf16.msra.mxu0 0
        %1301 = vmatprep.subr.bf16.mxu0 0
        %1302 = vmatpush1.bf16.msra.mxu0 0
        %1303 = vmatprep.subr.bf16.mxu0 0
        %1304 = vmatpush1.bf16.msra.mxu0 0
        %1305 = vmatprep.subr.bf16.mxu0 0
        %1306 = vmatpush1.bf16.msra.mxu0 0
        %1307 = vmatprep.subr.bf16.mxu0 0
        %1308 = vmatpush1.bf16.msra.mxu0 0
        %1309 = vmatprep.subr.bf16.mxu0 0
        %1310 = vmatpush1.bf16.msra.mxu0 0
        %1311 = vmatprep.subr.bf16.mxu0 0
        %1312 = vmatpush1.bf16.msra.mxu0 0
        %1313 = vmatprep.subr.bf16.mxu0 0
        %1314 = vmatpush1.bf16.msra.mxu0 0
        %1315 = vmatprep.subr.bf16.mxu0 0
        %1316 = vmatpush1.bf16.msra.mxu0 0
        %1317 = vmatprep.subr.bf16.mxu0 0
        %1318 = vmatpush1.bf16.msra.mxu0 0
        %1319 = vmatprep.subr.bf16.mxu0 0
        %1320 = vmatpush1.bf16.msra.mxu0 0
        %1321 = vmatprep.subr.bf16.mxu0 0
        %1322 = vmatpush1.bf16.msra.mxu0 0
        %1323 = vmatprep.subr.bf16.mxu0 0
        %1324 = vmatpush1.bf16.msra.mxu0 0
        %1325 = vmatprep.mubr.bf16.mxu0 0
        %1326 = vmatmul.mubr.bf16.gmra.mrb[0].mxu0 %v1291
        %v1327 = vpop.f32.mrb[0].mxu0
        %v1328 = vadd.f32 0.0, %v1327
        %v1329 = vpop.f32.mrb[0].mxu0
        %v1330 = vpop.f32.mrb[0].mxu0
        %v1331 = vpop.f32.mrb[0].mxu0
        %1332 = vdwg.mxu0
        %v1333 = vadd.f32 %v1164, %v1328
        %v1334 = vunpack.c.l.bf16 %v375
        %v1335 = vadd.f32 %v1334, %v1333
        %v1336 = vlaneseq
        %v1337 = vshrl.u32 %v1336, 7
        %v1338 = vsub.s32 3, %v1337
        %v1339 = vrot.slane %v376, %v1338
        %v1340 = vadd.f32 %v1335, %v1339
        %1341 = vadd.xlane.f32.xlu0 %v1340
        %v1342 = vpop.xlane.xlu0 %1341
        %v1343 = vrcp.pop 128.0
        %v1344 = vmul.f32 %v1342, %v1343
        %v1345 = vsub.f32 %v1340, %v1344
        %v1346 = vmul.f32 %v1345, %v1345
        %1347 = vadd.xlane.f32.xlu0 %v1346
        %v1348 = vpop.xlane.xlu0 %1347
        %v1349 = vmul.f32 %v1348, %v1343
        %v1350 = vadd.f32 %v1349, 1e-12
        %v1351 = vrsqrt.pop %v1350
        %v1352 = vmul.f32 %v1345, %v1351
        %v1353 = vlaneseq
        %v1354 = vshrl.u32 %v1353, 7
        %v1355 = vsub.s32 4, %v1354
        %v1356 = vrot.slane %v376, %v1355
        %v1357 = vmul.f32 %v1352, %v1356
        %v1358 = vlaneseq
        %v1359 = vshrl.u32 %v1358, 7
        %v1360 = vsub.s32 5, %v1359
        %v1361 = vrot.slane %v376, %v1360
        %v1362 = vadd.f32 %v1357, %v1361
        %v1363 = vpack.c.bf16 %v1362, %v1362
        %v1364 = vld [vmem:[#allocation4] sm:$0xff]
        %v1365 = vld [vmem:[#allocation4 + $0x8] sm:$0xff]
        %v1366 = vld [vmem:[#allocation4 + $0x10] sm:$0xff]
        %v1367 = vld [vmem:[#allocation4 + $0x18] sm:$0xff]
        %v1368 = vld [vmem:[#allocation4 + $0x20] sm:$0xff]
        %v1369 = vld [vmem:[#allocation4 + $0x28] sm:$0xff]
        %v1370 = vld [vmem:[#allocation4 + $0x30] sm:$0xff]
        %v1371 = vld [vmem:[#allocation4 + $0x38] sm:$0xff]
        %v1372 = vld [vmem:[#allocation4 + $0x40] sm:$0xff]
        %v1373 = vld [vmem:[#allocation4 + $0x48] sm:$0xff]
        %v1374 = vld [vmem:[#allocation4 + $0x50] sm:$0xff]
        %v1375 = vld [vmem:[#allocation4 + $0x58] sm:$0xff]
        %v1376 = vld [vmem:[#allocation4 + $0x60] sm:$0xff]
        %v1377 = vld [vmem:[#allocation4 + $0x68] sm:$0xff]
        %v1378 = vld [vmem:[#allocation4 + $0x70] sm:$0xff]
        %v1379 = vld [vmem:[#allocation4 + $0x78] sm:$0xff]
        %v1380 = vld [vmem:[#allocation4 + $0x80] sm:$0xff]
        %v1381 = vld [vmem:[#allocation4 + $0x88] sm:$0xff]
        %v1382 = vld [vmem:[#allocation4 + $0x90] sm:$0xff]
        %v1383 = vld [vmem:[#allocation4 + $0x98] sm:$0xff]
        %v1384 = vld [vmem:[#allocation4 + $0xa0] sm:$0xff]
        %v1385 = vld [vmem:[#allocation4 + $0xa8] sm:$0xff]
        %v1386 = vld [vmem:[#allocation4 + $0xb0] sm:$0xff]
        %v1387 = vld [vmem:[#allocation4 + $0xb8] sm:$0xff]
        %v1388 = vld [vmem:[#allocation4 + $0xc0] sm:$0xff]
        %v1389 = vld [vmem:[#allocation4 + $0xc8] sm:$0xff]
        %v1390 = vld [vmem:[#allocation4 + $0xd0] sm:$0xff]
        %v1391 = vld [vmem:[#allocation4 + $0xd8] sm:$0xff]
        %v1392 = vld [vmem:[#allocation4 + $0xe0] sm:$0xff]
        %v1393 = vld [vmem:[#allocation4 + $0xe8] sm:$0xff]
        %v1394 = vld [vmem:[#allocation4 + $0xf0] sm:$0xff]
        %v1395 = vld [vmem:[#allocation4 + $0xf8] sm:$0xff]
        %v1396 = vld [vmem:[%s7] sm:$0xf]
        %v1398 = vlaneseq
        %v1399 = vshrl.u32 %v1398, 7
        %v1400 = vsub.s32 0, %v1399
        %v1401 = vrot.slane %v1396, %v1400
        %v1402 = vlaneseq
        %v1403 = vshrl.u32 %v1402, 7
        %v1404 = vsub.s32 1, %v1403
        %v1405 = vrot.slane %v1396, %v1404
        %v1406 = vlaneseq
        %v1407 = vshrl.u32 %v1406, 7
        %v1408 = vsub.s32 2, %v1407
        %v1409 = vrot.slane %v1396, %v1408
        %v1410 = vlaneseq
        %v1411 = vshrl.u32 %v1410, 7
        %v1412 = vsub.s32 3, %v1411
        %v1413 = vrot.slane %v1396, %v1412
        %v1450 = vunpack.c.l.b16 %v1364
        %v1451 = vunpack.c.h.b16 %v1364
        %v1452 = vunpack.c.l.b16 %v1365
        %v1453 = vunpack.c.h.b16 %v1365
        %v1454 = vunpack.c.l.b16 %v1366
        %v1455 = vunpack.c.h.b16 %v1366
        %v1456 = vunpack.c.l.b16 %v1367
        %v1457 = vunpack.c.h.b16 %v1367
        %v1458 = vunpack.c.l.b16 %v1368
        %v1459 = vunpack.c.h.b16 %v1368
        %v1460 = vunpack.c.l.b16 %v1369
        %v1461 = vunpack.c.h.b16 %v1369
        %v1462 = vunpack.c.l.b16 %v1370
        %v1463 = vunpack.c.h.b16 %v1370
        %v1464 = vunpack.c.l.b16 %v1371
        %v1465 = vunpack.c.h.b16 %v1371
        %v1466 = vunpack.c.l.b16 %v1372
        %v1467 = vunpack.c.h.b16 %v1372
        %v1468 = vunpack.c.l.b16 %v1373
        %v1469 = vunpack.c.h.b16 %v1373
        %v1470 = vunpack.c.l.b16 %v1374
        %v1471 = vunpack.c.h.b16 %v1374
        %v1472 = vunpack.c.l.b16 %v1375
        %v1473 = vunpack.c.h.b16 %v1375
        %v1474 = vunpack.c.l.b16 %v1376
        %v1475 = vunpack.c.h.b16 %v1376
        %v1476 = vunpack.c.l.b16 %v1377
        %v1477 = vunpack.c.h.b16 %v1377
        %v1478 = vunpack.c.l.b16 %v1378
        %v1479 = vunpack.c.h.b16 %v1378
        %v1480 = vunpack.c.l.b16 %v1379
        %v1481 = vunpack.c.h.b16 %v1379
        %v1482 = vunpack.c.l.b16 %v1380
        %v1483 = vunpack.c.h.b16 %v1380
        %v1484 = vunpack.c.l.b16 %v1381
        %v1485 = vunpack.c.h.b16 %v1381
        %v1486 = vunpack.c.l.b16 %v1382
        %v1487 = vunpack.c.h.b16 %v1382
        %v1488 = vunpack.c.l.b16 %v1383
        %v1489 = vunpack.c.h.b16 %v1383
        %v1490 = vunpack.c.l.b16 %v1384
        %v1491 = vunpack.c.h.b16 %v1384
        %v1492 = vunpack.c.l.b16 %v1385
        %v1493 = vunpack.c.h.b16 %v1385
        %v1494 = vunpack.c.l.b16 %v1386
        %v1495 = vunpack.c.h.b16 %v1386
        %v1496 = vunpack.c.l.b16 %v1387
        %v1497 = vunpack.c.h.b16 %v1387
        %v1498 = vunpack.c.l.b16 %v1388
        %v1499 = vunpack.c.h.b16 %v1388
        %v1500 = vunpack.c.l.b16 %v1389
        %v1501 = vunpack.c.h.b16 %v1389
        %v1502 = vunpack.c.l.b16 %v1390
        %v1503 = vunpack.c.h.b16 %v1390
        %v1504 = vunpack.c.l.b16 %v1391
        %v1505 = vunpack.c.h.b16 %v1391
        %v1506 = vunpack.c.l.b16 %v1392
        %v1507 = vunpack.c.h.b16 %v1392
        %v1508 = vunpack.c.l.b16 %v1393
        %v1509 = vunpack.c.h.b16 %v1393
        %v1510 = vunpack.c.l.b16 %v1394
        %v1511 = vunpack.c.h.b16 %v1394
        %v1512 = vunpack.c.l.b16 %v1395
        %v1513 = vunpack.c.h.b16 %v1395
        %v1514 = vpack.c.b16 %v1454, %v1450
        %v1515 = vpack.c.b16 %v1455, %v1451
        %v1516 = vpack.c.b16 %v1456, %v1452
        %v1517 = vpack.c.b16 %v1457, %v1453
        %v1518 = vpack.c.b16 %v1462, %v1458
        %v1519 = vpack.c.b16 %v1463, %v1459
        %v1520 = vpack.c.b16 %v1464, %v1460
        %v1521 = vpack.c.b16 %v1465, %v1461
        %v1522 = vpack.c.b16 %v1470, %v1466
        %v1523 = vpack.c.b16 %v1471, %v1467
        %v1524 = vpack.c.b16 %v1472, %v1468
        %v1525 = vpack.c.b16 %v1473, %v1469
        %v1526 = vpack.c.b16 %v1478, %v1474
        %v1527 = vpack.c.b16 %v1479, %v1475
        %v1528 = vpack.c.b16 %v1480, %v1476
        %v1529 = vpack.c.b16 %v1481, %v1477
        %v1530 = vpack.c.b16 %v1486, %v1482
        %v1531 = vpack.c.b16 %v1487, %v1483
        %v1532 = vpack.c.b16 %v1488, %v1484
        %v1533 = vpack.c.b16 %v1489, %v1485
        %v1534 = vpack.c.b16 %v1494, %v1490
        %v1535 = vpack.c.b16 %v1495, %v1491
        %v1536 = vpack.c.b16 %v1496, %v1492
        %v1537 = vpack.c.b16 %v1497, %v1493
        %v1538 = vpack.c.b16 %v1502, %v1498
        %v1539 = vpack.c.b16 %v1503, %v1499
        %v1540 = vpack.c.b16 %v1504, %v1500
        %v1541 = vpack.c.b16 %v1505, %v1501
        %v1542 = vpack.c.b16 %v1510, %v1506
        %v1543 = vpack.c.b16 %v1511, %v1507
        %v1544 = vpack.c.b16 %v1512, %v1508
        %v1545 = vpack.c.b16 %v1513, %v1509
        %1578 = vmatprep.subr.bf16.mxu0 %v1515
        %1579 = vmatpush1.bf16.msra.mxu0 %v1514
        %1580 = vmatprep.subr.bf16.mxu0 %v1519
        %1581 = vmatpush1.bf16.msra.mxu0 %v1518
        %1582 = vmatprep.subr.bf16.mxu0 %v1523
        %1583 = vmatpush1.bf16.msra.mxu0 %v1522
        %1584 = vmatprep.subr.bf16.mxu0 %v1527
        %1585 = vmatpush1.bf16.msra.mxu0 %v1526
        %1586 = vmatprep.subr.bf16.mxu0 %v1531
        %1587 = vmatpush1.bf16.msra.mxu0 %v1530
        %1588 = vmatprep.subr.bf16.mxu0 %v1535
        %1589 = vmatpush1.bf16.msra.mxu0 %v1534
        %1590 = vmatprep.subr.bf16.mxu0 %v1539
        %1591 = vmatpush1.bf16.msra.mxu0 %v1538
        %1592 = vmatprep.subr.bf16.mxu0 %v1543
        %1593 = vmatpush1.bf16.msra.mxu0 %v1542
        %1594 = vmatprep.subr.bf16.mxu0 0
        %1595 = vmatpush1.bf16.msra.mxu0 0
        %1596 = vmatprep.subr.bf16.mxu0 0
        %1597 = vmatpush1.bf16.msra.mxu0 0
        %1598 = vmatprep.subr.bf16.mxu0 0
        %1599 = vmatpush1.bf16.msra.mxu0 0
        %1600 = vmatprep.subr.bf16.mxu0 0
        %1601 = vmatpush1.bf16.msra.mxu0 0
        %1602 = vmatprep.subr.bf16.mxu0 0
        %1603 = vmatpush1.bf16.msra.mxu0 0
        %1604 = vmatprep.subr.bf16.mxu0 0
        %1605 = vmatpush1.bf16.msra.mxu0 0
        %1606 = vmatprep.subr.bf16.mxu0 0
        %1607 = vmatpush1.bf16.msra.mxu0 0
        %1608 = vmatprep.subr.bf16.mxu0 0
        %1609 = vmatpush1.bf16.msra.mxu0 0
        %1610 = vmatprep.mubr.bf16.mxu0 0
        %1611 = vmatmul.mubr.bf16.gmra.mrb[0].mxu0 %v1363
        %v1612 = vpop.f32.mrb[0].mxu0
        %v1613 = vadd.f32 %v1401, %v1612
        %v1614 = vpop.f32.mrb[0].mxu0
        %v1615 = vadd.f32 %v1405, %v1614
        %v1616 = vpop.f32.mrb[0].mxu0
        %v1617 = vpop.f32.mrb[0].mxu0
        %1618 = vdwg.mxu0
        %1619 = vmatprep.subr.bf16.mxu0 %v1517
        %1620 = vmatpush1.bf16.msra.mxu0 %v1516
        %1621 = vmatprep.subr.bf16.mxu0 %v1521
        %1622 = vmatpush1.bf16.msra.mxu0 %v1520
        %1623 = vmatprep.subr.bf16.mxu0 %v1525
        %1624 = vmatpush1.bf16.msra.mxu0 %v1524
        %1625 = vmatprep.subr.bf16.mxu0 %v1529
        %1626 = vmatpush1.bf16.msra.mxu0 %v1528
        %1627 = vmatprep.subr.bf16.mxu0 %v1533
        %1628 = vmatpush1.bf16.msra.mxu0 %v1532
        %1629 = vmatprep.subr.bf16.mxu0 %v1537
        %1630 = vmatpush1.bf16.msra.mxu0 %v1536
        %1631 = vmatprep.subr.bf16.mxu0 %v1541
        %1632 = vmatpush1.bf16.msra.mxu0 %v1540
        %1633 = vmatprep.subr.bf16.mxu0 %v1545
        %1634 = vmatpush1.bf16.msra.mxu0 %v1544
        %1635 = vmatprep.subr.bf16.mxu0 0
        %1636 = vmatpush1.bf16.msra.mxu0 0
        %1637 = vmatprep.subr.bf16.mxu0 0
        %1638 = vmatpush1.bf16.msra.mxu0 0
        %1639 = vmatprep.subr.bf16.mxu0 0
        %1640 = vmatpush1.bf16.msra.mxu0 0
        %1641 = vmatprep.subr.bf16.mxu0 0
        %1642 = vmatpush1.bf16.msra.mxu0 0
        %1643 = vmatprep.subr.bf16.mxu0 0
        %1644 = vmatpush1.bf16.msra.mxu0 0
        %1645 = vmatprep.subr.bf16.mxu0 0
        %1646 = vmatpush1.bf16.msra.mxu0 0
        %1647 = vmatprep.subr.bf16.mxu0 0
        %1648 = vmatpush1.bf16.msra.mxu0 0
        %1649 = vmatprep.subr.bf16.mxu0 0
        %1650 = vmatpush1.bf16.msra.mxu0 0
        %1651 = vmatprep.mubr.bf16.mxu0 0
        %1652 = vmatmul.mubr.bf16.gmra.mrb[0].mxu0 %v1363
        %v1653 = vpop.f32.mrb[0].mxu0
        %v1654 = vadd.f32 %v1409, %v1653
        %v1655 = vpop.f32.mrb[0].mxu0
        %v1656 = vadd.f32 %v1413, %v1655
        %v1657 = vpop.f32.mrb[0].mxu0
        %v1658 = vpop.f32.mrb[0].mxu0
        %1659 = vdwg.mxu0
        %v1660 = vmul.f32 %v1613, 0.5
        %v1661 = vmul.f32 %v1615, 0.5
        %v1662 = vmul.f32 %v1654, 0.5
        %v1663 = vmul.f32 %v1656, 0.5
        %v1664 = vmul.f32 %v1613, 0.044715
        %v1665 = vmul.f32 %v1615, 0.044715
        %v1666 = vmul.f32 %v1654, 0.044715
        %v1667 = vmul.f32 %v1656, 0.044715
        %v1668 = vmul.f32 %v1664, %v1613
        %v1669 = vmul.f32 %v1665, %v1615
        %v1670 = vmul.f32 %v1666, %v1654
        %v1671 = vmul.f32 %v1667, %v1656
        %v1672 = vmul.f32 %v1668, %v1613
        %v1673 = vmul.f32 %v1669, %v1615
        %v1674 = vmul.f32 %v1670, %v1654
        %v1675 = vmul.f32 %v1671, %v1656
        %v1676 = vadd.f32 %v1613, %v1672
        %v1677 = vadd.f32 %v1615, %v1673
        %v1678 = vadd.f32 %v1654, %v1674
        %v1679 = vadd.f32 %v1656, %v1675
        %v1680 = vmul.f32 %v1676, 0.7978846
        %v1681 = vmul.f32 %v1677, 0.7978846
        %v1682 = vmul.f32 %v1678, 0.7978846
        %v1683 = vmul.f32 %v1679, 0.7978846
        %v1684 = vtanh.pop %v1680
        %v1685 = vtanh.pop %v1681
        %v1686 = vtanh.pop %v1682
        %v1687 = vtanh.pop %v1683
        %v1688 = vadd.f32 %v1684, 1.0
        %v1689 = vadd.f32 %v1685, 1.0
        %v1690 = vadd.f32 %v1686, 1.0
        %v1691 = vadd.f32 %v1687, 1.0
        %v1692 = vmul.f32 %v1660, %v1688
        %v1693 = vmul.f32 %v1661, %v1689
        %v1694 = vmul.f32 %v1662, %v1690
        %v1695 = vmul.f32 %v1663, %v1691
        %v1696 = vpack.c.bf16 %v1692, %v1692
        %v1697 = vpack.c.bf16 %v1693, %v1693
        %v1698 = vpack.c.bf16 %v1694, %v1694
        %v1699 = vpack.c.bf16 %v1695, %v1695
        %v1700 = vld [vmem:[#allocation6] sm:$0xf]
        %v1701 = vld [vmem:[#allocation6 + $0x4] sm:$0xf]
        %v1702 = vld [vmem:[#allocation6 + $0x8] sm:$0xf]
        %v1703 = vld [vmem:[#allocation6 + $0xc] sm:$0xf]
        %v1704 = vld [vmem:[#allocation6 + $0x10] sm:$0xf]
        %v1705 = vld [vmem:[#allocation6 + $0x14] sm:$0xf]
        %v1706 = vld [vmem:[#allocation6 + $0x18] sm:$0xf]
        %v1707 = vld [vmem:[#allocation6 + $0x1c] sm:$0xf]
        %v1708 = vld [vmem:[#allocation6 + $0x20] sm:$0xf]
        %v1709 = vld [vmem:[#allocation6 + $0x24] sm:$0xf]
        %v1710 = vld [vmem:[#allocation6 + $0x28] sm:$0xf]
        %v1711 = vld [vmem:[#allocation6 + $0x2c] sm:$0xf]
        %v1712 = vld [vmem:[#allocation6 + $0x30] sm:$0xf]
        %v1713 = vld [vmem:[#allocation6 + $0x34] sm:$0xf]
        %v1714 = vld [vmem:[#allocation6 + $0x38] sm:$0xf]
        %v1715 = vld [vmem:[#allocation6 + $0x3c] sm:$0xf]
        %v1716 = vld [vmem:[#allocation6 + $0x40] sm:$0xf]
        %v1717 = vld [vmem:[#allocation6 + $0x44] sm:$0xf]
        %v1718 = vld [vmem:[#allocation6 + $0x48] sm:$0xf]
        %v1719 = vld [vmem:[#allocation6 + $0x4c] sm:$0xf]
        %v1720 = vld [vmem:[#allocation6 + $0x50] sm:$0xf]
        %v1721 = vld [vmem:[#allocation6 + $0x54] sm:$0xf]
        %v1722 = vld [vmem:[#allocation6 + $0x58] sm:$0xf]
        %v1723 = vld [vmem:[#allocation6 + $0x5c] sm:$0xf]
        %v1724 = vld [vmem:[#allocation6 + $0x60] sm:$0xf]
        %v1725 = vld [vmem:[#allocation6 + $0x64] sm:$0xf]
        %v1726 = vld [vmem:[#allocation6 + $0x68] sm:$0xf]
        %v1727 = vld [vmem:[#allocation6 + $0x6c] sm:$0xf]
        %v1728 = vld [vmem:[#allocation6 + $0x70] sm:$0xf]
        %v1729 = vld [vmem:[#allocation6 + $0x74] sm:$0xf]
        %v1730 = vld [vmem:[#allocation6 + $0x78] sm:$0xf]
        %v1731 = vld [vmem:[#allocation6 + $0x7c] sm:$0xf]
        %v1732 = vld [vmem:[#allocation6 + $0x80] sm:$0xf]
        %v1733 = vld [vmem:[#allocation6 + $0x84] sm:$0xf]
        %v1734 = vld [vmem:[#allocation6 + $0x88] sm:$0xf]
        %v1735 = vld [vmem:[#allocation6 + $0x8c] sm:$0xf]
        %v1736 = vld [vmem:[#allocation6 + $0x90] sm:$0xf]
        %v1737 = vld [vmem:[#allocation6 + $0x94] sm:$0xf]
        %v1738 = vld [vmem:[#allocation6 + $0x98] sm:$0xf]
        %v1739 = vld [vmem:[#allocation6 + $0x9c] sm:$0xf]
        %v1740 = vld [vmem:[#allocation6 + $0xa0] sm:$0xf]
        %v1741 = vld [vmem:[#allocation6 + $0xa4] sm:$0xf]
        %v1742 = vld [vmem:[#allocation6 + $0xa8] sm:$0xf]
        %v1743 = vld [vmem:[#allocation6 + $0xac] sm:$0xf]
        %v1744 = vld [vmem:[#allocation6 + $0xb0] sm:$0xf]
        %v1745 = vld [vmem:[#allocation6 + $0xb4] sm:$0xf]
        %v1746 = vld [vmem:[#allocation6 + $0xb8] sm:$0xf]
        %v1747 = vld [vmem:[#allocation6 + $0xbc] sm:$0xf]
        %v1748 = vld [vmem:[#allocation6 + $0xc0] sm:$0xf]
        %v1749 = vld [vmem:[#allocation6 + $0xc4] sm:$0xf]
        %v1750 = vld [vmem:[#allocation6 + $0xc8] sm:$0xf]
        %v1751 = vld [vmem:[#allocation6 + $0xcc] sm:$0xf]
        %v1752 = vld [vmem:[#allocation6 + $0xd0] sm:$0xf]
        %v1753 = vld [vmem:[#allocation6 + $0xd4] sm:$0xf]
        %v1754 = vld [vmem:[#allocation6 + $0xd8] sm:$0xf]
        %v1755 = vld [vmem:[#allocation6 + $0xdc] sm:$0xf]
        %v1756 = vld [vmem:[#allocation6 + $0xe0] sm:$0xf]
        %v1757 = vld [vmem:[#allocation6 + $0xe4] sm:$0xf]
        %v1758 = vld [vmem:[#allocation6 + $0xe8] sm:$0xf]
        %v1759 = vld [vmem:[#allocation6 + $0xec] sm:$0xf]
        %v1760 = vld [vmem:[#allocation6 + $0xf0] sm:$0xf]
        %v1761 = vld [vmem:[#allocation6 + $0xf4] sm:$0xf]
        %v1762 = vld [vmem:[#allocation6 + $0xf8] sm:$0xf]
        %v1763 = vld [vmem:[#allocation6 + $0xfc] sm:$0xf]
        %v1764 = vlaneseq
        %v1765 = vshrl.u32 %v1764, 7
        %v1766 = vsub.s32 6, %v1765
        %v1767 = vrot.slane %v376, %v1766
        %v1832 = vunpack.c.l.b16 %v1700
        %v1833 = vunpack.c.l.b16 %v1701
        %v1834 = vunpack.c.l.b16 %v1702
        %v1835 = vunpack.c.l.b16 %v1703
        %v1836 = vunpack.c.l.b16 %v1704
        %v1837 = vunpack.c.l.b16 %v1705
        %v1838 = vunpack.c.l.b16 %v1706
        %v1839 = vunpack.c.l.b16 %v1707
        %v1840 = vunpack.c.l.b16 %v1708
        %v1841 = vunpack.c.l.b16 %v1709
        %v1842 = vunpack.c.l.b16 %v1710
        %v1843 = vunpack.c.l.b16 %v1711
        %v1844 = vunpack.c.l.b16 %v1712
        %v1845 = vunpack.c.l.b16 %v1713
        %v1846 = vunpack.c.l.b16 %v1714
        %v1847 = vunpack.c.l.b16 %v1715
        %v1848 = vunpack.c.l.b16 %v1716
        %v1849 = vunpack.c.l.b16 %v1717
        %v1850 = vunpack.c.l.b16 %v1718
        %v1851 = vunpack.c.l.b16 %v1719
        %v1852 = vunpack.c.l.b16 %v1720
        %v1853 = vunpack.c.l.b16 %v1721
        %v1854 = vunpack.c.l.b16 %v1722
        %v1855 = vunpack.c.l.b16 %v1723
        %v1856 = vunpack.c.l.b16 %v1724
        %v1857 = vunpack.c.l.b16 %v1725
        %v1858 = vunpack.c.l.b16 %v1726
        %v1859 = vunpack.c.l.b16 %v1727
        %v1860 = vunpack.c.l.b16 %v1728
        %v1861 = vunpack.c.l.b16 %v1729
        %v1862 = vunpack.c.l.b16 %v1730
        %v1863 = vunpack.c.l.b16 %v1731
        %v1864 = vunpack.c.l.b16 %v1732
        %v1865 = vunpack.c.l.b16 %v1733
        %v1866 = vunpack.c.l.b16 %v1734
        %v1867 = vunpack.c.l.b16 %v1735
        %v1868 = vunpack.c.l.b16 %v1736
        %v1869 = vunpack.c.l.b16 %v1737
        %v1870 = vunpack.c.l.b16 %v1738
        %v1871 = vunpack.c.l.b16 %v1739
        %v1872 = vunpack.c.l.b16 %v1740
        %v1873 = vunpack.c.l.b16 %v1741
        %v1874 = vunpack.c.l.b16 %v1742
        %v1875 = vunpack.c.l.b16 %v1743
        %v1876 = vunpack.c.l.b16 %v1744
        %v1877 = vunpack.c.l.b16 %v1745
        %v1878 = vunpack.c.l.b16 %v1746
        %v1879 = vunpack.c.l.b16 %v1747
        %v1880 = vunpack.c.l.b16 %v1748
        %v1881 = vunpack.c.l.b16 %v1749
        %v1882 = vunpack.c.l.b16 %v1750
        %v1883 = vunpack.c.l.b16 %v1751
        %v1884 = vunpack.c.l.b16 %v1752
        %v1885 = vunpack.c.l.b16 %v1753
        %v1886 = vunpack.c.l.b16 %v1754
        %v1887 = vunpack.c.l.b16 %v1755
        %v1888 = vunpack.c.l.b16 %v1756
        %v1889 = vunpack.c.l.b16 %v1757
        %v1890 = vunpack.c.l.b16 %v1758
        %v1891 = vunpack.c.l.b16 %v1759
        %v1892 = vunpack.c.l.b16 %v1760
        %v1893 = vunpack.c.l.b16 %v1761
        %v1894 = vunpack.c.l.b16 %v1762
        %v1895 = vunpack.c.l.b16 %v1763
        %v1896 = vpack.c.b16 %v1833, %v1832
        %v1897 = vpack.c.b16 %v1835, %v1834
        %v1898 = vpack.c.b16 %v1837, %v1836
        %v1899 = vpack.c.b16 %v1839, %v1838
        %v1900 = vpack.c.b16 %v1841, %v1840
        %v1901 = vpack.c.b16 %v1843, %v1842
        %v1902 = vpack.c.b16 %v1845, %v1844
        %v1903 = vpack.c.b16 %v1847, %v1846
        %v1904 = vpack.c.b16 %v1849, %v1848
        %v1905 = vpack.c.b16 %v1851, %v1850
        %v1906 = vpack.c.b16 %v1853, %v1852
        %v1907 = vpack.c.b16 %v1855, %v1854
        %v1908 = vpack.c.b16 %v1857, %v1856
        %v1909 = vpack.c.b16 %v1859, %v1858
        %v1910 = vpack.c.b16 %v1861, %v1860
        %v1911 = vpack.c.b16 %v1863, %v1862
        %v1912 = vpack.c.b16 %v1865, %v1864
        %v1913 = vpack.c.b16 %v1867, %v1866
        %v1914 = vpack.c.b16 %v1869, %v1868
        %v1915 = vpack.c.b16 %v1871, %v1870
        %v1916 = vpack.c.b16 %v1873, %v1872
        %v1917 = vpack.c.b16 %v1875, %v1874
        %v1918 = vpack.c.b16 %v1877, %v1876
        %v1919 = vpack.c.b16 %v1879, %v1878
        %v1920 = vpack.c.b16 %v1881, %v1880
        %v1921 = vpack.c.b16 %v1883, %v1882
        %v1922 = vpack.c.b16 %v1885, %v1884
        %v1923 = vpack.c.b16 %v1887, %v1886
        %v1924 = vpack.c.b16 %v1889, %v1888
        %v1925 = vpack.c.b16 %v1891, %v1890
        %v1926 = vpack.c.b16 %v1893, %v1892
        %v1927 = vpack.c.b16 %v1895, %v1894
        %1960 = vmatprep.subr.bf16.mxu0 0
        %1961 = vmatpush1.bf16.msra.mxu0 %v1896
        %1962 = vmatprep.subr.bf16.mxu0 0
        %1963 = vmatpush1.bf16.msra.mxu0 %v1897
        %1964 = vmatprep.subr.bf16.mxu0 0
        %1965 = vmatpush1.bf16.msra.mxu0 %v1898
        %1966 = vmatprep.subr.bf16.mxu0 0
        %1967 = vmatpush1.bf16.msra.mxu0 %v1899
        %1968 = vmatprep.subr.bf16.mxu0 0
        %1969 = vmatpush1.bf16.msra.mxu0 %v1900
        %1970 = vmatprep.subr.bf16.mxu0 0
        %1971 = vmatpush1.bf16.msra.mxu0 %v1901
        %1972 = vmatprep.subr.bf16.mxu0 0
        %1973 = vmatpush1.bf16.msra.mxu0 %v1902
        %1974 = vmatprep.subr.bf16.mxu0 0
        %1975 = vmatpush1.bf16.msra.mxu0 %v1903
        %1976 = vmatprep.subr.bf16.mxu0 0
        %1977 = vmatpush1.bf16.msra.mxu0 %v1904
        %1978 = vmatprep.subr.bf16.mxu0 0
        %1979 = vmatpush1.bf16.msra.mxu0 %v1905
        %1980 = vmatprep.subr.bf16.mxu0 0
        %1981 = vmatpush1.bf16.msra.mxu0 %v1906
        %1982 = vmatprep.subr.bf16.mxu0 0
        %1983 = vmatpush1.bf16.msra.mxu0 %v1907
        %1984 = vmatprep.subr.bf16.mxu0 0
        %1985 = vmatpush1.bf16.msra.mxu0 %v1908
        %1986 = vmatprep.subr.bf16.mxu0 0
        %1987 = vmatpush1.bf16.msra.mxu0 %v1909
        %1988 = vmatprep.subr.bf16.mxu0 0
        %1989 = vmatpush1.bf16.msra.mxu0 %v1910
        %1990 = vmatprep.subr.bf16.mxu0 0
        %1991 = vmatpush1.bf16.msra.mxu0 %v1911
        %1992 = vmatprep.mubr.bf16.mxu0 %v1697
        %1993 = vmatmul.mubr.bf16.gmra.mrb[0].mxu0 %v1696
        %v1994 = vpop.f32.mrb[0].mxu0
        %v1995 = vadd.f32 %v1767, %v1994
        %v1996 = vpop.f32.mrb[0].mxu0
        %v1997 = vpop.f32.mrb[0].mxu0
        %v1998 = vpop.f32.mrb[0].mxu0
        %1999 = vdwg.mxu0
        %2000 = vmatprep.subr.bf16.mxu0 0
        %2001 = vmatpush1.bf16.msra.mxu0 %v1912
        %2002 = vmatprep.subr.bf16.mxu0 0
        %2003 = vmatpush1.bf16.msra.mxu0 %v1913
        %2004 = vmatprep.subr.bf16.mxu0 0
        %2005 = vmatpush1.bf16.msra.mxu0 %v1914
        %2006 = vmatprep.subr.bf16.mxu0 0
        %2007 = vmatpush1.bf16.msra.mxu0 %v1915
        %2008 = vmatprep.subr.bf16.mxu0 0
        %2009 = vmatpush1.bf16.msra.mxu0 %v1916
        %2010 = vmatprep.subr.bf16.mxu0 0
        %2011 = vmatpush1.bf16.msra.mxu0 %v1917
        %2012 = vmatprep.subr.bf16.mxu0 0
        %2013 = vmatpush1.bf16.msra.mxu0 %v1918
        %2014 = vmatprep.subr.bf16.mxu0 0
        %2015 = vmatpush1.bf16.msra.mxu0 %v1919
        %2016 = vmatprep.subr.bf16.mxu0 0
        %2017 = vmatpush1.bf16.msra.mxu0 %v1920
        %2018 = vmatprep.subr.bf16.mxu0 0
        %2019 = vmatpush1.bf16.msra.mxu0 %v1921
        %2020 = vmatprep.subr.bf16.mxu0 0
        %2021 = vmatpush1.bf16.msra.mxu0 %v1922
        %2022 = vmatprep.subr.bf16.mxu0 0
        %2023 = vmatpush1.bf16.msra.mxu0 %v1923
        %2024 = vmatprep.subr.bf16.mxu0 0
        %2025 = vmatpush1.bf16.msra.mxu0 %v1924
        %2026 = vmatprep.subr.bf16.mxu0 0
        %2027 = vmatpush1.bf16.msra.mxu0 %v1925
        %2028 = vmatprep.subr.bf16.mxu0 0
        %2029 = vmatpush1.bf16.msra.mxu0 %v1926
        %2030 = vmatprep.subr.bf16.mxu0 0
        %2031 = vmatpush1.bf16.msra.mxu0 %v1927
        %2032 = vmatprep.mubr.bf16.mxu0 %v1699
        %2033 = vmatmul.mubr.bf16.gmra.mrb[0].mxu0 %v1698
        %v2034 = vpop.f32.mrb[0].mxu0
        %v2035 = vadd.f32 %v1995, %v2034
        %v2036 = vpop.f32.mrb[0].mxu0
        %v2037 = vpop.f32.mrb[0].mxu0
        %v2038 = vpop.f32.mrb[0].mxu0
        %2039 = vdwg.mxu0
        %v2040 = vadd.f32 %v2035, %v1362
        %2041 = vadd.xlane.f32.xlu0 %v2040
        %v2042 = vpop.xlane.xlu0 %2041
        %v2043 = vmul.f32 %v2042, %v1343
        %v2044 = vsub.f32 %v2040, %v2043
        %v2045 = vmul.f32 %v2044, %v2044
        %2046 = vadd.xlane.f32.xlu0 %v2045
        %v2047 = vpop.xlane.xlu0 %2046
        %v2048 = vmul.f32 %v2047, %v1343
        %v2049 = vadd.f32 %v2048, 1e-12
        %v2050 = vrsqrt.pop %v2049
        %v2051 = vmul.f32 %v2044, %v2050
        %v2052 = vlaneseq
        %v2053 = vshrl.u32 %v2052, 7
        %v2054 = vsub.s32 7, %v2053
        %v2055 = vrot.slane %v376, %v2054
        %v2056 = vmul.f32 %v2051, %v2055
        %v2057 = vlaneseq
        %v2058 = vshrl.u32 %v2057, 7
        %v2059 = vsub.s32 0, %v2058
        %v2060 = vrot.slane %v377, %v2059
        %v2061 = vadd.f32 %v2056, %v2060
        %v2062 = vpack.c.bf16 %v2061, %v2061
        %2063 = vst [vmem:[%s373] sm:$0xf] %v2062
        %p2064 = scmp.lt.s32.totalorder %s22, 1
        %s2065 = scalar_select %p2064, %s22, 1
        %s2066 = smul.addr %s2065, 4
        %s2067 = scalar_lea.vmem %s8, %s2066
        // Predicated region
        $region69: #{bert_binary_classifier_forward.4} parent=51 // pred_check
          %p2068 = pneg %p218
        $region70: #{bert_binary_classifier_forward.4} parent=51 // pred_check_branch
          %2070 = sbr.rel (%p2068) target = $region72
        $region71: #{bert_binary_classifier_forward.4} parent=51 // pred_region
          _
        $region72: #{bert_binary_classifier_forward.4} parent=51 // pred_fallthru
          _
      $region52: #{bert_binary_classifier_forward.4} parent=5 // pred_fallthru
        _
      %p2071 = scmp.le.s32.totalorder 2, %s17
      // Predicated region
      $region73: #{bert_binary_classifier_forward.4} parent=5 // pred_check
        %p2072 = pneg %p2071
      $region74: #{bert_binary_classifier_forward.4} parent=5 // pred_check_branch
        %2074 = sbr.rel (%p2072) target = $region76
      $region75: #{bert_binary_classifier_forward.4} parent=5 // pred_region
        %s2075 = ssub.s32 %s17, 2
        // Predicated region
        $region77: #{bert_binary_classifier_forward.4} parent=75 // pred_check
          %p2076 = pneg %p224
        $region78: #{bert_binary_classifier_forward.4} parent=75 // pred_check_branch
          %2078 = sbr.rel (%p2076) target = $region80
        $region79: #{bert_binary_classifier_forward.4} parent=75 // pred_region
          %p2079 = scmp.lt.s32.totalorder %s23, 1
          %s2080 = scalar_select %p2079, %s23, 1
          %s2081 = smul.addr %s2080, 4
          %s2082 = scalar_lea.vmem %s8, %s2081
        $region80: #{bert_binary_classifier_forward.4} parent=75 // pred_fallthru
          _
      $region76: #{bert_binary_classifier_forward.4} parent=5 // pred_fallthru
        _
    $region6: #{bert_binary_classifier_forward.4} parent=1 // loop_footer
      %s21 = sadd.s32 1, %s17
    $region7: #{bert_binary_classifier_forward.4} parent=1 // loop_footer_branch
      %16 = sbr.rel target = $region3
    $region8: #{bert_binary_classifier_forward.4} parent=1 // loop_exit
      _
    %2083 = vsyncpa [#allocation3], 1
    %s2084 = scalar_lea.sflag [#allocation3], 1
    %2085 = vsyncpa %s2084, 1
    %2086 = vsyncpa [#allocation5], 1
    %2087 = vsyncpa [#allocation8], 1

// kernel: bert_binary_classifier_forward.5
$region0: #{bert_binary_classifier_forward.5}
  #allocation0 [shape = 'u32[]', space=smem, size = 0x4, offset = 0x4, fixed_abs, tag = 'smem constant byte address 0x4 - core index']
  #allocation1 [shape = 'u32[144,128]{1,0:T(1,128)}', space=vmem, size = 0x12000, scoped, tag = 'internal scratch']
  %s0 = inlined_call_operand.vmem [shape: bf16[16,128], index: 0, kind: input, shape index: {}]
  %s1 = inlined_call_operand.vmem [shape: f32[2,1,8], index: 1, kind: input, shape index: {}]
  %s2 = inlined_call_operand.vmem [shape: bf16[128,384], index: 2, kind: input, shape index: {}]
  %s3 = inlined_call_operand.vmem [shape: bf16[128,128], index: 3, kind: input, shape index: {}]
  %s4 = inlined_call_operand.vmem [shape: bf16[128,512], index: 4, kind: input, shape index: {}]
  %s5 = inlined_call_operand.vmem [shape: bf16[512,128], index: 5, kind: input, shape index: {}]
  %s6 = inlined_call_operand.vmem [shape: f32[9,128], index: 6, kind: input, shape index: {}]
  %s7 = inlined_call_operand.vmem [shape: f32[1,512], index: 7, kind: input, shape index: {}]
  %s8 = inlined_call_operand.vmem [shape: bf16[16,128], index: 8, kind: output, shape index: {}]
  %s9 = sld [smem:[#allocation0]]
  $region65: #{bert_binary_classifier_forward.5} parent=0
    _
  %s11 = ssub.s32 1, %s9
  %s12 = scalar_select 0, %s11, %s9
  loop: start=0, step=1, limit=4
  $region2: #{bert_binary_classifier_forward.5} parent=0 // loop_pre_header
    _
  $region3: #{bert_binary_classifier_forward.5} parent=0 // loop_header
    %s14 = sphi 0, %s18
    %p15 = scmp.ge.s32.totalorder %s14, 4
    %s24 = sphi 0, %s26
    %s27 = sphi 0, %s24
    %s28 = sphi 0, %s27
    %s44 = sphi 0, %s28
    %s50 = sphi 0, %s52
    %s53 = sphi 0, %s50
    %s54 = sphi 0, %s53
    %s70 = sphi 0, %s54
    %s74 = sphi 0, %s74
    %s76 = sphi 0, %s74
    %s77 = sphi 0, %s76
    %s91 = sphi 0, %s77
    %s95 = sphi 0, %s95
    %s97 = sphi 0, %s95
    %s98 = sphi 0, %s97
    %s112 = sphi 0, %s98
    %s116 = sphi 0, %s116
    %s118 = sphi 0, %s116
    %s119 = sphi 0, %s118
    %s133 = sphi 0, %s119
    %s137 = sphi 0, %s137
    %s139 = sphi 0, %s137
    %s140 = sphi 0, %s139
    %s154 = sphi 0, %s140
    %s158 = sphi 0, %s158
    %s160 = sphi 0, %s158
    %s161 = sphi 0, %s160
    %s175 = sphi 0, %s161
    %s179 = sphi 0, %s179
    %s181 = sphi 0, %s179
    %s182 = sphi 0, %s181
    %s196 = sphi 0, %s182
    %s202 = sphi 0, %s204
    %s205 = sphi 0, %s202
    %s206 = sphi 0, %s205
    %s222 = sphi 0, %s206
  $region4: #{bert_binary_classifier_forward.5} parent=0 // loop_header_branch
    %17 = sbr.rel (%p15) target = $region8
  $region5: #{bert_binary_classifier_forward.5} parent=0 // loop_body
    %s19 = ssub.s32 %s14, 1
    %s20 = ssub.s32 %s14, 2
    %s21 = sadd.s32 %s14, 1
    %s22 = ssub.s32 %s14, %s21
    %p23 = scmp.eq.s32.totalorder %s22, 0
    %s25 = sadd.s32 %s24, 1
    %s26 = scalar_select %p23, %s24, %s25
    %p29 = pneg %p23
    %p30 = scmp.eq.s32.totalorder %s14, 1
    %p31 = por %p29, %p30
    %p32 = scmp.ne.s32.totalorder %s24, %s27
    %p33 = scmp.eq.s32.totalorder %s14, 0
    %p34 = por %p32, %p33
    %p35 = scmp.ne.s32.totalorder %s24, %s27
    %p36 = scmp.eq.s32.totalorder %s19, 1
    %p37 = por %p35, %p36
    %p38 = scmp.ne.s32.totalorder %s27, %s28
    %p39 = scmp.eq.s32.totalorder %s19, 0
    %p40 = por %p38, %p39
    %p41 = scmp.ne.s32.totalorder %s27, %s28
    %p42 = scmp.eq.s32.totalorder %s20, 1
    %p43 = por %p41, %p42
    %p45 = scmp.ne.s32.totalorder %s28, %s44
    %p46 = scmp.eq.s32.totalorder %s20, 0
    %p47 = por %p45, %p46
    %s48 = ssub.s32 %s14, %s21
    %p49 = scmp.eq.s32.totalorder %s48, 0
    %s51 = sadd.s32 %s50, 1
    %s52 = scalar_select %p49, %s50, %s51
    %p55 = pneg %p49
    %p56 = scmp.eq.s32.totalorder %s14, 1
    %p57 = por %p55, %p56
    %p58 = scmp.ne.s32.totalorder %s50, %s53
    %p59 = scmp.eq.s32.totalorder %s14, 0
    %p60 = por %p58, %p59
    %p61 = scmp.ne.s32.totalorder %s50, %s53
    %p62 = scmp.eq.s32.totalorder %s19, 1
    %p63 = por %p61, %p62
    %p64 = scmp.ne.s32.totalorder %s53, %s54
    %p65 = scmp.eq.s32.totalorder %s19, 0
    %p66 = por %p64, %p65
    %p67 = scmp.ne.s32.totalorder %s53, %s54
    %p68 = scmp.eq.s32.totalorder %s20, 1
    %p69 = por %p67, %p68
    %p71 = scmp.ne.s32.totalorder %s54, %s70
    %p72 = scmp.eq.s32.totalorder %s20, 0
    %p73 = por %p71, %p72
    %s75 = sadd.s32 %s74, 1
    %p78 = scmp.eq.s32.totalorder %s14, 1
    %p79 = scmp.ne.s32.totalorder %s74, %s76
    %p80 = scmp.eq.s32.totalorder %s14, 0
    %p81 = por %p79, %p80
    %p82 = scmp.ne.s32.totalorder %s74, %s76
    %p83 = scmp.eq.s32.totalorder %s19, 1
    %p84 = por %p82, %p83
    %p85 = scmp.ne.s32.totalorder %s76, %s77
    %p86 = scmp.eq.s32.totalorder %s19, 0
    %p87 = por %p85, %p86
    %p88 = scmp.ne.s32.totalorder %s76, %s77
    %p89 = scmp.eq.s32.totalorder %s20, 1
    %p90 = por %p88, %p89
    %p92 = scmp.ne.s32.totalorder %s77, %s91
    %p93 = scmp.eq.s32.totalorder %s20, 0
    %p94 = por %p92, %p93
    %s96 = sadd.s32 %s95, 1
    %p99 = scmp.eq.s32.totalorder %s14, 1
    %p100 = scmp.ne.s32.totalorder %s95, %s97
    %p101 = scmp.eq.s32.totalorder %s14, 0
    %p102 = por %p100, %p101
    %p103 = scmp.ne.s32.totalorder %s95, %s97
    %p104 = scmp.eq.s32.totalorder %s19, 1
    %p105 = por %p103, %p104
    %p106 = scmp.ne.s32.totalorder %s97, %s98
    %p107 = scmp.eq.s32.totalorder %s19, 0
    %p108 = por %p106, %p107
    %p109 = scmp.ne.s32.totalorder %s97, %s98
    %p110 = scmp.eq.s32.totalorder %s20, 1
    %p111 = por %p109, %p110
    %p113 = scmp.ne.s32.totalorder %s98, %s112
    %p114 = scmp.eq.s32.totalorder %s20, 0
    %p115 = por %p113, %p114
    %s117 = sadd.s32 %s116, 1
    %p120 = scmp.eq.s32.totalorder %s14, 1
    %p121 = scmp.ne.s32.totalorder %s116, %s118
    %p122 = scmp.eq.s32.totalorder %s14, 0
    %p123 = por %p121, %p122
    %p124 = scmp.ne.s32.totalorder %s116, %s118
    %p125 = scmp.eq.s32.totalorder %s19, 1
    %p126 = por %p124, %p125
    %p127 = scmp.ne.s32.totalorder %s118, %s119
    %p128 = scmp.eq.s32.totalorder %s19, 0
    %p129 = por %p127, %p128
    %p130 = scmp.ne.s32.totalorder %s118, %s119
    %p131 = scmp.eq.s32.totalorder %s20, 1
    %p132 = por %p130, %p131
    %p134 = scmp.ne.s32.totalorder %s119, %s133
    %p135 = scmp.eq.s32.totalorder %s20, 0
    %p136 = por %p134, %p135
    %s138 = sadd.s32 %s137, 1
    %p141 = scmp.eq.s32.totalorder %s14, 1
    %p142 = scmp.ne.s32.totalorder %s137, %s139
    %p143 = scmp.eq.s32.totalorder %s14, 0
    %p144 = por %p142, %p143
    %p145 = scmp.ne.s32.totalorder %s137, %s139
    %p146 = scmp.eq.s32.totalorder %s19, 1
    %p147 = por %p145, %p146
    %p148 = scmp.ne.s32.totalorder %s139, %s140
    %p149 = scmp.eq.s32.totalorder %s19, 0
    %p150 = por %p148, %p149
    %p151 = scmp.ne.s32.totalorder %s139, %s140
    %p152 = scmp.eq.s32.totalorder %s20, 1
    %p153 = por %p151, %p152
    %p155 = scmp.ne.s32.totalorder %s140, %s154
    %p156 = scmp.eq.s32.totalorder %s20, 0
    %p157 = por %p155, %p156
    %s159 = sadd.s32 %s158, 1
    %p162 = scmp.eq.s32.totalorder %s14, 1
    %p163 = scmp.ne.s32.totalorder %s158, %s160
    %p164 = scmp.eq.s32.totalorder %s14, 0
    %p165 = por %p163, %p164
    %p166 = scmp.ne.s32.totalorder %s158, %s160
    %p167 = scmp.eq.s32.totalorder %s19, 1
    %p168 = por %p166, %p167
    %p169 = scmp.ne.s32.totalorder %s160, %s161
    %p170 = scmp.eq.s32.totalorder %s19, 0
    %p171 = por %p169, %p170
    %p172 = scmp.ne.s32.totalorder %s160, %s161
    %p173 = scmp.eq.s32.totalorder %s20, 1
    %p174 = por %p172, %p173
    %p176 = scmp.ne.s32.totalorder %s161, %s175
    %p177 = scmp.eq.s32.totalorder %s20, 0
    %p178 = por %p176, %p177
    %s180 = sadd.s32 %s179, 1
    %p183 = scmp.eq.s32.totalorder %s14, 1
    %p184 = scmp.ne.s32.totalorder %s179, %s181
    %p185 = scmp.eq.s32.totalorder %s14, 0
    %p186 = por %p184, %p185
    %p187 = scmp.ne.s32.totalorder %s179, %s181
    %p188 = scmp.eq.s32.totalorder %s19, 1
    %p189 = por %p187, %p188
    %p190 = scmp.ne.s32.totalorder %s181, %s182
    %p191 = scmp.eq.s32.totalorder %s19, 0
    %p192 = por %p190, %p191
    %p193 = scmp.ne.s32.totalorder %s181, %s182
    %p194 = scmp.eq.s32.totalorder %s20, 1
    %p195 = por %p193, %p194
    %p197 = scmp.ne.s32.totalorder %s182, %s196
    %p198 = scmp.eq.s32.totalorder %s20, 0
    %p199 = por %p197, %p198
    %s200 = ssub.s32 %s14, %s21
    %p201 = scmp.eq.s32.totalorder %s200, 0
    %s203 = sadd.s32 %s202, 1
    %s204 = scalar_select %p201, %s202, %s203
    %p207 = pneg %p201
    %p208 = scmp.eq.s32.totalorder %s14, 1
    %p209 = por %p207, %p208
    %p210 = scmp.ne.s32.totalorder %s202, %s205
    %p211 = scmp.eq.s32.totalorder %s14, 0
    %p212 = por %p210, %p211
    %p213 = scmp.ne.s32.totalorder %s202, %s205
    %p214 = scmp.eq.s32.totalorder %s19, 1
    %p215 = por %p213, %p214
    %p216 = scmp.ne.s32.totalorder %s205, %s206
    %p217 = scmp.eq.s32.totalorder %s19, 0
    %p218 = por %p216, %p217
    %p219 = scmp.ne.s32.totalorder %s205, %s206
    %p220 = scmp.eq.s32.totalorder %s20, 1
    %p221 = por %p219, %p220
    %p223 = scmp.ne.s32.totalorder %s206, %s222
    %p224 = scmp.eq.s32.totalorder %s20, 0
    %p225 = por %p223, %p224
    %p226 = scmp.le.s32.totalorder 1, %s14
    %p227 = scmp.lt.s32.totalorder %s14, 3
    %p228 = pnand %p226, %p227
    %p229 = pneg %p228
    // Predicated region
    $region9: #{bert_binary_classifier_forward.5} parent=5 // pred_check
      _
    $region10: #{bert_binary_classifier_forward.5} parent=5 // pred_check_branch
      %231 = sbr.rel (%p228) target = $region12
    $region11: #{bert_binary_classifier_forward.5} parent=5 // pred_region
      %s232 = ssub.s32 %s14, 1
      // Predicated region
      $region13: #{bert_binary_classifier_forward.5} parent=11 // pred_check
        %p233 = pneg %p87
      $region14: #{bert_binary_classifier_forward.5} parent=11 // pred_check_branch
        %235 = sbr.rel (%p233) target = $region16
      $region15: #{bert_binary_classifier_forward.5} parent=11 // pred_region
        _
      $region16: #{bert_binary_classifier_forward.5} parent=11 // pred_fallthru
        _
      // Predicated region
      $region17: #{bert_binary_classifier_forward.5} parent=11 // pred_check
        %p236 = pneg %p108
      $region18: #{bert_binary_classifier_forward.5} parent=11 // pred_check_branch
        %238 = sbr.rel (%p236) target = $region20
      $region19: #{bert_binary_classifier_forward.5} parent=11 // pred_region
        _
      $region20: #{bert_binary_classifier_forward.5} parent=11 // pred_fallthru
        _
      // Predicated region
      $region21: #{bert_binary_classifier_forward.5} parent=11 // pred_check
        %p239 = pneg %p129
      $region22: #{bert_binary_classifier_forward.5} parent=11 // pred_check_branch
        %241 = sbr.rel (%p239) target = $region24
      $region23: #{bert_binary_classifier_forward.5} parent=11 // pred_region
        _
      $region24: #{bert_binary_classifier_forward.5} parent=11 // pred_fallthru
        _
      // Predicated region
      $region25: #{bert_binary_classifier_forward.5} parent=11 // pred_check
        %p242 = pneg %p150
      $region26: #{bert_binary_classifier_forward.5} parent=11 // pred_check_branch
        %244 = sbr.rel (%p242) target = $region28
      $region27: #{bert_binary_classifier_forward.5} parent=11 // pred_region
        _
      $region28: #{bert_binary_classifier_forward.5} parent=11 // pred_fallthru
        _
      // Predicated region
      $region29: #{bert_binary_classifier_forward.5} parent=11 // pred_check
        %p245 = pneg %p171
      $region30: #{bert_binary_classifier_forward.5} parent=11 // pred_check_branch
        %247 = sbr.rel (%p245) target = $region32
      $region31: #{bert_binary_classifier_forward.5} parent=11 // pred_region
        _
      $region32: #{bert_binary_classifier_forward.5} parent=11 // pred_fallthru
        _
      // Predicated region
      $region33: #{bert_binary_classifier_forward.5} parent=11 // pred_check
        %p248 = pneg %p192
      $region34: #{bert_binary_classifier_forward.5} parent=11 // pred_check_branch
        %250 = sbr.rel (%p248) target = $region36
      $region35: #{bert_binary_classifier_forward.5} parent=11 // pred_region
        _
      $region36: #{bert_binary_classifier_forward.5} parent=11 // pred_fallthru
        _
    $region12: #{bert_binary_classifier_forward.5} parent=5 // pred_fallthru
      _
    %p251 = scmp.lt.s32.totalorder %s14, 2
    // Predicated region
    $region37: #{bert_binary_classifier_forward.5} parent=5 // pred_check
      %p252 = pneg %p251
    $region38: #{bert_binary_classifier_forward.5} parent=5 // pred_check_branch
      %254 = sbr.rel (%p252) target = $region40
    $region39: #{bert_binary_classifier_forward.5} parent=5 // pred_region
      // Predicated region
      $region41: #{bert_binary_classifier_forward.5} parent=39 // pred_check
        %p255 = pneg %p34
      $region42: #{bert_binary_classifier_forward.5} parent=39 // pred_check_branch
        %257 = sbr.rel (%p255) target = $region44
      $region43: #{bert_binary_classifier_forward.5} parent=39 // pred_region
        %p258 = scmp.lt.s32.totalorder %s14, 1
        %s259 = scalar_select %p258, %s14, 1
        %s260 = smul.addr %s259, 4
        %s261 = scalar_lea.vmem %s0, %s260
      $region44: #{bert_binary_classifier_forward.5} parent=39 // pred_fallthru
        _
      // Predicated region
      $region45: #{bert_binary_classifier_forward.5} parent=39 // pred_check
        %p262 = pneg %p60
      $region46: #{bert_binary_classifier_forward.5} parent=39 // pred_check_branch
        %264 = sbr.rel (%p262) target = $region48
      $region47: #{bert_binary_classifier_forward.5} parent=39 // pred_region
        %p265 = scmp.lt.s32.totalorder %s14, 1
        %s266 = scalar_select %p265, %s14, 1
        %s267 = scalar_lea.vmem %s1, %s266
      $region48: #{bert_binary_classifier_forward.5} parent=39 // pred_fallthru
        _
    $region40: #{bert_binary_classifier_forward.5} parent=5 // pred_fallthru
      _
    %p268 = scmp.le.s32.totalorder 1, %s14
    %p269 = scmp.lt.s32.totalorder %s14, 3
    %p270 = pnand %p268, %p269
    %p271 = pneg %p270
    // Predicated region
    $region49: #{bert_binary_classifier_forward.5} parent=5 // pred_check
      _
    $region50: #{bert_binary_classifier_forward.5} parent=5 // pred_check_branch
      %273 = sbr.rel (%p270) target = $region52
    $region51: #{bert_binary_classifier_forward.5} parent=5 // pred_region
      %s274 = ssub.s32 %s14, 1
      %p275 = scmp.lt.s32.totalorder %s19, 1
      %s276 = scalar_select %p275, %s19, 1
      %s277 = smul.addr %s276, 4
      %s278 = scalar_lea.vmem %s0, %s277
      %p279 = pneg %p40
      %p280 = pneg %p37
      %p281 = scmp.lt.s32.totalorder %s19, 1
      %s282 = scalar_select %p281, %s19, 1
      %s283 = scalar_lea.vmem %s1, %s282
      %p284 = pneg %p66
      %p285 = pneg %p63
      %p286 = pneg %p87
      %p287 = pneg %p84
      %p288 = pneg %p108
      %p289 = pneg %p105
      %p290 = pneg %p129
      %p291 = pneg %p126
      %p292 = pneg %p150
      %p293 = pneg %p147
      %p294 = pneg %p171
      %p295 = pneg %p168
      %p296 = pneg %p192
      %p297 = pneg %p189
      %p298 = pneg %p218
      %p299 = pneg %p215
      %p300 = scmp.lt.s32.totalorder %s19, 1
      %s301 = scalar_select %p300, %s19, 1
      %s302 = smul.addr %s301, 4
      %s303 = scalar_lea.vmem %s8, %s302
      %p304 = scmp.lt.s32.totalorder %s19, 1
      %s305 = scalar_select %p304, %s19, 1
      %s306 = smul.addr %s305, 4
      %s307 = scalar_lea.vmem %s0, %s306
      %p308 = scmp.lt.s32.totalorder %s19, 1
      %s309 = scalar_select %p308, %s19, 1
      %s310 = scalar_lea.vmem %s1, %s309
      %p311 = scmp.lt.s32.totalorder %s19, 1
      %s312 = scalar_select %p311, %s19, 1
      %s313 = smul.addr %s312, 4
      %s314 = scalar_lea.vmem %s8, %s313
      %v316 = vld [vmem:[%s307] sm:$0xf]
      %v317 = vld [vmem:[%s6] sm:$0xff]
      %v318 = vld [vmem:[%s6 + $0x8] sm:$0x1]
      %v319 = vld [vmem:[%s2] sm:$0xff]
      %v320 = vld [vmem:[%s2 + $0x8] sm:$0xf]
      %v321 = vld [vmem:[%s2 + $0xc] sm:$0xff]
      %v322 = vld [vmem:[%s2 + $0x14] sm:$0xf]
      %v323 = vld [vmem:[%s2 + $0x18] sm:$0xff]
      %v324 = vld [vmem:[%s2 + $0x20] sm:$0xf]
      %v325 = vld [vmem:[%s2 + $0x24] sm:$0xff]
      %v326 = vld [vmem:[%s2 + $0x2c] sm:$0xf]
      %v327 = vld [vmem:[%s2 + $0x30] sm:$0xff]
      %v328 = vld [vmem:[%s2 + $0x38] sm:$0xf]
      %v329 = vld [vmem:[%s2 + $0x3c] sm:$0xff]
      %v330 = vld [vmem:[%s2 + $0x44] sm:$0xf]
      %v331 = vld [vmem:[%s2 + $0x48] sm:$0xff]
      %v332 = vld [vmem:[%s2 + $0x50] sm:$0xf]
      %v333 = vld [vmem:[%s2 + $0x54] sm:$0xff]
      %v334 = vld [vmem:[%s2 + $0x5c] sm:$0xf]
      %v335 = vld [vmem:[%s2 + $0x60] sm:$0xff]
      %v336 = vld [vmem:[%s2 + $0x68] sm:$0xf]
      %v337 = vld [vmem:[%s2 + $0x6c] sm:$0xff]
      %v338 = vld [vmem:[%s2 + $0x74] sm:$0xf]
      %v339 = vld [vmem:[%s2 + $0x78] sm:$0xff]
      %v340 = vld [vmem:[%s2 + $0x80] sm:$0xf]
      %v341 = vld [vmem:[%s2 + $0x84] sm:$0xff]
      %v342 = vld [vmem:[%s2 + $0x8c] sm:$0xf]
      %v343 = vld [vmem:[%s2 + $0x90] sm:$0xff]
      %v344 = vld [vmem:[%s2 + $0x98] sm:$0xf]
      %v345 = vld [vmem:[%s2 + $0x9c] sm:$0xff]
      %v346 = vld [vmem:[%s2 + $0xa4] sm:$0xf]
      %v347 = vld [vmem:[%s2 + $0xa8] sm:$0xff]
      %v348 = vld [vmem:[%s2 + $0xb0] sm:$0xf]
      %v349 = vld [vmem:[%s2 + $0xb4] sm:$0xff]
      %v350 = vld [vmem:[%s2 + $0xbc] sm:$0xf]
      %v383 = vunpack.c.l.b16 %v319
      %v384 = vunpack.c.h.b16 %v319
      %v385 = vunpack.c.l.b16 %v320
      %v386 = vunpack.c.l.b16 %v321
      %v387 = vunpack.c.h.b16 %v321
      %v388 = vunpack.c.l.b16 %v322
      %v389 = vunpack.c.l.b16 %v323
      %v390 = vunpack.c.h.b16 %v323
      %v391 = vunpack.c.l.b16 %v324
      %v392 = vunpack.c.l.b16 %v325
      %v393 = vunpack.c.h.b16 %v325
      %v394 = vunpack.c.l.b16 %v326
      %v395 = vunpack.c.l.b16 %v327
      %v396 = vunpack.c.h.b16 %v327
      %v397 = vunpack.c.l.b16 %v328
      %v398 = vunpack.c.l.b16 %v329
      %v399 = vunpack.c.h.b16 %v329
      %v400 = vunpack.c.l.b16 %v330
      %v401 = vunpack.c.l.b16 %v331
      %v402 = vunpack.c.h.b16 %v331
      %v403 = vunpack.c.l.b16 %v332
      %v404 = vunpack.c.l.b16 %v333
      %v405 = vunpack.c.h.b16 %v333
      %v406 = vunpack.c.l.b16 %v334
      %v407 = vunpack.c.l.b16 %v335
      %v408 = vunpack.c.h.b16 %v335
      %v409 = vunpack.c.l.b16 %v336
      %v410 = vunpack.c.l.b16 %v337
      %v411 = vunpack.c.h.b16 %v337
      %v412 = vunpack.c.l.b16 %v338
      %v413 = vunpack.c.l.b16 %v339
      %v414 = vunpack.c.h.b16 %v339
      %v415 = vunpack.c.l.b16 %v340
      %v416 = vunpack.c.l.b16 %v341
      %v417 = vunpack.c.h.b16 %v341
      %v418 = vunpack.c.l.b16 %v342
      %v419 = vunpack.c.l.b16 %v343
      %v420 = vunpack.c.h.b16 %v343
      %v421 = vunpack.c.l.b16 %v344
      %v422 = vunpack.c.l.b16 %v345
      %v423 = vunpack.c.h.b16 %v345
      %v424 = vunpack.c.l.b16 %v346
      %v425 = vunpack.c.l.b16 %v347
      %v426 = vunpack.c.h.b16 %v347
      %v427 = vunpack.c.l.b16 %v348
      %v428 = vunpack.c.l.b16 %v349
      %v429 = vunpack.c.h.b16 %v349
      %v430 = vunpack.c.l.b16 %v350
      %v431 = vpack.c.b16 %v386, %v383
      %v432 = vpack.c.b16 %v387, %v384
      %v433 = vpack.c.b16 %v388, %v385
      %v434 = vpack.c.b16 %v392, %v389
      %v435 = vpack.c.b16 %v393, %v390
      %v436 = vpack.c.b16 %v394, %v391
      %v437 = vpack.c.b16 %v398, %v395
      %v438 = vpack.c.b16 %v399, %v396
      %v439 = vpack.c.b16 %v400, %v397
      %v440 = vpack.c.b16 %v404, %v401
      %v441 = vpack.c.b16 %v405, %v402
      %v442 = vpack.c.b16 %v406, %v403
      %v443 = vpack.c.b16 %v410, %v407
      %v444 = vpack.c.b16 %v411, %v408
      %v445 = vpack.c.b16 %v412, %v409
      %v446 = vpack.c.b16 %v416, %v413
      %v447 = vpack.c.b16 %v417, %v414
      %v448 = vpack.c.b16 %v418, %v415
      %v449 = vpack.c.b16 %v422, %v419
      %v450 = vpack.c.b16 %v423, %v420
      %v451 = vpack.c.b16 %v424, %v421
      %v452 = vpack.c.b16 %v428, %v425
      %v453 = vpack.c.b16 %v429, %v426
      %v454 = vpack.c.b16 %v430, %v427
      %479 = vmatprep.subr.bf16.mxu0 %v432
      %480 = vmatpush1.bf16.msra.mxu0 %v431
      %481 = vmatprep.subr.bf16.mxu0 %v435
      %482 = vmatpush1.bf16.msra.mxu0 %v434
      %483 = vmatprep.subr.bf16.mxu0 %v438
      %484 = vmatpush1.bf16.msra.mxu0 %v437
      %485 = vmatprep.subr.bf16.mxu0 %v441
      %486 = vmatpush1.bf16.msra.mxu0 %v440
      %487 = vmatprep.subr.bf16.mxu0 %v444
      %488 = vmatpush1.bf16.msra.mxu0 %v443
      %489 = vmatprep.subr.bf16.mxu0 %v447
      %490 = vmatpush1.bf16.msra.mxu0 %v446
      %491 = vmatprep.subr.bf16.mxu0 %v450
      %492 = vmatpush1.bf16.msra.mxu0 %v449
      %493 = vmatprep.subr.bf16.mxu0 %v453
      %494 = vmatpush1.bf16.msra.mxu0 %v452
      %495 = vmatprep.subr.bf16.mxu0 0
      %496 = vmatpush1.bf16.msra.mxu0 0
      %497 = vmatprep.subr.bf16.mxu0 0
      %498 = vmatpush1.bf16.msra.mxu0 0
      %499 = vmatprep.subr.bf16.mxu0 0
      %500 = vmatpush1.bf16.msra.mxu0 0
      %501 = vmatprep.subr.bf16.mxu0 0
      %502 = vmatpush1.bf16.msra.mxu0 0
      %503 = vmatprep.subr.bf16.mxu0 0
      %504 = vmatpush1.bf16.msra.mxu0 0
      %505 = vmatprep.subr.bf16.mxu0 0
      %506 = vmatpush1.bf16.msra.mxu0 0
      %507 = vmatprep.subr.bf16.mxu0 0
      %508 = vmatpush1.bf16.msra.mxu0 0
      %509 = vmatprep.subr.bf16.mxu0 0
      %510 = vmatpush1.bf16.msra.mxu0 0
      %511 = vmatprep.mubr.bf16.mxu0 0
      %512 = vmatmul.mubr.bf16.gmra.mrb[0].mxu0 %v316
      %v513 = vpop.f32.mrb[0].mxu0
      %v514 = vadd.f32 0.0, %v513
      %v515 = vpop.f32.mrb[0].mxu0
      %v516 = vadd.f32 0.0, %v515
      %v517 = vpop.f32.mrb[0].mxu0
      %v518 = vpop.f32.mrb[0].mxu0
      %519 = vdwg.mxu0
      %520 = vmatprep.subr.bf16.mxu0 0
      %521 = vmatpush1.bf16.msra.mxu0 %v433
      %522 = vmatprep.subr.bf16.mxu0 0
      %523 = vmatpush1.bf16.msra.mxu0 %v436
      %524 = vmatprep.subr.bf16.mxu0 0
      %525 = vmatpush1.bf16.msra.mxu0 %v439
      %526 = vmatprep.subr.bf16.mxu0 0
      %527 = vmatpush1.bf16.msra.mxu0 %v442
      %528 = vmatprep.subr.bf16.mxu0 0
      %529 = vmatpush1.bf16.msra.mxu0 %v445
      %530 = vmatprep.subr.bf16.mxu0 0
      %531 = vmatpush1.bf16.msra.mxu0 %v448
      %532 = vmatprep.subr.bf16.mxu0 0
      %533 = vmatpush1.bf16.msra.mxu0 %v451
      %534 = vmatprep.subr.bf16.mxu0 0
      %535 = vmatpush1.bf16.msra.mxu0 %v454
      %536 = vmatprep.subr.bf16.mxu0 0
      %537 = vmatpush1.bf16.msra.mxu0 0
      %538 = vmatprep.subr.bf16.mxu0 0
      %539 = vmatpush1.bf16.msra.mxu0 0
      %540 = vmatprep.subr.bf16.mxu0 0
      %541 = vmatpush1.bf16.msra.mxu0 0
      %542 = vmatprep.subr.bf16.mxu0 0
      %543 = vmatpush1.bf16.msra.mxu0 0
      %544 = vmatprep.subr.bf16.mxu0 0
      %545 = vmatpush1.bf16.msra.mxu0 0
      %546 = vmatprep.subr.bf16.mxu0 0
      %547 = vmatpush1.bf16.msra.mxu0 0
      %548 = vmatprep.subr.bf16.mxu0 0
      %549 = vmatpush1.bf16.msra.mxu0 0
      %550 = vmatprep.subr.bf16.mxu0 0
      %551 = vmatpush1.bf16.msra.mxu0 0
      %552 = vmatprep.mubr.bf16.mxu0 0
      %553 = vmatmul.mubr.bf16.gmra.mrb[0].mxu0 %v316
      %v554 = vpop.f32.mrb[0].mxu0
      %v555 = vadd.f32 0.0, %v554
      %v556 = vpop.f32.mrb[0].mxu0
      %v557 = vpop.f32.mrb[0].mxu0
      %v558 = vpop.f32.mrb[0].mxu0
      %559 = vdwg.mxu0
      %v560 = vlaneseq
      %v561 = vshrl.u32 %v560, 7
      %v562 = vsub.s32 0, %v561
      %v563 = vrot.slane %v317, %v562
      %v564 = vadd.f32 %v514, %v563
      %v565 = vpack.c.bf16 %v564, %v564
      %v566 = vlaneseq
      %v567 = vshrl.u32 %v566, 7
      %v568 = vsub.s32 1, %v567
      %v569 = vrot.slane %v317, %v568
      %v570 = vadd.f32 %v516, %v569
      %v571 = vpack.c.bf16 %v570, %v570
      %v572 = vlaneseq
      %v573 = vshrl.u32 %v572, 7
      %v574 = vsub.s32 2, %v573
      %v575 = vrot.slane %v317, %v574
      %v576 = vadd.f32 %v555, %v575
      %v577 = vpack.c.bf16 %v576, %v576
      %v578 = vld [vmem:[%s310] sm:$0x1]
      %v580 = vlaneseq
      %v581 = vshrl.u32 %v580, 7
      %v582 = vsub.s32 0, %v581
      %v583 = vrot.slane %v578, %v582
      %v585 = vld [vmem:[%s3] sm:$0xf]
      %v586 = vld [vmem:[%s3 + $0x4] sm:$0xf]
      %v587 = vld [vmem:[%s3 + $0x8] sm:$0xf]
      %v588 = vld [vmem:[%s3 + $0xc] sm:$0xf]
      %v589 = vld [vmem:[%s3 + $0x10] sm:$0xf]
      %v590 = vld [vmem:[%s3 + $0x14] sm:$0xf]
      %v591 = vld [vmem:[%s3 + $0x18] sm:$0xf]
      %v592 = vld [vmem:[%s3 + $0x1c] sm:$0xf]
      %v593 = vld [vmem:[%s3 + $0x20] sm:$0xf]
      %v594 = vld [vmem:[%s3 + $0x24] sm:$0xf]
      %v595 = vld [vmem:[%s3 + $0x28] sm:$0xf]
      %v596 = vld [vmem:[%s3 + $0x2c] sm:$0xf]
      %v597 = vld [vmem:[%s3 + $0x30] sm:$0xf]
      %v598 = vld [vmem:[%s3 + $0x34] sm:$0xf]
      %v599 = vld [vmem:[%s3 + $0x38] sm:$0xf]
      %v600 = vld [vmem:[%s3 + $0x3c] sm:$0xf]
      %vm601 = vcmask 261120
      %v603 = vsel %vm601, %v565, 0
      %v606 = vsel %vm601, %v571, 0
      %608 = vmatprep.subr.bf16.mxu0 0
      %609 = vmatpush1.bf16.xpose.msra.mxu0 %v606
      %610 = vmatprep.subr.bf16.mxu0 0
      %611 = vmatpush1.bf16.xpose.msra.mxu0 0
      %612 = vmatprep.subr.bf16.mxu0 0
      %613 = vmatpush1.bf16.xpose.msra.mxu0 0
      %614 = vmatprep.subr.bf16.mxu0 0
      %615 = vmatpush1.bf16.xpose.msra.mxu0 0
      %616 = vmatprep.subr.bf16.mxu0 0
      %617 = vmatpush1.bf16.xpose.msra.mxu0 0
      %618 = vmatprep.subr.bf16.mxu0 0
      %619 = vmatpush1.bf16.xpose.msra.mxu0 0
      %620 = vmatprep.subr.bf16.mxu0 0
      %621 = vmatpush1.bf16.xpose.msra.mxu0 0
      %622 = vmatprep.subr.bf16.mxu0 0
      %623 = vmatpush1.bf16.xpose.msra.mxu0 0
      %624 = vmatprep.subr.bf16.mxu0 0
      %625 = vmatpush1.bf16.xpose.msra.mxu0 0
      %626 = vmatprep.subr.bf16.mxu0 0
      %627 = vmatpush1.bf16.xpose.msra.mxu0 0
      %628 = vmatprep.subr.bf16.mxu0 0
      %629 = vmatpush1.bf16.xpose.msra.mxu0 0
      %630 = vmatprep.subr.bf16.mxu0 0
      %631 = vmatpush1.bf16.xpose.msra.mxu0 0
      %632 = vmatprep.subr.bf16.mxu0 0
      %633 = vmatpush1.bf16.xpose.msra.mxu0 0
      %634 = vmatprep.subr.bf16.mxu0 0
      %635 = vmatpush1.bf16.xpose.msra.mxu0 0
      %636 = vmatprep.subr.bf16.mxu0 0
      %637 = vmatpush1.bf16.xpose.msra.mxu0 0
      %638 = vmatprep.subr.bf16.mxu0 0
      %639 = vmatpush1.bf16.xpose.msra.mxu0 0
      %640 = vmatprep.mubr.bf16.mxu0 0
      %641 = vmatmul.mubr.bf16.gmra.mrb[0].mxu0 %v603
      %v642 = vpop.f32.mrb[0].mxu0
      %v643 = vadd.f32 0.0, %v642
      %v644 = vpop.f32.mrb[0].mxu0
      %v645 = vpop.f32.mrb[0].mxu0
      %v646 = vpop.f32.mrb[0].mxu0
      %647 = vdwg.mxu0
      %v648 = vmul.f32 %v643, 0.17677669
      %v649 = vadd.f32 %v648, %v583
      %vm650 = vcmask 64512
      %v651 = vsel %vm650, %v649, -inf
      %652 = vmax.xlane.f32.xlu0 %v651
      %v653 = vpop.xlane.xlu0 %652
      %v654 = vsub.f32 %v649, %v653
      %v655 = vmul.f32 %v654, 1.442695
      %v656 = vpow.pop %v655
      %v657 = vsel %vm650, %v656, 0.0
      %658 = vadd.xlane.f32.xlu0 %v657
      %v659 = vpop.xlane.xlu0 %658
      %v660 = vrcp.pop %v659
      %v661 = vmul.f32 %v656, %v660
      %v662 = vpack.c.bf16 %v661, %v661
      %v664 = vsel %vm650, %v662, 0
      %vm666 = vcmask 1043456
      %v668 = vsel %vm666, %v577, 0
      %670 = vmatprep.subr.bf16.mxu0 0
      %671 = vmatpush1.bf16.msra.mxu0 %v668
      %672 = vmatprep.subr.bf16.mxu0 0
      %673 = vmatpush1.bf16.msra.mxu0 0
      %674 = vmatprep.subr.bf16.mxu0 0
      %675 = vmatpush1.bf16.msra.mxu0 0
      %676 = vmatprep.subr.bf16.mxu0 0
      %677 = vmatpush1.bf16.msra.mxu0 0
      %678 = vmatprep.subr.bf16.mxu0 0
      %679 = vmatpush1.bf16.msra.mxu0 0
      %680 = vmatprep.subr.bf16.mxu0 0
      %681 = vmatpush1.bf16.msra.mxu0 0
      %682 = vmatprep.subr.bf16.mxu0 0
      %683 = vmatpush1.bf16.msra.mxu0 0
      %684 = vmatprep.subr.bf16.mxu0 0
      %685 = vmatpush1.bf16.msra.mxu0 0
      %686 = vmatprep.subr.bf16.mxu0 0
      %687 = vmatpush1.bf16.msra.mxu0 0
      %688 = vmatprep.subr.bf16.mxu0 0
      %689 = vmatpush1.bf16.msra.mxu0 0
      %690 = vmatprep.subr.bf16.mxu0 0
      %691 = vmatpush1.bf16.msra.mxu0 0
      %692 = vmatprep.subr.bf16.mxu0 0
      %693 = vmatpush1.bf16.msra.mxu0 0
      %694 = vmatprep.subr.bf16.mxu0 0
      %695 = vmatpush1.bf16.msra.mxu0 0
      %696 = vmatprep.subr.bf16.mxu0 0
      %697 = vmatpush1.bf16.msra.mxu0 0
      %698 = vmatprep.subr.bf16.mxu0 0
      %699 = vmatpush1.bf16.msra.mxu0 0
      %700 = vmatprep.subr.bf16.mxu0 0
      %701 = vmatpush1.bf16.msra.mxu0 0
      %702 = vmatprep.mubr.bf16.mxu0 0
      %703 = vmatmul.mubr.bf16.gmra.mrb[0].mxu0 %v664
      %v704 = vpop.f32.mrb[0].mxu0
      %v705 = vadd.f32 0.0, %v704
      %v706 = vpop.f32.mrb[0].mxu0
      %v707 = vpop.f32.mrb[0].mxu0
      %v708 = vpop.f32.mrb[0].mxu0
      %709 = vdwg.mxu0
      %v710 = vpack.c.bf16 %v705, %v705
      %712 = vrot.lane.b32.xlu0 %v565, 96
      %v713 = vpop.permute.xlu0 %712
      %715 = vrot.lane.b32.xlu0 %v571, 96
      %v716 = vpop.permute.xlu0 %715
      %v718 = vsel %vm601, %v713, 0
      %v721 = vsel %vm601, %v716, 0
      %723 = vmatprep.subr.bf16.mxu0 0
      %724 = vmatpush1.bf16.xpose.msra.mxu0 %v721
      %725 = vmatprep.subr.bf16.mxu0 0
      %726 = vmatpush1.bf16.xpose.msra.mxu0 0
      %727 = vmatprep.subr.bf16.mxu0 0
      %728 = vmatpush1.bf16.xpose.msra.mxu0 0
      %729 = vmatprep.subr.bf16.mxu0 0
      %730 = vmatpush1.bf16.xpose.msra.mxu0 0
      %731 = vmatprep.subr.bf16.mxu0 0
      %732 = vmatpush1.bf16.xpose.msra.mxu0 0
      %733 = vmatprep.subr.bf16.mxu0 0
      %734 = vmatpush1.bf16.xpose.msra.mxu0 0
      %735 = vmatprep.subr.bf16.mxu0 0
      %736 = vmatpush1.bf16.xpose.msra.mxu0 0
      %737 = vmatprep.subr.bf16.mxu0 0
      %738 = vmatpush1.bf16.xpose.msra.mxu0 0
      %739 = vmatprep.subr.bf16.mxu0 0
      %740 = vmatpush1.bf16.xpose.msra.mxu0 0
      %741 = vmatprep.subr.bf16.mxu0 0
      %742 = vmatpush1.bf16.xpose.msra.mxu0 0
      %743 = vmatprep.subr.bf16.mxu0 0
      %744 = vmatpush1.bf16.xpose.msra.mxu0 0
      %745 = vmatprep.subr.bf16.mxu0 0
      %746 = vmatpush1.bf16.xpose.msra.mxu0 0
      %747 = vmatprep.subr.bf16.mxu0 0
      %748 = vmatpush1.bf16.xpose.msra.mxu0 0
      %749 = vmatprep.subr.bf16.mxu0 0
      %750 = vmatpush1.bf16.xpose.msra.mxu0 0
      %751 = vmatprep.subr.bf16.mxu0 0
      %752 = vmatpush1.bf16.xpose.msra.mxu0 0
      %753 = vmatprep.subr.bf16.mxu0 0
      %754 = vmatpush1.bf16.xpose.msra.mxu0 0
      %755 = vmatprep.mubr.bf16.mxu0 0
      %756 = vmatmul.mubr.bf16.gmra.mrb[0].mxu0 %v718
      %v757 = vpop.f32.mrb[0].mxu0
      %v758 = vadd.f32 0.0, %v757
      %v759 = vpop.f32.mrb[0].mxu0
      %v760 = vpop.f32.mrb[0].mxu0
      %v761 = vpop.f32.mrb[0].mxu0
      %762 = vdwg.mxu0
      %v763 = vmul.f32 %v758, 0.17677669
      %v764 = vadd.f32 %v763, %v583
      %v765 = vsel %vm650, %v764, -inf
      %766 = vmax.xlane.f32.xlu0 %v765
      %v767 = vpop.xlane.xlu0 %766
      %v768 = vsub.f32 %v764, %v767
      %v769 = vmul.f32 %v768, 1.442695
      %v770 = vpow.pop %v769
      %v771 = vsel %vm650, %v770, 0.0
      %772 = vadd.xlane.f32.xlu0 %v771
      %v773 = vpop.xlane.xlu0 %772
      %v774 = vrcp.pop %v773
      %v775 = vmul.f32 %v770, %v774
      %v776 = vpack.c.bf16 %v775, %v775
      %778 = vrot.lane.b32.xlu0 %v577, 96
      %v779 = vpop.permute.xlu0 %778
      %v781 = vsel %vm650, %v776, 0
      %v784 = vsel %vm666, %v779, 0
      %786 = vmatprep.subr.bf16.mxu0 0
      %787 = vmatpush1.bf16.msra.mxu0 %v784
      %788 = vmatprep.subr.bf16.mxu0 0
      %789 = vmatpush1.bf16.msra.mxu0 0
      %790 = vmatprep.subr.bf16.mxu0 0
      %791 = vmatpush1.bf16.msra.mxu0 0
      %792 = vmatprep.subr.bf16.mxu0 0
      %793 = vmatpush1.bf16.msra.mxu0 0
      %794 = vmatprep.subr.bf16.mxu0 0
      %795 = vmatpush1.bf16.msra.mxu0 0
      %796 = vmatprep.subr.bf16.mxu0 0
      %797 = vmatpush1.bf16.msra.mxu0 0
      %798 = vmatprep.subr.bf16.mxu0 0
      %799 = vmatpush1.bf16.msra.mxu0 0
      %800 = vmatprep.subr.bf16.mxu0 0
      %801 = vmatpush1.bf16.msra.mxu0 0
      %802 = vmatprep.subr.bf16.mxu0 0
      %803 = vmatpush1.bf16.msra.mxu0 0
      %804 = vmatprep.subr.bf16.mxu0 0
      %805 = vmatpush1.bf16.msra.mxu0 0
      %806 = vmatprep.subr.bf16.mxu0 0
      %807 = vmatpush1.bf16.msra.mxu0 0
      %808 = vmatprep.subr.bf16.mxu0 0
      %809 = vmatpush1.bf16.msra.mxu0 0
      %810 = vmatprep.subr.bf16.mxu0 0
      %811 = vmatpush1.bf16.msra.mxu0 0
      %812 = vmatprep.subr.bf16.mxu0 0
      %813 = vmatpush1.bf16.msra.mxu0 0
      %814 = vmatprep.subr.bf16.mxu0 0
      %815 = vmatpush1.bf16.msra.mxu0 0
      %816 = vmatprep.subr.bf16.mxu0 0
      %817 = vmatpush1.bf16.msra.mxu0 0
      %818 = vmatprep.mubr.bf16.mxu0 0
      %819 = vmatmul.mubr.bf16.gmra.mrb[0].mxu0 %v781
      %v820 = vpop.f32.mrb[0].mxu0
      %v821 = vadd.f32 0.0, %v820
      %v822 = vpop.f32.mrb[0].mxu0
      %v823 = vpop.f32.mrb[0].mxu0
      %v824 = vpop.f32.mrb[0].mxu0
      %825 = vdwg.mxu0
      %v826 = vpack.c.bf16 %v821, %v821
      %v831 = vunpack.c.l.b16 %v589
      %v832 = vunpack.c.l.b16 %v590
      %v833 = vunpack.c.l.b16 %v591
      %v834 = vunpack.c.l.b16 %v592
      %v835 = vpack.c.b16 %v832, %v831
      %v836 = vpack.c.b16 %v834, %v833
      %v840 = vsel %vm601, %v826, 0
      %842 = vmatprep.subr.bf16.mxu0 0
      %843 = vmatpush1.bf16.msra.mxu0 %v835
      %844 = vmatprep.subr.bf16.mxu0 0
      %845 = vmatpush1.bf16.msra.mxu0 %v836
      %846 = vmatprep.subr.bf16.mxu0 0
      %847 = vmatpush1.bf16.msra.mxu0 0
      %848 = vmatprep.subr.bf16.mxu0 0
      %849 = vmatpush1.bf16.msra.mxu0 0
      %850 = vmatprep.subr.bf16.mxu0 0
      %851 = vmatpush1.bf16.msra.mxu0 0
      %852 = vmatprep.subr.bf16.mxu0 0
      %853 = vmatpush1.bf16.msra.mxu0 0
      %854 = vmatprep.subr.bf16.mxu0 0
      %855 = vmatpush1.bf16.msra.mxu0 0
      %856 = vmatprep.subr.bf16.mxu0 0
      %857 = vmatpush1.bf16.msra.mxu0 0
      %858 = vmatprep.subr.bf16.mxu0 0
      %859 = vmatpush1.bf16.msra.mxu0 0
      %860 = vmatprep.subr.bf16.mxu0 0
      %861 = vmatpush1.bf16.msra.mxu0 0
      %862 = vmatprep.subr.bf16.mxu0 0
      %863 = vmatpush1.bf16.msra.mxu0 0
      %864 = vmatprep.subr.bf16.mxu0 0
      %865 = vmatpush1.bf16.msra.mxu0 0
      %866 = vmatprep.subr.bf16.mxu0 0
      %867 = vmatpush1.bf16.msra.mxu0 0
      %868 = vmatprep.subr.bf16.mxu0 0
      %869 = vmatpush1.bf16.msra.mxu0 0
      %870 = vmatprep.subr.bf16.mxu0 0
      %871 = vmatpush1.bf16.msra.mxu0 0
      %872 = vmatprep.subr.bf16.mxu0 0
      %873 = vmatpush1.bf16.msra.mxu0 0
      %874 = vmatprep.mubr.bf16.mxu0 0
      %875 = vmatmul.mubr.bf16.gmra.mrb[0].mxu0 %v840
      %v876 = vpop.f32.mrb[0].mxu0
      %v877 = vadd.f32 0.0, %v876
      %v878 = vpop.f32.mrb[0].mxu0
      %v879 = vpop.f32.mrb[0].mxu0
      %v880 = vpop.f32.mrb[0].mxu0
      %881 = vdwg.mxu0
      %v886 = vunpack.c.l.b16 %v585
      %v887 = vunpack.c.l.b16 %v586
      %v888 = vunpack.c.l.b16 %v587
      %v889 = vunpack.c.l.b16 %v588
      %v890 = vpack.c.b16 %v887, %v886
      %v891 = vpack.c.b16 %v889, %v888
      %v895 = vsel %vm601, %v710, 0
      %897 = vmatprep.subr.bf16.mxu0 0
      %898 = vmatpush1.bf16.msra.mxu0 %v890
      %899 = vmatprep.subr.bf16.mxu0 0
      %900 = vmatpush1.bf16.msra.mxu0 %v891
      %901 = vmatprep.subr.bf16.mxu0 0
      %902 = vmatpush1.bf16.msra.mxu0 0
      %903 = vmatprep.subr.bf16.mxu0 0
      %904 = vmatpush1.bf16.msra.mxu0 0
      %905 = vmatprep.subr.bf16.mxu0 0
      %906 = vmatpush1.bf16.msra.mxu0 0
      %907 = vmatprep.subr.bf16.mxu0 0
      %908 = vmatpush1.bf16.msra.mxu0 0
      %909 = vmatprep.subr.bf16.mxu0 0
      %910 = vmatpush1.bf16.msra.mxu0 0
      %911 = vmatprep.subr.bf16.mxu0 0
      %912 = vmatpush1.bf16.msra.mxu0 0
      %913 = vmatprep.subr.bf16.mxu0 0
      %914 = vmatpush1.bf16.msra.mxu0 0
      %915 = vmatprep.subr.bf16.mxu0 0
      %916 = vmatpush1.bf16.msra.mxu0 0
      %917 = vmatprep.subr.bf16.mxu0 0
      %918 = vmatpush1.bf16.msra.mxu0 0
      %919 = vmatprep.subr.bf16.mxu0 0
      %920 = vmatpush1.bf16.msra.mxu0 0
      %921 = vmatprep.subr.bf16.mxu0 0
      %922 = vmatpush1.bf16.msra.mxu0 0
      %923 = vmatprep.subr.bf16.mxu0 0
      %924 = vmatpush1.bf16.msra.mxu0 0
      %925 = vmatprep.subr.bf16.mxu0 0
      %926 = vmatpush1.bf16.msra.mxu0 0
      %927 = vmatprep.subr.bf16.mxu0 0
      %928 = vmatpush1.bf16.msra.mxu0 0
      %929 = vmatprep.mubr.bf16.mxu0 0
      %930 = vmatmul.mubr.bf16.gmra.mrb[0].mxu0 %v895
      %v931 = vpop.f32.mrb[0].mxu0
      %v932 = vadd.f32 %v877, %v931
      %v933 = vpop.f32.mrb[0].mxu0
      %v934 = vpop.f32.mrb[0].mxu0
      %v935 = vpop.f32.mrb[0].mxu0
      %936 = vdwg.mxu0
      %937 = vrot.lane.b32.xlu0 %v565, 64
      %v938 = vpop.permute.xlu0 %937
      %939 = vrot.lane.b32.xlu0 %v571, 64
      %v940 = vpop.permute.xlu0 %939
      %v942 = vsel %vm601, %v938, 0
      %v945 = vsel %vm601, %v940, 0
      %947 = vmatprep.subr.bf16.mxu0 0
      %948 = vmatpush1.bf16.xpose.msra.mxu0 %v945
      %949 = vmatprep.subr.bf16.mxu0 0
      %950 = vmatpush1.bf16.xpose.msra.mxu0 0
      %951 = vmatprep.subr.bf16.mxu0 0
      %952 = vmatpush1.bf16.xpose.msra.mxu0 0
      %953 = vmatprep.subr.bf16.mxu0 0
      %954 = vmatpush1.bf16.xpose.msra.mxu0 0
      %955 = vmatprep.subr.bf16.mxu0 0
      %956 = vmatpush1.bf16.xpose.msra.mxu0 0
      %957 = vmatprep.subr.bf16.mxu0 0
      %958 = vmatpush1.bf16.xpose.msra.mxu0 0
      %959 = vmatprep.subr.bf16.mxu0 0
      %960 = vmatpush1.bf16.xpose.msra.mxu0 0
      %961 = vmatprep.subr.bf16.mxu0 0
      %962 = vmatpush1.bf16.xpose.msra.mxu0 0
      %963 = vmatprep.subr.bf16.mxu0 0
      %964 = vmatpush1.bf16.xpose.msra.mxu0 0
      %965 = vmatprep.subr.bf16.mxu0 0
      %966 = vmatpush1.bf16.xpose.msra.mxu0 0
      %967 = vmatprep.subr.bf16.mxu0 0
      %968 = vmatpush1.bf16.xpose.msra.mxu0 0
      %969 = vmatprep.subr.bf16.mxu0 0
      %970 = vmatpush1.bf16.xpose.msra.mxu0 0
      %971 = vmatprep.subr.bf16.mxu0 0
      %972 = vmatpush1.bf16.xpose.msra.mxu0 0
      %973 = vmatprep.subr.bf16.mxu0 0
      %974 = vmatpush1.bf16.xpose.msra.mxu0 0
      %975 = vmatprep.subr.bf16.mxu0 0
      %976 = vmatpush1.bf16.xpose.msra.mxu0 0
      %977 = vmatprep.subr.bf16.mxu0 0
      %978 = vmatpush1.bf16.xpose.msra.mxu0 0
      %979 = vmatprep.mubr.bf16.mxu0 0
      %980 = vmatmul.mubr.bf16.gmra.mrb[0].mxu0 %v942
      %v981 = vpop.f32.mrb[0].mxu0
      %v982 = vadd.f32 0.0, %v981
      %v983 = vpop.f32.mrb[0].mxu0
      %v984 = vpop.f32.mrb[0].mxu0
      %v985 = vpop.f32.mrb[0].mxu0
      %986 = vdwg.mxu0
      %v987 = vmul.f32 %v982, 0.17677669
      %v988 = vadd.f32 %v987, %v583
      %v989 = vsel %vm650, %v988, -inf
      %990 = vmax.xlane.f32.xlu0 %v989
      %v991 = vpop.xlane.xlu0 %990
      %v992 = vsub.f32 %v988, %v991
      %v993 = vmul.f32 %v992, 1.442695
      %v994 = vpow.pop %v993
      %v995 = vsel %vm650, %v994, 0.0
      %996 = vadd.xlane.f32.xlu0 %v995
      %v997 = vpop.xlane.xlu0 %996
      %v998 = vrcp.pop %v997
      %v999 = vmul.f32 %v994, %v998
      %v1000 = vpack.c.bf16 %v999, %v999
      %1001 = vrot.lane.b32.xlu0 %v577, 64
      %v1002 = vpop.permute.xlu0 %1001
      %v1004 = vsel %vm650, %v1000, 0
      %v1007 = vsel %vm666, %v1002, 0
      %1009 = vmatprep.subr.bf16.mxu0 0
      %1010 = vmatpush1.bf16.msra.mxu0 %v1007
      %1011 = vmatprep.subr.bf16.mxu0 0
      %1012 = vmatpush1.bf16.msra.mxu0 0
      %1013 = vmatprep.subr.bf16.mxu0 0
      %1014 = vmatpush1.bf16.msra.mxu0 0
      %1015 = vmatprep.subr.bf16.mxu0 0
      %1016 = vmatpush1.bf16.msra.mxu0 0
      %1017 = vmatprep.subr.bf16.mxu0 0
      %1018 = vmatpush1.bf16.msra.mxu0 0
      %1019 = vmatprep.subr.bf16.mxu0 0
      %1020 = vmatpush1.bf16.msra.mxu0 0
      %1021 = vmatprep.subr.bf16.mxu0 0
      %1022 = vmatpush1.bf16.msra.mxu0 0
      %1023 = vmatprep.subr.bf16.mxu0 0
      %1024 = vmatpush1.bf16.msra.mxu0 0
      %1025 = vmatprep.subr.bf16.mxu0 0
      %1026 = vmatpush1.bf16.msra.mxu0 0
      %1027 = vmatprep.subr.bf16.mxu0 0
      %1028 = vmatpush1.bf16.msra.mxu0 0
      %1029 = vmatprep.subr.bf16.mxu0 0
      %1030 = vmatpush1.bf16.msra.mxu0 0
      %1031 = vmatprep.subr.bf16.mxu0 0
      %1032 = vmatpush1.bf16.msra.mxu0 0
      %1033 = vmatprep.subr.bf16.mxu0 0
      %1034 = vmatpush1.bf16.msra.mxu0 0
      %1035 = vmatprep.subr.bf16.mxu0 0
      %1036 = vmatpush1.bf16.msra.mxu0 0
      %1037 = vmatprep.subr.bf16.mxu0 0
      %1038 = vmatpush1.bf16.msra.mxu0 0
      %1039 = vmatprep.subr.bf16.mxu0 0
      %1040 = vmatpush1.bf16.msra.mxu0 0
      %1041 = vmatprep.mubr.bf16.mxu0 0
      %1042 = vmatmul.mubr.bf16.gmra.mrb[0].mxu0 %v1004
      %v1043 = vpop.f32.mrb[0].mxu0
      %v1044 = vadd.f32 0.0, %v1043
      %v1045 = vpop.f32.mrb[0].mxu0
      %v1046 = vpop.f32.mrb[0].mxu0
      %v1047 = vpop.f32.mrb[0].mxu0
      %1048 = vdwg.mxu0
      %v1049 = vpack.c.bf16 %v1044, %v1044
      %v1054 = vunpack.c.l.b16 %v593
      %v1055 = vunpack.c.l.b16 %v594
      %v1056 = vunpack.c.l.b16 %v595
      %v1057 = vunpack.c.l.b16 %v596
      %v1058 = vpack.c.b16 %v1055, %v1054
      %v1059 = vpack.c.b16 %v1057, %v1056
      %v1063 = vsel %vm601, %v1049, 0
      %1065 = vmatprep.subr.bf16.mxu0 0
      %1066 = vmatpush1.bf16.msra.mxu0 %v1058
      %1067 = vmatprep.subr.bf16.mxu0 0
      %1068 = vmatpush1.bf16.msra.mxu0 %v1059
      %1069 = vmatprep.subr.bf16.mxu0 0
      %1070 = vmatpush1.bf16.msra.mxu0 0
      %1071 = vmatprep.subr.bf16.mxu0 0
      %1072 = vmatpush1.bf16.msra.mxu0 0
      %1073 = vmatprep.subr.bf16.mxu0 0
      %1074 = vmatpush1.bf16.msra.mxu0 0
      %1075 = vmatprep.subr.bf16.mxu0 0
      %1076 = vmatpush1.bf16.msra.mxu0 0
      %1077 = vmatprep.subr.bf16.mxu0 0
      %1078 = vmatpush1.bf16.msra.mxu0 0
      %1079 = vmatprep.subr.bf16.mxu0 0
      %1080 = vmatpush1.bf16.msra.mxu0 0
      %1081 = vmatprep.subr.bf16.mxu0 0
      %1082 = vmatpush1.bf16.msra.mxu0 0
      %1083 = vmatprep.subr.bf16.mxu0 0
      %1084 = vmatpush1.bf16.msra.mxu0 0
      %1085 = vmatprep.subr.bf16.mxu0 0
      %1086 = vmatpush1.bf16.msra.mxu0 0
      %1087 = vmatprep.subr.bf16.mxu0 0
      %1088 = vmatpush1.bf16.msra.mxu0 0
      %1089 = vmatprep.subr.bf16.mxu0 0
      %1090 = vmatpush1.bf16.msra.mxu0 0
      %1091 = vmatprep.subr.bf16.mxu0 0
      %1092 = vmatpush1.bf16.msra.mxu0 0
      %1093 = vmatprep.subr.bf16.mxu0 0
      %1094 = vmatpush1.bf16.msra.mxu0 0
      %1095 = vmatprep.subr.bf16.mxu0 0
      %1096 = vmatpush1.bf16.msra.mxu0 0
      %1097 = vmatprep.mubr.bf16.mxu0 0
      %1098 = vmatmul.mubr.bf16.gmra.mrb[0].mxu0 %v1063
      %v1099 = vpop.f32.mrb[0].mxu0
      %v1100 = vadd.f32 0.0, %v1099
      %v1101 = vpop.f32.mrb[0].mxu0
      %v1102 = vpop.f32.mrb[0].mxu0
      %v1103 = vpop.f32.mrb[0].mxu0
      %1104 = vdwg.mxu0
      %v1105 = vadd.f32 %v932, %v1100
      %1106 = vrot.lane.b32.xlu0 %v565, 32
      %v1107 = vpop.permute.xlu0 %1106
      %1108 = vrot.lane.b32.xlu0 %v571, 32
      %v1109 = vpop.permute.xlu0 %1108
      %v1111 = vsel %vm601, %v1107, 0
      %v1114 = vsel %vm601, %v1109, 0
      %1116 = vmatprep.subr.bf16.mxu0 0
      %1117 = vmatpush1.bf16.xpose.msra.mxu0 %v1114
      %1118 = vmatprep.subr.bf16.mxu0 0
      %1119 = vmatpush1.bf16.xpose.msra.mxu0 0
      %1120 = vmatprep.subr.bf16.mxu0 0
      %1121 = vmatpush1.bf16.xpose.msra.mxu0 0
      %1122 = vmatprep.subr.bf16.mxu0 0
      %1123 = vmatpush1.bf16.xpose.msra.mxu0 0
      %1124 = vmatprep.subr.bf16.mxu0 0
      %1125 = vmatpush1.bf16.xpose.msra.mxu0 0
      %1126 = vmatprep.subr.bf16.mxu0 0
      %1127 = vmatpush1.bf16.xpose.msra.mxu0 0
      %1128 = vmatprep.subr.bf16.mxu0 0
      %1129 = vmatpush1.bf16.xpose.msra.mxu0 0
      %1130 = vmatprep.subr.bf16.mxu0 0
      %1131 = vmatpush1.bf16.xpose.msra.mxu0 0
      %1132 = vmatprep.subr.bf16.mxu0 0
      %1133 = vmatpush1.bf16.xpose.msra.mxu0 0
      %1134 = vmatprep.subr.bf16.mxu0 0
      %1135 = vmatpush1.bf16.xpose.msra.mxu0 0
      %1136 = vmatprep.subr.bf16.mxu0 0
      %1137 = vmatpush1.bf16.xpose.msra.mxu0 0
      %1138 = vmatprep.subr.bf16.mxu0 0
      %1139 = vmatpush1.bf16.xpose.msra.mxu0 0
      %1140 = vmatprep.subr.bf16.mxu0 0
      %1141 = vmatpush1.bf16.xpose.msra.mxu0 0
      %1142 = vmatprep.subr.bf16.mxu0 0
      %1143 = vmatpush1.bf16.xpose.msra.mxu0 0
      %1144 = vmatprep.subr.bf16.mxu0 0
      %1145 = vmatpush1.bf16.xpose.msra.mxu0 0
      %1146 = vmatprep.subr.bf16.mxu0 0
      %1147 = vmatpush1.bf16.xpose.msra.mxu0 0
      %1148 = vmatprep.mubr.bf16.mxu0 0
      %1149 = vmatmul.mubr.bf16.gmra.mrb[0].mxu0 %v1111
      %v1150 = vpop.f32.mrb[0].mxu0
      %v1151 = vadd.f32 0.0, %v1150
      %v1152 = vpop.f32.mrb[0].mxu0
      %v1153 = vpop.f32.mrb[0].mxu0
      %v1154 = vpop.f32.mrb[0].mxu0
      %1155 = vdwg.mxu0
      %v1156 = vmul.f32 %v1151, 0.17677669
      %v1157 = vadd.f32 %v1156, %v583
      %v1158 = vsel %vm650, %v1157, -inf
      %1159 = vmax.xlane.f32.xlu0 %v1158
      %v1160 = vpop.xlane.xlu0 %1159
      %v1161 = vsub.f32 %v1157, %v1160
      %v1162 = vmul.f32 %v1161, 1.442695
      %v1163 = vpow.pop %v1162
      %v1164 = vsel %vm650, %v1163, 0.0
      %1165 = vadd.xlane.f32.xlu0 %v1164
      %v1166 = vpop.xlane.xlu0 %1165
      %v1167 = vrcp.pop %v1166
      %v1168 = vmul.f32 %v1163, %v1167
      %v1169 = vpack.c.bf16 %v1168, %v1168
      %1170 = vrot.lane.b32.xlu0 %v577, 32
      %v1171 = vpop.permute.xlu0 %1170
      %v1173 = vsel %vm650, %v1169, 0
      %v1176 = vsel %vm666, %v1171, 0
      %1178 = vmatprep.subr.bf16.mxu0 0
      %1179 = vmatpush1.bf16.msra.mxu0 %v1176
      %1180 = vmatprep.subr.bf16.mxu0 0
      %1181 = vmatpush1.bf16.msra.mxu0 0
      %1182 = vmatprep.subr.bf16.mxu0 0
      %1183 = vmatpush1.bf16.msra.mxu0 0
      %1184 = vmatprep.subr.bf16.mxu0 0
      %1185 = vmatpush1.bf16.msra.mxu0 0
      %1186 = vmatprep.subr.bf16.mxu0 0
      %1187 = vmatpush1.bf16.msra.mxu0 0
      %1188 = vmatprep.subr.bf16.mxu0 0
      %1189 = vmatpush1.bf16.msra.mxu0 0
      %1190 = vmatprep.subr.bf16.mxu0 0
      %1191 = vmatpush1.bf16.msra.mxu0 0
      %1192 = vmatprep.subr.bf16.mxu0 0
      %1193 = vmatpush1.bf16.msra.mxu0 0
      %1194 = vmatprep.subr.bf16.mxu0 0
      %1195 = vmatpush1.bf16.msra.mxu0 0
      %1196 = vmatprep.subr.bf16.mxu0 0
      %1197 = vmatpush1.bf16.msra.mxu0 0
      %1198 = vmatprep.subr.bf16.mxu0 0
      %1199 = vmatpush1.bf16.msra.mxu0 0
      %1200 = vmatprep.subr.bf16.mxu0 0
      %1201 = vmatpush1.bf16.msra.mxu0 0
      %1202 = vmatprep.subr.bf16.mxu0 0
      %1203 = vmatpush1.bf16.msra.mxu0 0
      %1204 = vmatprep.subr.bf16.mxu0 0
      %1205 = vmatpush1.bf16.msra.mxu0 0
      %1206 = vmatprep.subr.bf16.mxu0 0
      %1207 = vmatpush1.bf16.msra.mxu0 0
      %1208 = vmatprep.subr.bf16.mxu0 0
      %1209 = vmatpush1.bf16.msra.mxu0 0
      %1210 = vmatprep.mubr.bf16.mxu0 0
      %1211 = vmatmul.mubr.bf16.gmra.mrb[0].mxu0 %v1173
      %v1212 = vpop.f32.mrb[0].mxu0
      %v1213 = vadd.f32 0.0, %v1212
      %v1214 = vpop.f32.mrb[0].mxu0
      %v1215 = vpop.f32.mrb[0].mxu0
      %v1216 = vpop.f32.mrb[0].mxu0
      %1217 = vdwg.mxu0
      %v1218 = vpack.c.bf16 %v1213, %v1213
      %v1223 = vunpack.c.l.b16 %v597
      %v1224 = vunpack.c.l.b16 %v598
      %v1225 = vunpack.c.l.b16 %v599
      %v1226 = vunpack.c.l.b16 %v600
      %v1227 = vpack.c.b16 %v1224, %v1223
      %v1228 = vpack.c.b16 %v1226, %v1225
      %v1232 = vsel %vm601, %v1218, 0
      %1234 = vmatprep.subr.bf16.mxu0 0
      %1235 = vmatpush1.bf16.msra.mxu0 %v1227
      %1236 = vmatprep.subr.bf16.mxu0 0
      %1237 = vmatpush1.bf16.msra.mxu0 %v1228
      %1238 = vmatprep.subr.bf16.mxu0 0
      %1239 = vmatpush1.bf16.msra.mxu0 0
      %1240 = vmatprep.subr.bf16.mxu0 0
      %1241 = vmatpush1.bf16.msra.mxu0 0
      %1242 = vmatprep.subr.bf16.mxu0 0
      %1243 = vmatpush1.bf16.msra.mxu0 0
      %1244 = vmatprep.subr.bf16.mxu0 0
      %1245 = vmatpush1.bf16.msra.mxu0 0
      %1246 = vmatprep.subr.bf16.mxu0 0
      %1247 = vmatpush1.bf16.msra.mxu0 0
      %1248 = vmatprep.subr.bf16.mxu0 0
      %1249 = vmatpush1.bf16.msra.mxu0 0
      %1250 = vmatprep.subr.bf16.mxu0 0
      %1251 = vmatpush1.bf16.msra.mxu0 0
      %1252 = vmatprep.subr.bf16.mxu0 0
      %1253 = vmatpush1.bf16.msra.mxu0 0
      %1254 = vmatprep.subr.bf16.mxu0 0
      %1255 = vmatpush1.bf16.msra.mxu0 0
      %1256 = vmatprep.subr.bf16.mxu0 0
      %1257 = vmatpush1.bf16.msra.mxu0 0
      %1258 = vmatprep.subr.bf16.mxu0 0
      %1259 = vmatpush1.bf16.msra.mxu0 0
      %1260 = vmatprep.subr.bf16.mxu0 0
      %1261 = vmatpush1.bf16.msra.mxu0 0
      %1262 = vmatprep.subr.bf16.mxu0 0
      %1263 = vmatpush1.bf16.msra.mxu0 0
      %1264 = vmatprep.subr.bf16.mxu0 0
      %1265 = vmatpush1.bf16.msra.mxu0 0
      %1266 = vmatprep.mubr.bf16.mxu0 0
      %1267 = vmatmul.mubr.bf16.gmra.mrb[0].mxu0 %v1232
      %v1268 = vpop.f32.mrb[0].mxu0
      %v1269 = vadd.f32 0.0, %v1268
      %v1270 = vpop.f32.mrb[0].mxu0
      %v1271 = vpop.f32.mrb[0].mxu0
      %v1272 = vpop.f32.mrb[0].mxu0
      %1273 = vdwg.mxu0
      %v1274 = vadd.f32 %v1105, %v1269
      %v1275 = vunpack.c.l.bf16 %v316
      %v1276 = vadd.f32 %v1275, %v1274
      %v1277 = vlaneseq
      %v1278 = vshrl.u32 %v1277, 7
      %v1279 = vsub.s32 3, %v1278
      %v1280 = vrot.slane %v317, %v1279
      %v1281 = vadd.f32 %v1276, %v1280
      %1282 = vadd.xlane.f32.xlu0 %v1281
      %v1283 = vpop.xlane.xlu0 %1282
      %v1284 = vrcp.pop 128.0
      %v1285 = vmul.f32 %v1283, %v1284
      %v1286 = vsub.f32 %v1281, %v1285
      %v1287 = vmul.f32 %v1286, %v1286
      %1288 = vadd.xlane.f32.xlu0 %v1287
      %v1289 = vpop.xlane.xlu0 %1288
      %v1290 = vmul.f32 %v1289, %v1284
      %v1291 = vadd.f32 %v1290, 1e-12
      %v1292 = vrsqrt.pop %v1291
      %v1293 = vmul.f32 %v1286, %v1292
      %v1294 = vlaneseq
      %v1295 = vshrl.u32 %v1294, 7
      %v1296 = vsub.s32 4, %v1295
      %v1297 = vrot.slane %v317, %v1296
      %v1298 = vmul.f32 %v1293, %v1297
      %v1299 = vlaneseq
      %v1300 = vshrl.u32 %v1299, 7
      %v1301 = vsub.s32 5, %v1300
      %v1302 = vrot.slane %v317, %v1301
      %v1303 = vadd.f32 %v1298, %v1302
      %v1304 = vpack.c.bf16 %v1303, %v1303
      %v1305 = vld [vmem:[%s4] sm:$0xff]
      %v1306 = vld [vmem:[%s4 + $0x8] sm:$0xff]
      %v1307 = vld [vmem:[%s4 + $0x10] sm:$0xff]
      %v1308 = vld [vmem:[%s4 + $0x18] sm:$0xff]
      %v1309 = vld [vmem:[%s4 + $0x20] sm:$0xff]
      %v1310 = vld [vmem:[%s4 + $0x28] sm:$0xff]
      %v1311 = vld [vmem:[%s4 + $0x30] sm:$0xff]
      %v1312 = vld [vmem:[%s4 + $0x38] sm:$0xff]
      %v1313 = vld [vmem:[%s4 + $0x40] sm:$0xff]
      %v1314 = vld [vmem:[%s4 + $0x48] sm:$0xff]
      %v1315 = vld [vmem:[%s4 + $0x50] sm:$0xff]
      %v1316 = vld [vmem:[%s4 + $0x58] sm:$0xff]
      %v1317 = vld [vmem:[%s4 + $0x60] sm:$0xff]
      %v1318 = vld [vmem:[%s4 + $0x68] sm:$0xff]
      %v1319 = vld [vmem:[%s4 + $0x70] sm:$0xff]
      %v1320 = vld [vmem:[%s4 + $0x78] sm:$0xff]
      %v1321 = vld [vmem:[%s4 + $0x80] sm:$0xff]
      %v1322 = vld [vmem:[%s4 + $0x88] sm:$0xff]
      %v1323 = vld [vmem:[%s4 + $0x90] sm:$0xff]
      %v1324 = vld [vmem:[%s4 + $0x98] sm:$0xff]
      %v1325 = vld [vmem:[%s4 + $0xa0] sm:$0xff]
      %v1326 = vld [vmem:[%s4 + $0xa8] sm:$0xff]
      %v1327 = vld [vmem:[%s4 + $0xb0] sm:$0xff]
      %v1328 = vld [vmem:[%s4 + $0xb8] sm:$0xff]
      %v1329 = vld [vmem:[%s4 + $0xc0] sm:$0xff]
      %v1330 = vld [vmem:[%s4 + $0xc8] sm:$0xff]
      %v1331 = vld [vmem:[%s4 + $0xd0] sm:$0xff]
      %v1332 = vld [vmem:[%s4 + $0xd8] sm:$0xff]
      %v1333 = vld [vmem:[%s4 + $0xe0] sm:$0xff]
      %v1334 = vld [vmem:[%s4 + $0xe8] sm:$0xff]
      %v1335 = vld [vmem:[%s4 + $0xf0] sm:$0xff]
      %v1336 = vld [vmem:[%s4 + $0xf8] sm:$0xff]
      %v1337 = vld [vmem:[%s7] sm:$0xf]
      %v1339 = vlaneseq
      %v1340 = vshrl.u32 %v1339, 7
      %v1341 = vsub.s32 0, %v1340
      %v1342 = vrot.slane %v1337, %v1341
      %v1343 = vlaneseq
      %v1344 = vshrl.u32 %v1343, 7
      %v1345 = vsub.s32 1, %v1344
      %v1346 = vrot.slane %v1337, %v1345
      %v1347 = vlaneseq
      %v1348 = vshrl.u32 %v1347, 7
      %v1349 = vsub.s32 2, %v1348
      %v1350 = vrot.slane %v1337, %v1349
      %v1351 = vlaneseq
      %v1352 = vshrl.u32 %v1351, 7
      %v1353 = vsub.s32 3, %v1352
      %v1354 = vrot.slane %v1337, %v1353
      %v1391 = vunpack.c.l.b16 %v1305
      %v1392 = vunpack.c.h.b16 %v1305
      %v1393 = vunpack.c.l.b16 %v1306
      %v1394 = vunpack.c.h.b16 %v1306
      %v1395 = vunpack.c.l.b16 %v1307
      %v1396 = vunpack.c.h.b16 %v1307
      %v1397 = vunpack.c.l.b16 %v1308
      %v1398 = vunpack.c.h.b16 %v1308
      %v1399 = vunpack.c.l.b16 %v1309
      %v1400 = vunpack.c.h.b16 %v1309
      %v1401 = vunpack.c.l.b16 %v1310
      %v1402 = vunpack.c.h.b16 %v1310
      %v1403 = vunpack.c.l.b16 %v1311
      %v1404 = vunpack.c.h.b16 %v1311
      %v1405 = vunpack.c.l.b16 %v1312
      %v1406 = vunpack.c.h.b16 %v1312
      %v1407 = vunpack.c.l.b16 %v1313
      %v1408 = vunpack.c.h.b16 %v1313
      %v1409 = vunpack.c.l.b16 %v1314
      %v1410 = vunpack.c.h.b16 %v1314
      %v1411 = vunpack.c.l.b16 %v1315
      %v1412 = vunpack.c.h.b16 %v1315
      %v1413 = vunpack.c.l.b16 %v1316
      %v1414 = vunpack.c.h.b16 %v1316
      %v1415 = vunpack.c.l.b16 %v1317
      %v1416 = vunpack.c.h.b16 %v1317
      %v1417 = vunpack.c.l.b16 %v1318
      %v1418 = vunpack.c.h.b16 %v1318
      %v1419 = vunpack.c.l.b16 %v1319
      %v1420 = vunpack.c.h.b16 %v1319
      %v1421 = vunpack.c.l.b16 %v1320
      %v1422 = vunpack.c.h.b16 %v1320
      %v1423 = vunpack.c.l.b16 %v1321
      %v1424 = vunpack.c.h.b16 %v1321
      %v1425 = vunpack.c.l.b16 %v1322
      %v1426 = vunpack.c.h.b16 %v1322
      %v1427 = vunpack.c.l.b16 %v1323
      %v1428 = vunpack.c.h.b16 %v1323
      %v1429 = vunpack.c.l.b16 %v1324
      %v1430 = vunpack.c.h.b16 %v1324
      %v1431 = vunpack.c.l.b16 %v1325
      %v1432 = vunpack.c.h.b16 %v1325
      %v1433 = vunpack.c.l.b16 %v1326
      %v1434 = vunpack.c.h.b16 %v1326
      %v1435 = vunpack.c.l.b16 %v1327
      %v1436 = vunpack.c.h.b16 %v1327
      %v1437 = vunpack.c.l.b16 %v1328
      %v1438 = vunpack.c.h.b16 %v1328
      %v1439 = vunpack.c.l.b16 %v1329
      %v1440 = vunpack.c.h.b16 %v1329
      %v1441 = vunpack.c.l.b16 %v1330
      %v1442 = vunpack.c.h.b16 %v1330
      %v1443 = vunpack.c.l.b16 %v1331
      %v1444 = vunpack.c.h.b16 %v1331
      %v1445 = vunpack.c.l.b16 %v1332
      %v1446 = vunpack.c.h.b16 %v1332
      %v1447 = vunpack.c.l.b16 %v1333
      %v1448 = vunpack.c.h.b16 %v1333
      %v1449 = vunpack.c.l.b16 %v1334
      %v1450 = vunpack.c.h.b16 %v1334
      %v1451 = vunpack.c.l.b16 %v1335
      %v1452 = vunpack.c.h.b16 %v1335
      %v1453 = vunpack.c.l.b16 %v1336
      %v1454 = vunpack.c.h.b16 %v1336
      %v1455 = vpack.c.b16 %v1395, %v1391
      %v1456 = vpack.c.b16 %v1396, %v1392
      %v1457 = vpack.c.b16 %v1397, %v1393
      %v1458 = vpack.c.b16 %v1398, %v1394
      %v1459 = vpack.c.b16 %v1403, %v1399
      %v1460 = vpack.c.b16 %v1404, %v1400
      %v1461 = vpack.c.b16 %v1405, %v1401
      %v1462 = vpack.c.b16 %v1406, %v1402
      %v1463 = vpack.c.b16 %v1411, %v1407
      %v1464 = vpack.c.b16 %v1412, %v1408
      %v1465 = vpack.c.b16 %v1413, %v1409
      %v1466 = vpack.c.b16 %v1414, %v1410
      %v1467 = vpack.c.b16 %v1419, %v1415
      %v1468 = vpack.c.b16 %v1420, %v1416
      %v1469 = vpack.c.b16 %v1421, %v1417
      %v1470 = vpack.c.b16 %v1422, %v1418
      %v1471 = vpack.c.b16 %v1427, %v1423
      %v1472 = vpack.c.b16 %v1428, %v1424
      %v1473 = vpack.c.b16 %v1429, %v1425
      %v1474 = vpack.c.b16 %v1430, %v1426
      %v1475 = vpack.c.b16 %v1435, %v1431
      %v1476 = vpack.c.b16 %v1436, %v1432
      %v1477 = vpack.c.b16 %v1437, %v1433
      %v1478 = vpack.c.b16 %v1438, %v1434
      %v1479 = vpack.c.b16 %v1443, %v1439
      %v1480 = vpack.c.b16 %v1444, %v1440
      %v1481 = vpack.c.b16 %v1445, %v1441
      %v1482 = vpack.c.b16 %v1446, %v1442
      %v1483 = vpack.c.b16 %v1451, %v1447
      %v1484 = vpack.c.b16 %v1452, %v1448
      %v1485 = vpack.c.b16 %v1453, %v1449
      %v1486 = vpack.c.b16 %v1454, %v1450
      %1519 = vmatprep.subr.bf16.mxu0 %v1456
      %1520 = vmatpush1.bf16.msra.mxu0 %v1455
      %1521 = vmatprep.subr.bf16.mxu0 %v1460
      %1522 = vmatpush1.bf16.msra.mxu0 %v1459
      %1523 = vmatprep.subr.bf16.mxu0 %v1464
      %1524 = vmatpush1.bf16.msra.mxu0 %v1463
      %1525 = vmatprep.subr.bf16.mxu0 %v1468
      %1526 = vmatpush1.bf16.msra.mxu0 %v1467
      %1527 = vmatprep.subr.bf16.mxu0 %v1472
      %1528 = vmatpush1.bf16.msra.mxu0 %v1471
      %1529 = vmatprep.subr.bf16.mxu0 %v1476
      %1530 = vmatpush1.bf16.msra.mxu0 %v1475
      %1531 = vmatprep.subr.bf16.mxu0 %v1480
      %1532 = vmatpush1.bf16.msra.mxu0 %v1479
      %1533 = vmatprep.subr.bf16.mxu0 %v1484
      %1534 = vmatpush1.bf16.msra.mxu0 %v1483
      %1535 = vmatprep.subr.bf16.mxu0 0
      %1536 = vmatpush1.bf16.msra.mxu0 0
      %1537 = vmatprep.subr.bf16.mxu0 0
      %1538 = vmatpush1.bf16.msra.mxu0 0
      %1539 = vmatprep.subr.bf16.mxu0 0
      %1540 = vmatpush1.bf16.msra.mxu0 0
      %1541 = vmatprep.subr.bf16.mxu0 0
      %1542 = vmatpush1.bf16.msra.mxu0 0
      %1543 = vmatprep.subr.bf16.mxu0 0
      %1544 = vmatpush1.bf16.msra.mxu0 0
      %1545 = vmatprep.subr.bf16.mxu0 0
      %1546 = vmatpush1.bf16.msra.mxu0 0
      %1547 = vmatprep.subr.bf16.mxu0 0
      %1548 = vmatpush1.bf16.msra.mxu0 0
      %1549 = vmatprep.subr.bf16.mxu0 0
      %1550 = vmatpush1.bf16.msra.mxu0 0
      %1551 = vmatprep.mubr.bf16.mxu0 0
      %1552 = vmatmul.mubr.bf16.gmra.mrb[0].mxu0 %v1304
      %v1553 = vpop.f32.mrb[0].mxu0
      %v1554 = vadd.f32 %v1342, %v1553
      %v1555 = vpop.f32.mrb[0].mxu0
      %v1556 = vadd.f32 %v1346, %v1555
      %v1557 = vpop.f32.mrb[0].mxu0
      %v1558 = vpop.f32.mrb[0].mxu0
      %1559 = vdwg.mxu0
      %1560 = vmatprep.subr.bf16.mxu0 %v1458
      %1561 = vmatpush1.bf16.msra.mxu0 %v1457
      %1562 = vmatprep.subr.bf16.mxu0 %v1462
      %1563 = vmatpush1.bf16.msra.mxu0 %v1461
      %1564 = vmatprep.subr.bf16.mxu0 %v1466
      %1565 = vmatpush1.bf16.msra.mxu0 %v1465
      %1566 = vmatprep.subr.bf16.mxu0 %v1470
      %1567 = vmatpush1.bf16.msra.mxu0 %v1469
      %1568 = vmatprep.subr.bf16.mxu0 %v1474
      %1569 = vmatpush1.bf16.msra.mxu0 %v1473
      %1570 = vmatprep.subr.bf16.mxu0 %v1478
      %1571 = vmatpush1.bf16.msra.mxu0 %v1477
      %1572 = vmatprep.subr.bf16.mxu0 %v1482
      %1573 = vmatpush1.bf16.msra.mxu0 %v1481
      %1574 = vmatprep.subr.bf16.mxu0 %v1486
      %1575 = vmatpush1.bf16.msra.mxu0 %v1485
      %1576 = vmatprep.subr.bf16.mxu0 0
      %1577 = vmatpush1.bf16.msra.mxu0 0
      %1578 = vmatprep.subr.bf16.mxu0 0
      %1579 = vmatpush1.bf16.msra.mxu0 0
      %1580 = vmatprep.subr.bf16.mxu0 0
      %1581 = vmatpush1.bf16.msra.mxu0 0
      %1582 = vmatprep.subr.bf16.mxu0 0
      %1583 = vmatpush1.bf16.msra.mxu0 0
      %1584 = vmatprep.subr.bf16.mxu0 0
      %1585 = vmatpush1.bf16.msra.mxu0 0
      %1586 = vmatprep.subr.bf16.mxu0 0
      %1587 = vmatpush1.bf16.msra.mxu0 0
      %1588 = vmatprep.subr.bf16.mxu0 0
      %1589 = vmatpush1.bf16.msra.mxu0 0
      %1590 = vmatprep.subr.bf16.mxu0 0
      %1591 = vmatpush1.bf16.msra.mxu0 0
      %1592 = vmatprep.mubr.bf16.mxu0 0
      %1593 = vmatmul.mubr.bf16.gmra.mrb[0].mxu0 %v1304
      %v1594 = vpop.f32.mrb[0].mxu0
      %v1595 = vadd.f32 %v1350, %v1594
      %v1596 = vpop.f32.mrb[0].mxu0
      %v1597 = vadd.f32 %v1354, %v1596
      %v1598 = vpop.f32.mrb[0].mxu0
      %v1599 = vpop.f32.mrb[0].mxu0
      %1600 = vdwg.mxu0
      %v1601 = vmul.f32 %v1554, 0.5
      %v1602 = vmul.f32 %v1556, 0.5
      %v1603 = vmul.f32 %v1595, 0.5
      %v1604 = vmul.f32 %v1597, 0.5
      %v1605 = vmul.f32 %v1554, 0.044715
      %v1606 = vmul.f32 %v1556, 0.044715
      %v1607 = vmul.f32 %v1595, 0.044715
      %v1608 = vmul.f32 %v1597, 0.044715
      %v1609 = vmul.f32 %v1605, %v1554
      %v1610 = vmul.f32 %v1606, %v1556
      %v1611 = vmul.f32 %v1607, %v1595
      %v1612 = vmul.f32 %v1608, %v1597
      %v1613 = vmul.f32 %v1609, %v1554
      %v1614 = vmul.f32 %v1610, %v1556
      %v1615 = vmul.f32 %v1611, %v1595
      %v1616 = vmul.f32 %v1612, %v1597
      %v1617 = vadd.f32 %v1554, %v1613
      %v1618 = vadd.f32 %v1556, %v1614
      %v1619 = vadd.f32 %v1595, %v1615
      %v1620 = vadd.f32 %v1597, %v1616
      %v1621 = vmul.f32 %v1617, 0.7978846
      %v1622 = vmul.f32 %v1618, 0.7978846
      %v1623 = vmul.f32 %v1619, 0.7978846
      %v1624 = vmul.f32 %v1620, 0.7978846
      %v1625 = vtanh.pop %v1621
      %v1626 = vtanh.pop %v1622
      %v1627 = vtanh.pop %v1623
      %v1628 = vtanh.pop %v1624
      %v1629 = vadd.f32 %v1625, 1.0
      %v1630 = vadd.f32 %v1626, 1.0
      %v1631 = vadd.f32 %v1627, 1.0
      %v1632 = vadd.f32 %v1628, 1.0
      %v1633 = vmul.f32 %v1601, %v1629
      %v1634 = vmul.f32 %v1602, %v1630
      %v1635 = vmul.f32 %v1603, %v1631
      %v1636 = vmul.f32 %v1604, %v1632
      %v1637 = vpack.c.bf16 %v1633, %v1633
      %v1638 = vpack.c.bf16 %v1634, %v1634
      %v1639 = vpack.c.bf16 %v1635, %v1635
      %v1640 = vpack.c.bf16 %v1636, %v1636
      %v1641 = vld [vmem:[%s5] sm:$0xf]
      %v1642 = vld [vmem:[%s5 + $0x4] sm:$0xf]
      %v1643 = vld [vmem:[%s5 + $0x8] sm:$0xf]
      %v1644 = vld [vmem:[%s5 + $0xc] sm:$0xf]
      %v1645 = vld [vmem:[%s5 + $0x10] sm:$0xf]
      %v1646 = vld [vmem:[%s5 + $0x14] sm:$0xf]
      %v1647 = vld [vmem:[%s5 + $0x18] sm:$0xf]
      %v1648 = vld [vmem:[%s5 + $0x1c] sm:$0xf]
      %v1649 = vld [vmem:[%s5 + $0x20] sm:$0xf]
      %v1650 = vld [vmem:[%s5 + $0x24] sm:$0xf]
      %v1651 = vld [vmem:[%s5 + $0x28] sm:$0xf]
      %v1652 = vld [vmem:[%s5 + $0x2c] sm:$0xf]
      %v1653 = vld [vmem:[%s5 + $0x30] sm:$0xf]
      %v1654 = vld [vmem:[%s5 + $0x34] sm:$0xf]
      %v1655 = vld [vmem:[%s5 + $0x38] sm:$0xf]
      %v1656 = vld [vmem:[%s5 + $0x3c] sm:$0xf]
      %v1657 = vld [vmem:[%s5 + $0x40] sm:$0xf]
      %v1658 = vld [vmem:[%s5 + $0x44] sm:$0xf]
      %v1659 = vld [vmem:[%s5 + $0x48] sm:$0xf]
      %v1660 = vld [vmem:[%s5 + $0x4c] sm:$0xf]
      %v1661 = vld [vmem:[%s5 + $0x50] sm:$0xf]
      %v1662 = vld [vmem:[%s5 + $0x54] sm:$0xf]
      %v1663 = vld [vmem:[%s5 + $0x58] sm:$0xf]
      %v1664 = vld [vmem:[%s5 + $0x5c] sm:$0xf]
      %v1665 = vld [vmem:[%s5 + $0x60] sm:$0xf]
      %v1666 = vld [vmem:[%s5 + $0x64] sm:$0xf]
      %v1667 = vld [vmem:[%s5 + $0x68] sm:$0xf]
      %v1668 = vld [vmem:[%s5 + $0x6c] sm:$0xf]
      %v1669 = vld [vmem:[%s5 + $0x70] sm:$0xf]
      %v1670 = vld [vmem:[%s5 + $0x74] sm:$0xf]
      %v1671 = vld [vmem:[%s5 + $0x78] sm:$0xf]
      %v1672 = vld [vmem:[%s5 + $0x7c] sm:$0xf]
      %v1673 = vld [vmem:[%s5 + $0x80] sm:$0xf]
      %v1674 = vld [vmem:[%s5 + $0x84] sm:$0xf]
      %v1675 = vld [vmem:[%s5 + $0x88] sm:$0xf]
      %v1676 = vld [vmem:[%s5 + $0x8c] sm:$0xf]
      %v1677 = vld [vmem:[%s5 + $0x90] sm:$0xf]
      %v1678 = vld [vmem:[%s5 + $0x94] sm:$0xf]
      %v1679 = vld [vmem:[%s5 + $0x98] sm:$0xf]
      %v1680 = vld [vmem:[%s5 + $0x9c] sm:$0xf]
      %v1681 = vld [vmem:[%s5 + $0xa0] sm:$0xf]
      %v1682 = vld [vmem:[%s5 + $0xa4] sm:$0xf]
      %v1683 = vld [vmem:[%s5 + $0xa8] sm:$0xf]
      %v1684 = vld [vmem:[%s5 + $0xac] sm:$0xf]
      %v1685 = vld [vmem:[%s5 + $0xb0] sm:$0xf]
      %v1686 = vld [vmem:[%s5 + $0xb4] sm:$0xf]
      %v1687 = vld [vmem:[%s5 + $0xb8] sm:$0xf]
      %v1688 = vld [vmem:[%s5 + $0xbc] sm:$0xf]
      %v1689 = vld [vmem:[%s5 + $0xc0] sm:$0xf]
      %v1690 = vld [vmem:[%s5 + $0xc4] sm:$0xf]
      %v1691 = vld [vmem:[%s5 + $0xc8] sm:$0xf]
      %v1692 = vld [vmem:[%s5 + $0xcc] sm:$0xf]
      %v1693 = vld [vmem:[%s5 + $0xd0] sm:$0xf]
      %v1694 = vld [vmem:[%s5 + $0xd4] sm:$0xf]
      %v1695 = vld [vmem:[%s5 + $0xd8] sm:$0xf]
      %v1696 = vld [vmem:[%s5 + $0xdc] sm:$0xf]
      %v1697 = vld [vmem:[%s5 + $0xe0] sm:$0xf]
      %v1698 = vld [vmem:[%s5 + $0xe4] sm:$0xf]
      %v1699 = vld [vmem:[%s5 + $0xe8] sm:$0xf]
      %v1700 = vld [vmem:[%s5 + $0xec] sm:$0xf]
      %v1701 = vld [vmem:[%s5 + $0xf0] sm:$0xf]
      %v1702 = vld [vmem:[%s5 + $0xf4] sm:$0xf]
      %v1703 = vld [vmem:[%s5 + $0xf8] sm:$0xf]
      %v1704 = vld [vmem:[%s5 + $0xfc] sm:$0xf]
      %v1705 = vlaneseq
      %v1706 = vshrl.u32 %v1705, 7
      %v1707 = vsub.s32 6, %v1706
      %v1708 = vrot.slane %v317, %v1707
      %v1773 = vunpack.c.l.b16 %v1641
      %v1774 = vunpack.c.l.b16 %v1642
      %v1775 = vunpack.c.l.b16 %v1643
      %v1776 = vunpack.c.l.b16 %v1644
      %v1777 = vunpack.c.l.b16 %v1645
      %v1778 = vunpack.c.l.b16 %v1646
      %v1779 = vunpack.c.l.b16 %v1647
      %v1780 = vunpack.c.l.b16 %v1648
      %v1781 = vunpack.c.l.b16 %v1649
      %v1782 = vunpack.c.l.b16 %v1650
      %v1783 = vunpack.c.l.b16 %v1651
      %v1784 = vunpack.c.l.b16 %v1652
      %v1785 = vunpack.c.l.b16 %v1653
      %v1786 = vunpack.c.l.b16 %v1654
      %v1787 = vunpack.c.l.b16 %v1655
      %v1788 = vunpack.c.l.b16 %v1656
      %v1789 = vunpack.c.l.b16 %v1657
      %v1790 = vunpack.c.l.b16 %v1658
      %v1791 = vunpack.c.l.b16 %v1659
      %v1792 = vunpack.c.l.b16 %v1660
      %v1793 = vunpack.c.l.b16 %v1661
      %v1794 = vunpack.c.l.b16 %v1662
      %v1795 = vunpack.c.l.b16 %v1663
      %v1796 = vunpack.c.l.b16 %v1664
      %v1797 = vunpack.c.l.b16 %v1665
      %v1798 = vunpack.c.l.b16 %v1666
      %v1799 = vunpack.c.l.b16 %v1667
      %v1800 = vunpack.c.l.b16 %v1668
      %v1801 = vunpack.c.l.b16 %v1669
      %v1802 = vunpack.c.l.b16 %v1670
      %v1803 = vunpack.c.l.b16 %v1671
      %v1804 = vunpack.c.l.b16 %v1672
      %v1805 = vunpack.c.l.b16 %v1673
      %v1806 = vunpack.c.l.b16 %v1674
      %v1807 = vunpack.c.l.b16 %v1675
      %v1808 = vunpack.c.l.b16 %v1676
      %v1809 = vunpack.c.l.b16 %v1677
      %v1810 = vunpack.c.l.b16 %v1678
      %v1811 = vunpack.c.l.b16 %v1679
      %v1812 = vunpack.c.l.b16 %v1680
      %v1813 = vunpack.c.l.b16 %v1681
      %v1814 = vunpack.c.l.b16 %v1682
      %v1815 = vunpack.c.l.b16 %v1683
      %v1816 = vunpack.c.l.b16 %v1684
      %v1817 = vunpack.c.l.b16 %v1685
      %v1818 = vunpack.c.l.b16 %v1686
      %v1819 = vunpack.c.l.b16 %v1687
      %v1820 = vunpack.c.l.b16 %v1688
      %v1821 = vunpack.c.l.b16 %v1689
      %v1822 = vunpack.c.l.b16 %v1690
      %v1823 = vunpack.c.l.b16 %v1691
      %v1824 = vunpack.c.l.b16 %v1692
      %v1825 = vunpack.c.l.b16 %v1693
      %v1826 = vunpack.c.l.b16 %v1694
      %v1827 = vunpack.c.l.b16 %v1695
      %v1828 = vunpack.c.l.b16 %v1696
      %v1829 = vunpack.c.l.b16 %v1697
      %v1830 = vunpack.c.l.b16 %v1698
      %v1831 = vunpack.c.l.b16 %v1699
      %v1832 = vunpack.c.l.b16 %v1700
      %v1833 = vunpack.c.l.b16 %v1701
      %v1834 = vunpack.c.l.b16 %v1702
      %v1835 = vunpack.c.l.b16 %v1703
      %v1836 = vunpack.c.l.b16 %v1704
      %v1837 = vpack.c.b16 %v1774, %v1773
      %v1838 = vpack.c.b16 %v1776, %v1775
      %v1839 = vpack.c.b16 %v1778, %v1777
      %v1840 = vpack.c.b16 %v1780, %v1779
      %v1841 = vpack.c.b16 %v1782, %v1781
      %v1842 = vpack.c.b16 %v1784, %v1783
      %v1843 = vpack.c.b16 %v1786, %v1785
      %v1844 = vpack.c.b16 %v1788, %v1787
      %v1845 = vpack.c.b16 %v1790, %v1789
      %v1846 = vpack.c.b16 %v1792, %v1791
      %v1847 = vpack.c.b16 %v1794, %v1793
      %v1848 = vpack.c.b16 %v1796, %v1795
      %v1849 = vpack.c.b16 %v1798, %v1797
      %v1850 = vpack.c.b16 %v1800, %v1799
      %v1851 = vpack.c.b16 %v1802, %v1801
      %v1852 = vpack.c.b16 %v1804, %v1803
      %v1853 = vpack.c.b16 %v1806, %v1805
      %v1854 = vpack.c.b16 %v1808, %v1807
      %v1855 = vpack.c.b16 %v1810, %v1809
      %v1856 = vpack.c.b16 %v1812, %v1811
      %v1857 = vpack.c.b16 %v1814, %v1813
      %v1858 = vpack.c.b16 %v1816, %v1815
      %v1859 = vpack.c.b16 %v1818, %v1817
      %v1860 = vpack.c.b16 %v1820, %v1819
      %v1861 = vpack.c.b16 %v1822, %v1821
      %v1862 = vpack.c.b16 %v1824, %v1823
      %v1863 = vpack.c.b16 %v1826, %v1825
      %v1864 = vpack.c.b16 %v1828, %v1827
      %v1865 = vpack.c.b16 %v1830, %v1829
      %v1866 = vpack.c.b16 %v1832, %v1831
      %v1867 = vpack.c.b16 %v1834, %v1833
      %v1868 = vpack.c.b16 %v1836, %v1835
      %1901 = vmatprep.subr.bf16.mxu0 0
      %1902 = vmatpush1.bf16.msra.mxu0 %v1837
      %1903 = vmatprep.subr.bf16.mxu0 0
      %1904 = vmatpush1.bf16.msra.mxu0 %v1838
      %1905 = vmatprep.subr.bf16.mxu0 0
      %1906 = vmatpush1.bf16.msra.mxu0 %v1839
      %1907 = vmatprep.subr.bf16.mxu0 0
      %1908 = vmatpush1.bf16.msra.mxu0 %v1840
      %1909 = vmatprep.subr.bf16.mxu0 0
      %1910 = vmatpush1.bf16.msra.mxu0 %v1841
      %1911 = vmatprep.subr.bf16.mxu0 0
      %1912 = vmatpush1.bf16.msra.mxu0 %v1842
      %1913 = vmatprep.subr.bf16.mxu0 0
      %1914 = vmatpush1.bf16.msra.mxu0 %v1843
      %1915 = vmatprep.subr.bf16.mxu0 0
      %1916 = vmatpush1.bf16.msra.mxu0 %v1844
      %1917 = vmatprep.subr.bf16.mxu0 0
      %1918 = vmatpush1.bf16.msra.mxu0 %v1845
      %1919 = vmatprep.subr.bf16.mxu0 0
      %1920 = vmatpush1.bf16.msra.mxu0 %v1846
      %1921 = vmatprep.subr.bf16.mxu0 0
      %1922 = vmatpush1.bf16.msra.mxu0 %v1847
      %1923 = vmatprep.subr.bf16.mxu0 0
      %1924 = vmatpush1.bf16.msra.mxu0 %v1848
      %1925 = vmatprep.subr.bf16.mxu0 0
      %1926 = vmatpush1.bf16.msra.mxu0 %v1849
      %1927 = vmatprep.subr.bf16.mxu0 0
      %1928 = vmatpush1.bf16.msra.mxu0 %v1850
      %1929 = vmatprep.subr.bf16.mxu0 0
      %1930 = vmatpush1.bf16.msra.mxu0 %v1851
      %1931 = vmatprep.subr.bf16.mxu0 0
      %1932 = vmatpush1.bf16.msra.mxu0 %v1852
      %1933 = vmatprep.mubr.bf16.mxu0 %v1638
      %1934 = vmatmul.mubr.bf16.gmra.mrb[0].mxu0 %v1637
      %v1935 = vpop.f32.mrb[0].mxu0
      %v1936 = vadd.f32 %v1708, %v1935
      %v1937 = vpop.f32.mrb[0].mxu0
      %v1938 = vpop.f32.mrb[0].mxu0
      %v1939 = vpop.f32.mrb[0].mxu0
      %1940 = vdwg.mxu0
      %1941 = vmatprep.subr.bf16.mxu0 0
      %1942 = vmatpush1.bf16.msra.mxu0 %v1853
      %1943 = vmatprep.subr.bf16.mxu0 0
      %1944 = vmatpush1.bf16.msra.mxu0 %v1854
      %1945 = vmatprep.subr.bf16.mxu0 0
      %1946 = vmatpush1.bf16.msra.mxu0 %v1855
      %1947 = vmatprep.subr.bf16.mxu0 0
      %1948 = vmatpush1.bf16.msra.mxu0 %v1856
      %1949 = vmatprep.subr.bf16.mxu0 0
      %1950 = vmatpush1.bf16.msra.mxu0 %v1857
      %1951 = vmatprep.subr.bf16.mxu0 0
      %1952 = vmatpush1.bf16.msra.mxu0 %v1858
      %1953 = vmatprep.subr.bf16.mxu0 0
      %1954 = vmatpush1.bf16.msra.mxu0 %v1859
      %1955 = vmatprep.subr.bf16.mxu0 0
      %1956 = vmatpush1.bf16.msra.mxu0 %v1860
      %1957 = vmatprep.subr.bf16.mxu0 0
      %1958 = vmatpush1.bf16.msra.mxu0 %v1861
      %1959 = vmatprep.subr.bf16.mxu0 0
      %1960 = vmatpush1.bf16.msra.mxu0 %v1862
      %1961 = vmatprep.subr.bf16.mxu0 0
      %1962 = vmatpush1.bf16.msra.mxu0 %v1863
      %1963 = vmatprep.subr.bf16.mxu0 0
      %1964 = vmatpush1.bf16.msra.mxu0 %v1864
      %1965 = vmatprep.subr.bf16.mxu0 0
      %1966 = vmatpush1.bf16.msra.mxu0 %v1865
      %1967 = vmatprep.subr.bf16.mxu0 0
      %1968 = vmatpush1.bf16.msra.mxu0 %v1866
      %1969 = vmatprep.subr.bf16.mxu0 0
      %1970 = vmatpush1.bf16.msra.mxu0 %v1867
      %1971 = vmatprep.subr.bf16.mxu0 0
      %1972 = vmatpush1.bf16.msra.mxu0 %v1868
      %1973 = vmatprep.mubr.bf16.mxu0 %v1640
      %1974 = vmatmul.mubr.bf16.gmra.mrb[0].mxu0 %v1639
      %v1975 = vpop.f32.mrb[0].mxu0
      %v1976 = vadd.f32 %v1936, %v1975
      %v1977 = vpop.f32.mrb[0].mxu0
      %v1978 = vpop.f32.mrb[0].mxu0
      %v1979 = vpop.f32.mrb[0].mxu0
      %1980 = vdwg.mxu0
      %v1981 = vadd.f32 %v1976, %v1303
      %1982 = vadd.xlane.f32.xlu0 %v1981
      %v1983 = vpop.xlane.xlu0 %1982
      %v1984 = vmul.f32 %v1983, %v1284
      %v1985 = vsub.f32 %v1981, %v1984
      %v1986 = vmul.f32 %v1985, %v1985
      %1987 = vadd.xlane.f32.xlu0 %v1986
      %v1988 = vpop.xlane.xlu0 %1987
      %v1989 = vmul.f32 %v1988, %v1284
      %v1990 = vadd.f32 %v1989, 1e-12
      %v1991 = vrsqrt.pop %v1990
      %v1992 = vmul.f32 %v1985, %v1991
      %v1993 = vlaneseq
      %v1994 = vshrl.u32 %v1993, 7
      %v1995 = vsub.s32 7, %v1994
      %v1996 = vrot.slane %v317, %v1995
      %v1997 = vmul.f32 %v1992, %v1996
      %v1998 = vlaneseq
      %v1999 = vshrl.u32 %v1998, 7
      %v2000 = vsub.s32 0, %v1999
      %v2001 = vrot.slane %v318, %v2000
      %v2002 = vadd.f32 %v1997, %v2001
      %v2003 = vpack.c.bf16 %v2002, %v2002
      %2004 = vst [vmem:[%s314] sm:$0xf] %v2003
      %p2005 = scmp.lt.s32.totalorder %s19, 1
      %s2006 = scalar_select %p2005, %s19, 1
      %s2007 = smul.addr %s2006, 4
      %s2008 = scalar_lea.vmem %s8, %s2007
      // Predicated region
      $region53: #{bert_binary_classifier_forward.5} parent=51 // pred_check
        %p2009 = pneg %p215
      $region54: #{bert_binary_classifier_forward.5} parent=51 // pred_check_branch
        %2011 = sbr.rel (%p2009) target = $region56
      $region55: #{bert_binary_classifier_forward.5} parent=51 // pred_region
        _
      $region56: #{bert_binary_classifier_forward.5} parent=51 // pred_fallthru
        _
    $region52: #{bert_binary_classifier_forward.5} parent=5 // pred_fallthru
      _
    %p2012 = scmp.le.s32.totalorder 2, %s14
    // Predicated region
    $region57: #{bert_binary_classifier_forward.5} parent=5 // pred_check
      %p2013 = pneg %p2012
    $region58: #{bert_binary_classifier_forward.5} parent=5 // pred_check_branch
      %2015 = sbr.rel (%p2013) target = $region60
    $region59: #{bert_binary_classifier_forward.5} parent=5 // pred_region
      %s2016 = ssub.s32 %s14, 2
      // Predicated region
      $region61: #{bert_binary_classifier_forward.5} parent=59 // pred_check
        %p2017 = pneg %p221
      $region62: #{bert_binary_classifier_forward.5} parent=59 // pred_check_branch
        %2019 = sbr.rel (%p2017) target = $region64
      $region63: #{bert_binary_classifier_forward.5} parent=59 // pred_region
        %p2020 = scmp.lt.s32.totalorder %s20, 1
        %s2021 = scalar_select %p2020, %s20, 1
        %s2022 = smul.addr %s2021, 4
        %s2023 = scalar_lea.vmem %s8, %s2022
      $region64: #{bert_binary_classifier_forward.5} parent=59 // pred_fallthru
        _
    $region60: #{bert_binary_classifier_forward.5} parent=5 // pred_fallthru
      _
  $region6: #{bert_binary_classifier_forward.5} parent=0 // loop_footer
    %s18 = sadd.s32 1, %s14
  $region7: #{bert_binary_classifier_forward.5} parent=0 // loop_footer_branch
    %13 = sbr.rel target = $region3
  $region8: #{bert_binary_classifier_forward.5} parent=0 // loop_exit
    _

</llo_original>
